<compile_context>
chip_gen: v7x
topology: tpu7x:2x2x1
jax: 0.10.0
libtpu: 0.0.40
codegen_flags: <defaults>
</compile_context>

<pallas_src>
import jax
import jax.numpy as jnp
from jax.experimental import pallas as pl
from jax.experimental.pallas import tpu as pltpu

BN_EPS = 1e-5  # BatchNorm2d default eps


# ---------------------------------------------------------------------------
# Fused ConvTranspose2d + BN(eval) + ReLU kernel
# ---------------------------------------------------------------------------
def make_upconv_kernel(K, Hout, Wout, Cin, Cout):
    HWo = Hout * Wout

    def kernel(x_ref, w_ref, scale_ref, shift_ref, o_ref):
        # x_ref block:  (1, Hd, Wd, Cin)  zero-dilated, padded input (NHWC)
        # w_ref block:  (K*K, Cin, Cout)  flipped per-tap weight matrices
        # scale/shift:  (Cout, 1)         folded BN (+ conv bias), column vecs
        # o_ref block:  (1, Cout, HWo)    final activation (NC(HW), lane-dense)
        acc = jnp.zeros((HWo, Cout), jnp.float32)
        for ky in range(K):
            for kx in range(K):
                # Static window slice of the padded input; channels stay on
                # the lane axis, so the contraction below is an MXU matmul.
                patch = x_ref[0, ky:ky + Hout, kx:kx + Wout, :]   # (Hout,Wout,Cin)
                acc = acc + jnp.dot(
                    patch.reshape(HWo, Cin),
                    w_ref[ky * K + kx],
                    preferred_element_type=jnp.float32,
                )
        # One XLU transpose -> lane-dense (Cout, HWo), already NCHW-flat.
        yt = acc.T                                                # (Cout, HWo)
        # Folded BatchNorm (eval) + conv bias, then ReLU, on the packed layout.
        yt = yt * scale_ref[...] + shift_ref[...]
        o_ref[0] = jnp.maximum(yt, 0.0)

    return kernel


def upconv2d_forward(x, params, *, stride=2, padding=1):
    """x: (B, Cin, H, W) NCHW.  params follow PyTorch ConvTranspose2d/BN2d."""
    w = params["w"]                       # (Cin, Cout, K, K)  PyTorch layout
    bias = params["b"]                    # (Cout,)
    Cin, Cout, K, _ = w.shape
    B, Cx, Hin, Win = x.shape
    assert Cx == Cin
    s, p = stride, padding
    Hout = (Hin - 1) * s - 2 * p + K
    Wout = (Win - 1) * s - 2 * p + K
    HWo = Hout * Wout
    off = K - 1 - p                       # edge padding of the dilated input

    # NCHW -> NHWC, zero-dilate by `stride` (interior padding) and pad edges.
    x_nhwc = jnp.transpose(x, (0, 2, 3, 1)).astype(jnp.float32)
    x_dil = jax.lax.pad(
        x_nhwc, jnp.zeros((), x_nhwc.dtype),
        ((0, 0, 0), (off, off, s - 1), (off, off, s - 1), (0, 0, 0)))
    Hd, Wd = x_dil.shape[1], x_dil.shape[2]
    assert Hd == Hout + K - 1 and Wd == Wout + K - 1

    # Per-tap flipped weights: tap (ky,kx) uses w[:, :, K-1-ky, K-1-kx].
    w_taps = jnp.transpose(jnp.flip(w, axis=(2, 3)), (2, 3, 0, 1))
    w_taps = w_taps.reshape(K * K, Cin, Cout).astype(jnp.float32)

    # Fold BN(eval) + ConvTranspose bias into per-channel scale/shift columns.
    scale = (params["gamma"] / jnp.sqrt(params["var"] + BN_EPS)).astype(jnp.float32)
    shift = ((bias - params["mean"]) * scale + params["beta"]).astype(jnp.float32)
    scale_col = scale[:, None]            # (Cout, 1)
    shift_col = shift[:, None]            # (Cout, 1)

    # Advisory cost hint for the XLA scheduler around the custom call.
    flops = 2 * B * HWo * K * K * Cin * Cout + 3 * B * HWo * Cout
    bytes_accessed = 4 * (x_dil.size + w_taps.size + 2 * Cout + B * Cout * HWo)
    cost = pl.CostEstimate(flops=flops, transcendentals=0,
                           bytes_accessed=bytes_accessed)

    out = pl.pallas_call(
        make_upconv_kernel(K, Hout, Wout, Cin, Cout),
        out_shape=jax.ShapeDtypeStruct((B, Cout, HWo), jnp.float32),
        grid=(B,),
        in_specs=[
            pl.BlockSpec((1, Hd, Wd, Cin), lambda b: (b, 0, 0, 0)),
            pl.BlockSpec((K * K, Cin, Cout), lambda b: (0, 0, 0)),
            pl.BlockSpec((Cout, 1), lambda b: (0, 0)),
            pl.BlockSpec((Cout, 1), lambda b: (0, 0)),
        ],
        out_specs=pl.BlockSpec((1, Cout, HWo), lambda b: (b, 0, 0)),
        compiler_params=pltpu.CompilerParams(dimension_semantics=("parallel",)),
        cost_estimate=cost,
    )(x_dil, w_taps, scale_col, shift_col)

    return out.reshape(B, Cout, Hout, Wout)   # already NCHW


# ---------------------------------------------------------------------------
# Pure-JAX reference (ConvTranspose2d == lhs-dilated conv with flipped kernel)
# ---------------------------------------------------------------------------
def ref_forward(x, params, *, stride=2, padding=1):
    w, bias = params["w"], params["b"]
    Cin, Cout, K, _ = w.shape
    w_oihw = jnp.transpose(jnp.flip(w, axis=(2, 3)), (1, 0, 2, 3))  # (Cout,Cin,K,K)
    pad = K - 1 - padding
    y = jax.lax.conv_general_dilated(
        x, w_oihw, window_strides=(1, 1),
        padding=[(pad, pad), (pad, pad)],
        lhs_dilation=(stride, stride),
        dimension_numbers=("NCHW", "OIHW", "NCHW"),
        precision=jax.lax.Precision.HIGHEST)
    y = y + bias[None, :, None, None]
    scale = params["gamma"] / jnp.sqrt(params["var"] + BN_EPS)
    y = (y - params["mean"][None, :, None, None]) * scale[None, :, None, None] \
        + params["beta"][None, :, None, None]
    return jax.nn.relu(y)


# ---------------------------------------------------------------------------
if __name__ == "__main__":
    B, Cin, Cout = 2, 8, 16
    Hin = Win = 8
    K, stride, padding = 4, 2, 1          # classic 2x-upsampling deconv config

    key = jax.random.PRNGKey(0)
    kx, kw, kb, kg, kbe, km, kv = jax.random.split(key, 7)
    params = {
        "w": jax.random.normal(kw, (Cin, Cout, K, K), jnp.float32) * 0.1,
        "b": jax.random.normal(kb, (Cout,), jnp.float32) * 0.1,
        "gamma": 1.0 + 0.1 * jax.random.normal(kg, (Cout,), jnp.float32),
        "beta": 0.1 * jax.random.normal(kbe, (Cout,), jnp.float32),
        "mean": 0.1 * jax.random.normal(km, (Cout,), jnp.float32),
        "var": 1.0 + 0.5 * jax.random.uniform(kv, (Cout,), jnp.float32),
    }
    x = jax.random.normal(kx, (B, Cin, Hin, Win), jnp.float32)

    fwd = jax.jit(lambda xx, pp: upconv2d_forward(xx, pp, stride=stride,
                                                  padding=padding))
    out = jax.block_until_ready(fwd(x, params))
    Hout = (Hin - 1) * stride - 2 * padding + K
    assert out.shape == (B, Cout, Hout, Hout), out.shape

    ref = ref_forward(x, params, stride=stride, padding=padding)
    # Tolerance leaves headroom for MXU multi-pass f32 rounding; genuine
    # structural bugs produce O(0.1..1) errors and are still caught.
    if not jnp.allclose(out, ref, rtol=2e-2, atol=2e-2):
        raise AssertionError(
            f"mismatch vs reference, max abs err = {jnp.max(jnp.abs(out - ref))}")
    print("KERNEL_OK")
</pallas_src>

<mosaic_0001>
module attributes {stable_mosaic.version = 11 : i64} {
  func.func @kernel(%arg0: i32, %arg1: memref<1x19x19x8xf32, #tpu.memory_space<vmem>>, %arg2: memref<16x8x16xf32, #tpu.memory_space<vmem>>, %arg3: memref<16x1xf32, #tpu.memory_space<vmem>>, %arg4: memref<16x1xf32, #tpu.memory_space<vmem>>, %arg5: memref<1x16x256xf32, #tpu.memory_space<vmem>>) attributes {dimension_semantics = [#tpu.dimension_semantics<parallel>], iteration_bounds = array<i64: 2>, scalar_prefetch = 0 : i64, scratch_operands = 0 : i64, tpu.core_type = #tpu.core_type<tc>, window_params = [{transform_indices = @transform_0, window_bounds = array<i64: 1, 19, 19, 8>}, {pipeline_mode = #tpu.pipeline_mode<synchronous>, transform_indices = @transform_1, window_bounds = array<i64: 16, 8, 16>}, {pipeline_mode = #tpu.pipeline_mode<synchronous>, transform_indices = @transform_2, window_bounds = array<i64: 16, 1>}, {pipeline_mode = #tpu.pipeline_mode<synchronous>, transform_indices = @transform_3, window_bounds = array<i64: 16, 1>}, {transform_indices = @transform_4, window_bounds = array<i64: 1, 16, 256>}]} {
    %cst = arith.constant 0.000000e+00 : f32
    %0 = vector.broadcast %cst : f32 to vector<256x16xf32>
    %c0 = arith.constant 0 : index
    %c0_0 = arith.constant 0 : index
    %c0_1 = arith.constant 0 : index
    %c0_2 = arith.constant 0 : index
    %1 = vector.load %arg1[%c0, %c0_0, %c0_1, %c0_2] : memref<1x19x19x8xf32, #tpu.memory_space<vmem>>, vector<1x16x16x8xf32>
    %2 = vector.shape_cast %1 : vector<1x16x16x8xf32> to vector<16x16x8xf32>
    %3 = vector.shape_cast %2 : vector<16x16x8xf32> to vector<256x8xf32>
    %c0_3 = arith.constant 0 : index
    %c0_4 = arith.constant 0 : index
    %c0_5 = arith.constant 0 : index
    %4 = vector.load %arg2[%c0_3, %c0_4, %c0_5] : memref<16x8x16xf32, #tpu.memory_space<vmem>>, vector<1x8x16xf32>
    %5 = vector.shape_cast %4 : vector<1x8x16xf32> to vector<8x16xf32>
    %cst_6 = arith.constant dense<0.000000e+00> : vector<256x16xf32>
    %6 = tpu.matmul %3, %5, %cst_6 {dimension_numbers = #tpu.dot_dimension_numbers<[1], [0], [0], [1], [0, 0, 1, 1], [], []>} : vector<256x8xf32>, vector<8x16xf32>, vector<256x16xf32> -> vector<256x16xf32>
    %7 = arith.addf %0, %6 : vector<256x16xf32>
    %c0_7 = arith.constant 0 : index
    %c0_8 = arith.constant 0 : index
    %c1 = arith.constant 1 : index
    %c0_9 = arith.constant 0 : index
    %8 = vector.load %arg1[%c0_7, %c0_8, %c1, %c0_9] : memref<1x19x19x8xf32, #tpu.memory_space<vmem>>, vector<1x16x16x8xf32>
    %9 = vector.shape_cast %8 : vector<1x16x16x8xf32> to vector<16x16x8xf32>
    %10 = vector.shape_cast %9 : vector<16x16x8xf32> to vector<256x8xf32>
    %c1_10 = arith.constant 1 : index
    %c0_11 = arith.constant 0 : index
    %c0_12 = arith.constant 0 : index
    %11 = vector.load %arg2[%c1_10, %c0_11, %c0_12] : memref<16x8x16xf32, #tpu.memory_space<vmem>>, vector<1x8x16xf32>
    %12 = vector.shape_cast %11 : vector<1x8x16xf32> to vector<8x16xf32>
    %cst_13 = arith.constant dense<0.000000e+00> : vector<256x16xf32>
    %13 = tpu.matmul %10, %12, %cst_13 {dimension_numbers = #tpu.dot_dimension_numbers<[1], [0], [0], [1], [0, 0, 1, 1], [], []>} : vector<256x8xf32>, vector<8x16xf32>, vector<256x16xf32> -> vector<256x16xf32>
    %14 = arith.addf %7, %13 : vector<256x16xf32>
    %c0_14 = arith.constant 0 : index
    %c0_15 = arith.constant 0 : index
    %c2 = arith.constant 2 : index
    %c0_16 = arith.constant 0 : index
    %15 = vector.load %arg1[%c0_14, %c0_15, %c2, %c0_16] : memref<1x19x19x8xf32, #tpu.memory_space<vmem>>, vector<1x16x16x8xf32>
    %16 = vector.shape_cast %15 : vector<1x16x16x8xf32> to vector<16x16x8xf32>
    %17 = vector.shape_cast %16 : vector<16x16x8xf32> to vector<256x8xf32>
    %c2_17 = arith.constant 2 : index
    %c0_18 = arith.constant 0 : index
    %c0_19 = arith.constant 0 : index
    %18 = vector.load %arg2[%c2_17, %c0_18, %c0_19] : memref<16x8x16xf32, #tpu.memory_space<vmem>>, vector<1x8x16xf32>
    %19 = vector.shape_cast %18 : vector<1x8x16xf32> to vector<8x16xf32>
    %cst_20 = arith.constant dense<0.000000e+00> : vector<256x16xf32>
    %20 = tpu.matmul %17, %19, %cst_20 {dimension_numbers = #tpu.dot_dimension_numbers<[1], [0], [0], [1], [0, 0, 1, 1], [], []>} : vector<256x8xf32>, vector<8x16xf32>, vector<256x16xf32> -> vector<256x16xf32>
    %21 = arith.addf %14, %20 : vector<256x16xf32>
    %c0_21 = arith.constant 0 : index
    %c0_22 = arith.constant 0 : index
    %c3 = arith.constant 3 : index
    %c0_23 = arith.constant 0 : index
    %22 = vector.load %arg1[%c0_21, %c0_22, %c3, %c0_23] : memref<1x19x19x8xf32, #tpu.memory_space<vmem>>, vector<1x16x16x8xf32>
    %23 = vector.shape_cast %22 : vector<1x16x16x8xf32> to vector<16x16x8xf32>
    %24 = vector.shape_cast %23 : vector<16x16x8xf32> to vector<256x8xf32>
    %c3_24 = arith.constant 3 : index
    %c0_25 = arith.constant 0 : index
    %c0_26 = arith.constant 0 : index
    %25 = vector.load %arg2[%c3_24, %c0_25, %c0_26] : memref<16x8x16xf32, #tpu.memory_space<vmem>>, vector<1x8x16xf32>
    %26 = vector.shape_cast %25 : vector<1x8x16xf32> to vector<8x16xf32>
    %cst_27 = arith.constant dense<0.000000e+00> : vector<256x16xf32>
    %27 = tpu.matmul %24, %26, %cst_27 {dimension_numbers = #tpu.dot_dimension_numbers<[1], [0], [0], [1], [0, 0, 1, 1], [], []>} : vector<256x8xf32>, vector<8x16xf32>, vector<256x16xf32> -> vector<256x16xf32>
    %28 = arith.addf %21, %27 : vector<256x16xf32>
    %c0_28 = arith.constant 0 : index
    %c1_29 = arith.constant 1 : index
    %c0_30 = arith.constant 0 : index
    %c0_31 = arith.constant 0 : index
    %29 = vector.load %arg1[%c0_28, %c1_29, %c0_30, %c0_31] : memref<1x19x19x8xf32, #tpu.memory_space<vmem>>, vector<1x16x16x8xf32>
    %30 = vector.shape_cast %29 : vector<1x16x16x8xf32> to vector<16x16x8xf32>
    %31 = vector.shape_cast %30 : vector<16x16x8xf32> to vector<256x8xf32>
    %c4 = arith.constant 4 : index
    %c0_32 = arith.constant 0 : index
    %c0_33 = arith.constant 0 : index
    %32 = vector.load %arg2[%c4, %c0_32, %c0_33] : memref<16x8x16xf32, #tpu.memory_space<vmem>>, vector<1x8x16xf32>
    %33 = vector.shape_cast %32 : vector<1x8x16xf32> to vector<8x16xf32>
    %cst_34 = arith.constant dense<0.000000e+00> : vector<256x16xf32>
    %34 = tpu.matmul %31, %33, %cst_34 {dimension_numbers = #tpu.dot_dimension_numbers<[1], [0], [0], [1], [0, 0, 1, 1], [], []>} : vector<256x8xf32>, vector<8x16xf32>, vector<256x16xf32> -> vector<256x16xf32>
    %35 = arith.addf %28, %34 : vector<256x16xf32>
    %c0_35 = arith.constant 0 : index
    %c1_36 = arith.constant 1 : index
    %c1_37 = arith.constant 1 : index
    %c0_38 = arith.constant 0 : index
    %36 = vector.load %arg1[%c0_35, %c1_36, %c1_37, %c0_38] : memref<1x19x19x8xf32, #tpu.memory_space<vmem>>, vector<1x16x16x8xf32>
    %37 = vector.shape_cast %36 : vector<1x16x16x8xf32> to vector<16x16x8xf32>
    %38 = vector.shape_cast %37 : vector<16x16x8xf32> to vector<256x8xf32>
    %c5 = arith.constant 5 : index
    %c0_39 = arith.constant 0 : index
    %c0_40 = arith.constant 0 : index
    %39 = vector.load %arg2[%c5, %c0_39, %c0_40] : memref<16x8x16xf32, #tpu.memory_space<vmem>>, vector<1x8x16xf32>
    %40 = vector.shape_cast %39 : vector<1x8x16xf32> to vector<8x16xf32>
    %cst_41 = arith.constant dense<0.000000e+00> : vector<256x16xf32>
    %41 = tpu.matmul %38, %40, %cst_41 {dimension_numbers = #tpu.dot_dimension_numbers<[1], [0], [0], [1], [0, 0, 1, 1], [], []>} : vector<256x8xf32>, vector<8x16xf32>, vector<256x16xf32> -> vector<256x16xf32>
    %42 = arith.addf %35, %41 : vector<256x16xf32>
    %c0_42 = arith.constant 0 : index
    %c1_43 = arith.constant 1 : index
    %c2_44 = arith.constant 2 : index
    %c0_45 = arith.constant 0 : index
    %43 = vector.load %arg1[%c0_42, %c1_43, %c2_44, %c0_45] : memref<1x19x19x8xf32, #tpu.memory_space<vmem>>, vector<1x16x16x8xf32>
    %44 = vector.shape_cast %43 : vector<1x16x16x8xf32> to vector<16x16x8xf32>
    %45 = vector.shape_cast %44 : vector<16x16x8xf32> to vector<256x8xf32>
    %c6 = arith.constant 6 : index
    %c0_46 = arith.constant 0 : index
    %c0_47 = arith.constant 0 : index
    %46 = vector.load %arg2[%c6, %c0_46, %c0_47] : memref<16x8x16xf32, #tpu.memory_space<vmem>>, vector<1x8x16xf32>
    %47 = vector.shape_cast %46 : vector<1x8x16xf32> to vector<8x16xf32>
    %cst_48 = arith.constant dense<0.000000e+00> : vector<256x16xf32>
    %48 = tpu.matmul %45, %47, %cst_48 {dimension_numbers = #tpu.dot_dimension_numbers<[1], [0], [0], [1], [0, 0, 1, 1], [], []>} : vector<256x8xf32>, vector<8x16xf32>, vector<256x16xf32> -> vector<256x16xf32>
    %49 = arith.addf %42, %48 : vector<256x16xf32>
    %c0_49 = arith.constant 0 : index
    %c1_50 = arith.constant 1 : index
    %c3_51 = arith.constant 3 : index
    %c0_52 = arith.constant 0 : index
    %50 = vector.load %arg1[%c0_49, %c1_50, %c3_51, %c0_52] : memref<1x19x19x8xf32, #tpu.memory_space<vmem>>, vector<1x16x16x8xf32>
    %51 = vector.shape_cast %50 : vector<1x16x16x8xf32> to vector<16x16x8xf32>
    %52 = vector.shape_cast %51 : vector<16x16x8xf32> to vector<256x8xf32>
    %c7 = arith.constant 7 : index
    %c0_53 = arith.constant 0 : index
    %c0_54 = arith.constant 0 : index
    %53 = vector.load %arg2[%c7, %c0_53, %c0_54] : memref<16x8x16xf32, #tpu.memory_space<vmem>>, vector<1x8x16xf32>
    %54 = vector.shape_cast %53 : vector<1x8x16xf32> to vector<8x16xf32>
    %cst_55 = arith.constant dense<0.000000e+00> : vector<256x16xf32>
    %55 = tpu.matmul %52, %54, %cst_55 {dimension_numbers = #tpu.dot_dimension_numbers<[1], [0], [0], [1], [0, 0, 1, 1], [], []>} : vector<256x8xf32>, vector<8x16xf32>, vector<256x16xf32> -> vector<256x16xf32>
    %56 = arith.addf %49, %55 : vector<256x16xf32>
    %c0_56 = arith.constant 0 : index
    %c2_57 = arith.constant 2 : index
    %c0_58 = arith.constant 0 : index
    %c0_59 = arith.constant 0 : index
    %57 = vector.load %arg1[%c0_56, %c2_57, %c0_58, %c0_59] : memref<1x19x19x8xf32, #tpu.memory_space<vmem>>, vector<1x16x16x8xf32>
    %58 = vector.shape_cast %57 : vector<1x16x16x8xf32> to vector<16x16x8xf32>
    %59 = vector.shape_cast %58 : vector<16x16x8xf32> to vector<256x8xf32>
    %c8 = arith.constant 8 : index
    %c0_60 = arith.constant 0 : index
    %c0_61 = arith.constant 0 : index
    %60 = vector.load %arg2[%c8, %c0_60, %c0_61] : memref<16x8x16xf32, #tpu.memory_space<vmem>>, vector<1x8x16xf32>
    %61 = vector.shape_cast %60 : vector<1x8x16xf32> to vector<8x16xf32>
    %cst_62 = arith.constant dense<0.000000e+00> : vector<256x16xf32>
    %62 = tpu.matmul %59, %61, %cst_62 {dimension_numbers = #tpu.dot_dimension_numbers<[1], [0], [0], [1], [0, 0, 1, 1], [], []>} : vector<256x8xf32>, vector<8x16xf32>, vector<256x16xf32> -> vector<256x16xf32>
    %63 = arith.addf %56, %62 : vector<256x16xf32>
    %c0_63 = arith.constant 0 : index
    %c2_64 = arith.constant 2 : index
    %c1_65 = arith.constant 1 : index
    %c0_66 = arith.constant 0 : index
    %64 = vector.load %arg1[%c0_63, %c2_64, %c1_65, %c0_66] : memref<1x19x19x8xf32, #tpu.memory_space<vmem>>, vector<1x16x16x8xf32>
    %65 = vector.shape_cast %64 : vector<1x16x16x8xf32> to vector<16x16x8xf32>
    %66 = vector.shape_cast %65 : vector<16x16x8xf32> to vector<256x8xf32>
    %c9 = arith.constant 9 : index
    %c0_67 = arith.constant 0 : index
    %c0_68 = arith.constant 0 : index
    %67 = vector.load %arg2[%c9, %c0_67, %c0_68] : memref<16x8x16xf32, #tpu.memory_space<vmem>>, vector<1x8x16xf32>
    %68 = vector.shape_cast %67 : vector<1x8x16xf32> to vector<8x16xf32>
    %cst_69 = arith.constant dense<0.000000e+00> : vector<256x16xf32>
    %69 = tpu.matmul %66, %68, %cst_69 {dimension_numbers = #tpu.dot_dimension_numbers<[1], [0], [0], [1], [0, 0, 1, 1], [], []>} : vector<256x8xf32>, vector<8x16xf32>, vector<256x16xf32> -> vector<256x16xf32>
    %70 = arith.addf %63, %69 : vector<256x16xf32>
    %c0_70 = arith.constant 0 : index
    %c2_71 = arith.constant 2 : index
    %c2_72 = arith.constant 2 : index
    %c0_73 = arith.constant 0 : index
    %71 = vector.load %arg1[%c0_70, %c2_71, %c2_72, %c0_73] : memref<1x19x19x8xf32, #tpu.memory_space<vmem>>, vector<1x16x16x8xf32>
    %72 = vector.shape_cast %71 : vector<1x16x16x8xf32> to vector<16x16x8xf32>
    %73 = vector.shape_cast %72 : vector<16x16x8xf32> to vector<256x8xf32>
    %c10 = arith.constant 10 : index
    %c0_74 = arith.constant 0 : index
    %c0_75 = arith.constant 0 : index
    %74 = vector.load %arg2[%c10, %c0_74, %c0_75] : memref<16x8x16xf32, #tpu.memory_space<vmem>>, vector<1x8x16xf32>
    %75 = vector.shape_cast %74 : vector<1x8x16xf32> to vector<8x16xf32>
    %cst_76 = arith.constant dense<0.000000e+00> : vector<256x16xf32>
    %76 = tpu.matmul %73, %75, %cst_76 {dimension_numbers = #tpu.dot_dimension_numbers<[1], [0], [0], [1], [0, 0, 1, 1], [], []>} : vector<256x8xf32>, vector<8x16xf32>, vector<256x16xf32> -> vector<256x16xf32>
    %77 = arith.addf %70, %76 : vector<256x16xf32>
    %c0_77 = arith.constant 0 : index
    %c2_78 = arith.constant 2 : index
    %c3_79 = arith.constant 3 : index
    %c0_80 = arith.constant 0 : index
    %78 = vector.load %arg1[%c0_77, %c2_78, %c3_79, %c0_80] : memref<1x19x19x8xf32, #tpu.memory_space<vmem>>, vector<1x16x16x8xf32>
    %79 = vector.shape_cast %78 : vector<1x16x16x8xf32> to vector<16x16x8xf32>
    %80 = vector.shape_cast %79 : vector<16x16x8xf32> to vector<256x8xf32>
    %c11 = arith.constant 11 : index
    %c0_81 = arith.constant 0 : index
    %c0_82 = arith.constant 0 : index
    %81 = vector.load %arg2[%c11, %c0_81, %c0_82] : memref<16x8x16xf32, #tpu.memory_space<vmem>>, vector<1x8x16xf32>
    %82 = vector.shape_cast %81 : vector<1x8x16xf32> to vector<8x16xf32>
    %cst_83 = arith.constant dense<0.000000e+00> : vector<256x16xf32>
    %83 = tpu.matmul %80, %82, %cst_83 {dimension_numbers = #tpu.dot_dimension_numbers<[1], [0], [0], [1], [0, 0, 1, 1], [], []>} : vector<256x8xf32>, vector<8x16xf32>, vector<256x16xf32> -> vector<256x16xf32>
    %84 = arith.addf %77, %83 : vector<256x16xf32>
    %c0_84 = arith.constant 0 : index
    %c3_85 = arith.constant 3 : index
    %c0_86 = arith.constant 0 : index
    %c0_87 = arith.constant 0 : index
    %85 = vector.load %arg1[%c0_84, %c3_85, %c0_86, %c0_87] : memref<1x19x19x8xf32, #tpu.memory_space<vmem>>, vector<1x16x16x8xf32>
    %86 = vector.shape_cast %85 : vector<1x16x16x8xf32> to vector<16x16x8xf32>
    %87 = vector.shape_cast %86 : vector<16x16x8xf32> to vector<256x8xf32>
    %c12 = arith.constant 12 : index
    %c0_88 = arith.constant 0 : index
    %c0_89 = arith.constant 0 : index
    %88 = vector.load %arg2[%c12, %c0_88, %c0_89] : memref<16x8x16xf32, #tpu.memory_space<vmem>>, vector<1x8x16xf32>
    %89 = vector.shape_cast %88 : vector<1x8x16xf32> to vector<8x16xf32>
    %cst_90 = arith.constant dense<0.000000e+00> : vector<256x16xf32>
    %90 = tpu.matmul %87, %89, %cst_90 {dimension_numbers = #tpu.dot_dimension_numbers<[1], [0], [0], [1], [0, 0, 1, 1], [], []>} : vector<256x8xf32>, vector<8x16xf32>, vector<256x16xf32> -> vector<256x16xf32>
    %91 = arith.addf %84, %90 : vector<256x16xf32>
    %c0_91 = arith.constant 0 : index
    %c3_92 = arith.constant 3 : index
    %c1_93 = arith.constant 1 : index
    %c0_94 = arith.constant 0 : index
    %92 = vector.load %arg1[%c0_91, %c3_92, %c1_93, %c0_94] : memref<1x19x19x8xf32, #tpu.memory_space<vmem>>, vector<1x16x16x8xf32>
    %93 = vector.shape_cast %92 : vector<1x16x16x8xf32> to vector<16x16x8xf32>
    %94 = vector.shape_cast %93 : vector<16x16x8xf32> to vector<256x8xf32>
    %c13 = arith.constant 13 : index
    %c0_95 = arith.constant 0 : index
    %c0_96 = arith.constant 0 : index
    %95 = vector.load %arg2[%c13, %c0_95, %c0_96] : memref<16x8x16xf32, #tpu.memory_space<vmem>>, vector<1x8x16xf32>
    %96 = vector.shape_cast %95 : vector<1x8x16xf32> to vector<8x16xf32>
    %cst_97 = arith.constant dense<0.000000e+00> : vector<256x16xf32>
    %97 = tpu.matmul %94, %96, %cst_97 {dimension_numbers = #tpu.dot_dimension_numbers<[1], [0], [0], [1], [0, 0, 1, 1], [], []>} : vector<256x8xf32>, vector<8x16xf32>, vector<256x16xf32> -> vector<256x16xf32>
    %98 = arith.addf %91, %97 : vector<256x16xf32>
    %c0_98 = arith.constant 0 : index
    %c3_99 = arith.constant 3 : index
    %c2_100 = arith.constant 2 : index
    %c0_101 = arith.constant 0 : index
    %99 = vector.load %arg1[%c0_98, %c3_99, %c2_100, %c0_101] : memref<1x19x19x8xf32, #tpu.memory_space<vmem>>, vector<1x16x16x8xf32>
    %100 = vector.shape_cast %99 : vector<1x16x16x8xf32> to vector<16x16x8xf32>
    %101 = vector.shape_cast %100 : vector<16x16x8xf32> to vector<256x8xf32>
    %c14 = arith.constant 14 : index
    %c0_102 = arith.constant 0 : index
    %c0_103 = arith.constant 0 : index
    %102 = vector.load %arg2[%c14, %c0_102, %c0_103] : memref<16x8x16xf32, #tpu.memory_space<vmem>>, vector<1x8x16xf32>
    %103 = vector.shape_cast %102 : vector<1x8x16xf32> to vector<8x16xf32>
    %cst_104 = arith.constant dense<0.000000e+00> : vector<256x16xf32>
    %104 = tpu.matmul %101, %103, %cst_104 {dimension_numbers = #tpu.dot_dimension_numbers<[1], [0], [0], [1], [0, 0, 1, 1], [], []>} : vector<256x8xf32>, vector<8x16xf32>, vector<256x16xf32> -> vector<256x16xf32>
    %105 = arith.addf %98, %104 : vector<256x16xf32>
    %c0_105 = arith.constant 0 : index
    %c3_106 = arith.constant 3 : index
    %c3_107 = arith.constant 3 : index
    %c0_108 = arith.constant 0 : index
    %106 = vector.load %arg1[%c0_105, %c3_106, %c3_107, %c0_108] : memref<1x19x19x8xf32, #tpu.memory_space<vmem>>, vector<1x16x16x8xf32>
    %107 = vector.shape_cast %106 : vector<1x16x16x8xf32> to vector<16x16x8xf32>
    %108 = vector.shape_cast %107 : vector<16x16x8xf32> to vector<256x8xf32>
    %c15 = arith.constant 15 : index
    %c0_109 = arith.constant 0 : index
    %c0_110 = arith.constant 0 : index
    %109 = vector.load %arg2[%c15, %c0_109, %c0_110] : memref<16x8x16xf32, #tpu.memory_space<vmem>>, vector<1x8x16xf32>
    %110 = vector.shape_cast %109 : vector<1x8x16xf32> to vector<8x16xf32>
    %cst_111 = arith.constant dense<0.000000e+00> : vector<256x16xf32>
    %111 = tpu.matmul %108, %110, %cst_111 {dimension_numbers = #tpu.dot_dimension_numbers<[1], [0], [0], [1], [0, 0, 1, 1], [], []>} : vector<256x8xf32>, vector<8x16xf32>, vector<256x16xf32> -> vector<256x16xf32>
    %112 = arith.addf %105, %111 : vector<256x16xf32>
    %113 = tpu.transpose %112, [1, 0] : vector<256x16xf32> -> vector<16x256xf32>
    %c0_112 = arith.constant 0 : index
    %c0_113 = arith.constant 0 : index
    %114 = vector.load %arg3[%c0_112, %c0_113] : memref<16x1xf32, #tpu.memory_space<vmem>>, vector<16x1xf32>
    %115 = vector.broadcast %114 : vector<16x1xf32> to vector<16x256xf32>
    %116 = arith.mulf %113, %115 : vector<16x256xf32>
    %c0_114 = arith.constant 0 : index
    %c0_115 = arith.constant 0 : index
    %117 = vector.load %arg4[%c0_114, %c0_115] : memref<16x1xf32, #tpu.memory_space<vmem>>, vector<16x1xf32>
    %118 = vector.broadcast %117 : vector<16x1xf32> to vector<16x256xf32>
    %119 = arith.addf %116, %118 : vector<16x256xf32>
    %cst_116 = arith.constant 0.000000e+00 : f32
    %120 = vector.broadcast %cst_116 : f32 to vector<16x256xf32>
    %121 = arith.maximumf %119, %120 : vector<16x256xf32>
    %c0_117 = arith.constant 0 : index
    %c0_118 = arith.constant 0 : index
    %c0_119 = arith.constant 0 : index
    %122 = vector.load %arg5[%c0_117, %c0_118, %c0_119] : memref<1x16x256xf32, #tpu.memory_space<vmem>>, vector<1x16x256xf32>
    %123 = vector.shape_cast %122 : vector<1x16x256xf32> to vector<16x256xf32>
    %124 = vector.shape_cast %121 : vector<16x256xf32> to vector<1x16x256xf32>
    tpu.vector_store %arg5[%c0_117, %c0_118, %c0_119], %124 {strides = array<i32>} : memref<1x16x256xf32, #tpu.memory_space<vmem>>, vector<1x16x256xf32>,
    return
  }
  func.func @transform_0(%arg0: i32) -> (i32, i32, i32, i32) {
    %c0_i32 = arith.constant 0 : i32
    %c0_i32_0 = arith.constant 0 : i32
    %c0_i32_1 = arith.constant 0 : i32
    %c0_i32_2 = arith.constant 0 : i32
    return %arg0, %c0_i32, %c0_i32_0, %c0_i32_1 : i32, i32, i32, i32
  }
  func.func @transform_1(%arg0: i32) -> (i32, i32, i32) {
    %c0_i32 = arith.constant 0 : i32
    %c0_i32_0 = arith.constant 0 : i32
    %c0_i32_1 = arith.constant 0 : i32
    %c0_i32_2 = arith.constant 0 : i32
    return %c0_i32, %c0_i32_0, %c0_i32_1 : i32, i32, i32
  }
  func.func @transform_2(%arg0: i32) -> (i32, i32) {
    %c0_i32 = arith.constant 0 : i32
    %c0_i32_0 = arith.constant 0 : i32
    %c0_i32_1 = arith.constant 0 : i32
    return %c0_i32, %c0_i32_0 : i32, i32
  }
  func.func @transform_3(%arg0: i32) -> (i32, i32) {
    %c0_i32 = arith.constant 0 : i32
    %c0_i32_0 = arith.constant 0 : i32
    %c0_i32_1 = arith.constant 0 : i32
    return %c0_i32, %c0_i32_0 : i32, i32
  }
  func.func @transform_4(%arg0: i32) -> (i32, i32, i32) {
    %c0_i32 = arith.constant 0 : i32
    %c0_i32_0 = arith.constant 0 : i32
    %c0_i32_1 = arith.constant 0 : i32
    return %arg0, %c0_i32, %c0_i32_0 : i32, i32, i32
  }
}

</mosaic_0001>

<llo_original>
// kernel: _lambda_.1
$region0: #{_lambda_.1}
  #allocation0 [shape = 'u32[]', space=smem, size = 0x4, offset = 0x4, fixed_abs, tag = 'smem constant byte address 0x4 - core index']
  #allocation1 [shape = 'u32[144,128]{1,0:T(1,128)}', space=vmem, size = 0x12000, scoped, tag = 'internal scratch']
  %s0 = inlined_call_operand.vmem [shape: f32[2,19,19,8], index: 0, kind: input, shape index: {}]
  %s1 = inlined_call_operand.vmem [shape: f32[16,8,16], index: 1, kind: input, shape index: {}]
  %s2 = inlined_call_operand.vmem [shape: f32[16,1], index: 2, kind: input, shape index: {}]
  %s3 = inlined_call_operand.vmem [shape: f32[16,1], index: 3, kind: input, shape index: {}]
  %s4 = inlined_call_operand.vmem [shape: f32[2,16,256], index: 4, kind: output, shape index: {}]
  %s5 = sld [smem:[#allocation0]]
  $region49: #{_lambda_.1} parent=0
    _
  %s7 = ssub.s32 1, %s5
  %s8 = scalar_select 0, %s7, %s5
  loop: start=0, step=1, limit=4
  $region2: #{_lambda_.1} parent=0 // loop_pre_header
    _
  $region3: #{_lambda_.1} parent=0 // loop_header
    %s10 = sphi 0, %s14
    %p11 = scmp.ge.s32.totalorder %s10, 4
    %s20 = sphi 0, %s22
    %s23 = sphi 0, %s20
    %s24 = sphi 0, %s23
    %s40 = sphi 0, %s24
    %s44 = sphi 0, %s44
    %s46 = sphi 0, %s44
    %s47 = sphi 0, %s46
    %s61 = sphi 0, %s47
    %s65 = sphi 0, %s65
    %s67 = sphi 0, %s65
    %s68 = sphi 0, %s67
    %s82 = sphi 0, %s68
    %s86 = sphi 0, %s86
    %s88 = sphi 0, %s86
    %s89 = sphi 0, %s88
    %s103 = sphi 0, %s89
    %s109 = sphi 0, %s111
    %s112 = sphi 0, %s109
    %s113 = sphi 0, %s112
    %s129 = sphi 0, %s113
  $region4: #{_lambda_.1} parent=0 // loop_header_branch
    %13 = sbr.rel (%p11) target = $region8
  $region5: #{_lambda_.1} parent=0 // loop_body
    %s15 = ssub.s32 %s10, 1
    %s16 = ssub.s32 %s10, 2
    %s17 = sadd.s32 %s10, 1
    %s18 = ssub.s32 %s10, %s17
    %p19 = scmp.eq.s32.totalorder %s18, 0
    %s21 = sadd.s32 %s20, 1
    %s22 = scalar_select %p19, %s20, %s21
    %p25 = pneg %p19
    %p26 = scmp.eq.s32.totalorder %s10, 1
    %p27 = por %p25, %p26
    %p28 = scmp.ne.s32.totalorder %s20, %s23
    %p29 = scmp.eq.s32.totalorder %s10, 0
    %p30 = por %p28, %p29
    %p31 = scmp.ne.s32.totalorder %s20, %s23
    %p32 = scmp.eq.s32.totalorder %s15, 1
    %p33 = por %p31, %p32
    %p34 = scmp.ne.s32.totalorder %s23, %s24
    %p35 = scmp.eq.s32.totalorder %s15, 0
    %p36 = por %p34, %p35
    %p37 = scmp.ne.s32.totalorder %s23, %s24
    %p38 = scmp.eq.s32.totalorder %s16, 1
    %p39 = por %p37, %p38
    %p41 = scmp.ne.s32.totalorder %s24, %s40
    %p42 = scmp.eq.s32.totalorder %s16, 0
    %p43 = por %p41, %p42
    %s45 = sadd.s32 %s44, 1
    %p48 = scmp.eq.s32.totalorder %s10, 1
    %p49 = scmp.ne.s32.totalorder %s44, %s46
    %p50 = scmp.eq.s32.totalorder %s10, 0
    %p51 = por %p49, %p50
    %p52 = scmp.ne.s32.totalorder %s44, %s46
    %p53 = scmp.eq.s32.totalorder %s15, 1
    %p54 = por %p52, %p53
    %p55 = scmp.ne.s32.totalorder %s46, %s47
    %p56 = scmp.eq.s32.totalorder %s15, 0
    %p57 = por %p55, %p56
    %p58 = scmp.ne.s32.totalorder %s46, %s47
    %p59 = scmp.eq.s32.totalorder %s16, 1
    %p60 = por %p58, %p59
    %p62 = scmp.ne.s32.totalorder %s47, %s61
    %p63 = scmp.eq.s32.totalorder %s16, 0
    %p64 = por %p62, %p63
    %s66 = sadd.s32 %s65, 1
    %p69 = scmp.eq.s32.totalorder %s10, 1
    %p70 = scmp.ne.s32.totalorder %s65, %s67
    %p71 = scmp.eq.s32.totalorder %s10, 0
    %p72 = por %p70, %p71
    %p73 = scmp.ne.s32.totalorder %s65, %s67
    %p74 = scmp.eq.s32.totalorder %s15, 1
    %p75 = por %p73, %p74
    %p76 = scmp.ne.s32.totalorder %s67, %s68
    %p77 = scmp.eq.s32.totalorder %s15, 0
    %p78 = por %p76, %p77
    %p79 = scmp.ne.s32.totalorder %s67, %s68
    %p80 = scmp.eq.s32.totalorder %s16, 1
    %p81 = por %p79, %p80
    %p83 = scmp.ne.s32.totalorder %s68, %s82
    %p84 = scmp.eq.s32.totalorder %s16, 0
    %p85 = por %p83, %p84
    %s87 = sadd.s32 %s86, 1
    %p90 = scmp.eq.s32.totalorder %s10, 1
    %p91 = scmp.ne.s32.totalorder %s86, %s88
    %p92 = scmp.eq.s32.totalorder %s10, 0
    %p93 = por %p91, %p92
    %p94 = scmp.ne.s32.totalorder %s86, %s88
    %p95 = scmp.eq.s32.totalorder %s15, 1
    %p96 = por %p94, %p95
    %p97 = scmp.ne.s32.totalorder %s88, %s89
    %p98 = scmp.eq.s32.totalorder %s15, 0
    %p99 = por %p97, %p98
    %p100 = scmp.ne.s32.totalorder %s88, %s89
    %p101 = scmp.eq.s32.totalorder %s16, 1
    %p102 = por %p100, %p101
    %p104 = scmp.ne.s32.totalorder %s89, %s103
    %p105 = scmp.eq.s32.totalorder %s16, 0
    %p106 = por %p104, %p105
    %s107 = ssub.s32 %s10, %s17
    %p108 = scmp.eq.s32.totalorder %s107, 0
    %s110 = sadd.s32 %s109, 1
    %s111 = scalar_select %p108, %s109, %s110
    %p114 = pneg %p108
    %p115 = scmp.eq.s32.totalorder %s10, 1
    %p116 = por %p114, %p115
    %p117 = scmp.ne.s32.totalorder %s109, %s112
    %p118 = scmp.eq.s32.totalorder %s10, 0
    %p119 = por %p117, %p118
    %p120 = scmp.ne.s32.totalorder %s109, %s112
    %p121 = scmp.eq.s32.totalorder %s15, 1
    %p122 = por %p120, %p121
    %p123 = scmp.ne.s32.totalorder %s112, %s113
    %p124 = scmp.eq.s32.totalorder %s15, 0
    %p125 = por %p123, %p124
    %p126 = scmp.ne.s32.totalorder %s112, %s113
    %p127 = scmp.eq.s32.totalorder %s16, 1
    %p128 = por %p126, %p127
    %p130 = scmp.ne.s32.totalorder %s113, %s129
    %p131 = scmp.eq.s32.totalorder %s16, 0
    %p132 = por %p130, %p131
    %p133 = scmp.le.s32.totalorder 1, %s10
    %p134 = scmp.lt.s32.totalorder %s10, 3
    %p135 = pnand %p133, %p134
    %p136 = pneg %p135
    // Predicated region
    $region9: #{_lambda_.1} parent=5 // pred_check
      _
    $region10: #{_lambda_.1} parent=5 // pred_check_branch
      %138 = sbr.rel (%p135) target = $region12
    $region11: #{_lambda_.1} parent=5 // pred_region
      %s139 = ssub.s32 %s10, 1
      // Predicated region
      $region13: #{_lambda_.1} parent=11 // pred_check
        %p140 = pneg %p57
      $region14: #{_lambda_.1} parent=11 // pred_check_branch
        %142 = sbr.rel (%p140) target = $region16
      $region15: #{_lambda_.1} parent=11 // pred_region
        _
      $region16: #{_lambda_.1} parent=11 // pred_fallthru
        _
      // Predicated region
      $region17: #{_lambda_.1} parent=11 // pred_check
        %p143 = pneg %p78
      $region18: #{_lambda_.1} parent=11 // pred_check_branch
        %145 = sbr.rel (%p143) target = $region20
      $region19: #{_lambda_.1} parent=11 // pred_region
        _
      $region20: #{_lambda_.1} parent=11 // pred_fallthru
        _
      // Predicated region
      $region21: #{_lambda_.1} parent=11 // pred_check
        %p146 = pneg %p99
      $region22: #{_lambda_.1} parent=11 // pred_check_branch
        %148 = sbr.rel (%p146) target = $region24
      $region23: #{_lambda_.1} parent=11 // pred_region
        _
      $region24: #{_lambda_.1} parent=11 // pred_fallthru
        _
    $region12: #{_lambda_.1} parent=5 // pred_fallthru
      _
    %p149 = scmp.lt.s32.totalorder %s10, 2
    // Predicated region
    $region25: #{_lambda_.1} parent=5 // pred_check
      %p150 = pneg %p149
    $region26: #{_lambda_.1} parent=5 // pred_check_branch
      %152 = sbr.rel (%p150) target = $region28
    $region27: #{_lambda_.1} parent=5 // pred_region
      // Predicated region
      $region29: #{_lambda_.1} parent=27 // pred_check
        %p153 = pneg %p30
      $region30: #{_lambda_.1} parent=27 // pred_check_branch
        %155 = sbr.rel (%p153) target = $region32
      $region31: #{_lambda_.1} parent=27 // pred_region
        %p156 = scmp.lt.s32.totalorder %s10, 1
        %s157 = scalar_select %p156, %s10, 1
        %s158 = smul.addr %s157, 57
        %s159 = smul.addr %s158, 8
        %s160 = scalar_lea.vmem %s0, %s159
      $region32: #{_lambda_.1} parent=27 // pred_fallthru
        _
    $region28: #{_lambda_.1} parent=5 // pred_fallthru
      _
    %p161 = scmp.le.s32.totalorder 1, %s10
    %p162 = scmp.lt.s32.totalorder %s10, 3
    %p163 = pnand %p161, %p162
    %p164 = pneg %p163
    // Predicated region
    $region33: #{_lambda_.1} parent=5 // pred_check
      _
    $region34: #{_lambda_.1} parent=5 // pred_check_branch
      %166 = sbr.rel (%p163) target = $region36
    $region35: #{_lambda_.1} parent=5 // pred_region
      %s167 = ssub.s32 %s10, 1
      %p168 = scmp.lt.s32.totalorder %s15, 1
      %s169 = scalar_select %p168, %s15, 1
      %s170 = smul.addr %s169, 57
      %s171 = smul.addr %s170, 8
      %s172 = scalar_lea.vmem %s0, %s171
      %p173 = pneg %p36
      %p174 = pneg %p33
      %p175 = pneg %p57
      %p176 = pneg %p54
      %p177 = pneg %p78
      %p178 = pneg %p75
      %p179 = pneg %p99
      %p180 = pneg %p96
      %p181 = pneg %p125
      %p182 = pneg %p122
      %p183 = scmp.lt.s32.totalorder %s15, 1
      %s184 = scalar_select %p183, %s15, 1
      %s185 = smul.addr %s184, 4
      %s186 = smul.addr %s185, 8
      %s187 = scalar_lea.vmem %s4, %s186
      %p188 = scmp.lt.s32.totalorder %s15, 1
      %s189 = scalar_select %p188, %s15, 1
      %s190 = smul.addr %s189, 57
      %s191 = smul.addr %s190, 8
      %s192 = scalar_lea.vmem %s0, %s191
      %p193 = scmp.lt.s32.totalorder %s15, 1
      %s194 = scalar_select %p193, %s15, 1
      %s195 = smul.addr %s194, 4
      %s196 = smul.addr %s195, 8
      %s197 = scalar_lea.vmem %s4, %s196
      %v198 = vld [vmem:[%s192] sm:$0xff]
      %v199 = vld [vmem:[%s192 + $0x8] sm:$0xff]
      %v200 = vld [vmem:[%s192 + $0x18] sm:$0xff]
      %v201 = vld [vmem:[%s192 + $0x20] sm:$0xff]
      %v202 = vld [vmem:[%s192 + $0x30] sm:$0xff]
      %v203 = vld [vmem:[%s192 + $0x38] sm:$0xff]
      %v204 = vld [vmem:[%s192 + $0x48] sm:$0xff]
      %v205 = vld [vmem:[%s192 + $0x50] sm:$0xff]
      %v206 = vld [vmem:[%s192 + $0x60] sm:$0xff]
      %v207 = vld [vmem:[%s192 + $0x68] sm:$0xff]
      %v208 = vld [vmem:[%s192 + $0x78] sm:$0xff]
      %v209 = vld [vmem:[%s192 + $0x80] sm:$0xff]
      %v210 = vld [vmem:[%s192 + $0x90] sm:$0xff]
      %v211 = vld [vmem:[%s192 + $0x98] sm:$0xff]
      %v212 = vld [vmem:[%s192 + $0xa8] sm:$0xff]
      %v213 = vld [vmem:[%s192 + $0xb0] sm:$0xff]
      %v214 = vld [vmem:[%s192 + $0xc0] sm:$0xff]
      %v215 = vld [vmem:[%s192 + $0xc8] sm:$0xff]
      %v216 = vld [vmem:[%s192 + $0xd8] sm:$0xff]
      %v217 = vld [vmem:[%s192 + $0xe0] sm:$0xff]
      %v218 = vld [vmem:[%s192 + $0xf0] sm:$0xff]
      %v219 = vld [vmem:[%s192 + $0xf8] sm:$0xff]
      %v220 = vld [vmem:[%s192 + $0x108] sm:$0xff]
      %v221 = vld [vmem:[%s192 + $0x110] sm:$0xff]
      %v222 = vld [vmem:[%s192 + $0x120] sm:$0xff]
      %v223 = vld [vmem:[%s192 + $0x128] sm:$0xff]
      %v224 = vld [vmem:[%s192 + $0x138] sm:$0xff]
      %v225 = vld [vmem:[%s192 + $0x140] sm:$0xff]
      %v226 = vld [vmem:[%s192 + $0x150] sm:$0xff]
      %v227 = vld [vmem:[%s192 + $0x158] sm:$0xff]
      %v228 = vld [vmem:[%s192 + $0x168] sm:$0xff]
      %v229 = vld [vmem:[%s192 + $0x170] sm:$0xff]
      %v230 = vld [vmem:[%s1] sm:$0xff]
      %v231 = vld [vmem:[%s192 + $0x1] sm:$0xff]
      %v232 = vld [vmem:[%s192 + $0x9] sm:$0xff]
      %v233 = vld [vmem:[%s192 + $0x19] sm:$0xff]
      %v234 = vld [vmem:[%s192 + $0x21] sm:$0xff]
      %v235 = vld [vmem:[%s192 + $0x31] sm:$0xff]
      %v236 = vld [vmem:[%s192 + $0x39] sm:$0xff]
      %v237 = vld [vmem:[%s192 + $0x49] sm:$0xff]
      %v238 = vld [vmem:[%s192 + $0x51] sm:$0xff]
      %v239 = vld [vmem:[%s192 + $0x61] sm:$0xff]
      %v240 = vld [vmem:[%s192 + $0x69] sm:$0xff]
      %v241 = vld [vmem:[%s192 + $0x79] sm:$0xff]
      %v242 = vld [vmem:[%s192 + $0x81] sm:$0xff]
      %v243 = vld [vmem:[%s192 + $0x91] sm:$0xff]
      %v244 = vld [vmem:[%s192 + $0x99] sm:$0xff]
      %v245 = vld [vmem:[%s192 + $0xa9] sm:$0xff]
      %v246 = vld [vmem:[%s192 + $0xb1] sm:$0xff]
      %v247 = vld [vmem:[%s192 + $0xc1] sm:$0xff]
      %v248 = vld [vmem:[%s192 + $0xc9] sm:$0xff]
      %v249 = vld [vmem:[%s192 + $0xd9] sm:$0xff]
      %v250 = vld [vmem:[%s192 + $0xe1] sm:$0xff]
      %v251 = vld [vmem:[%s192 + $0xf1] sm:$0xff]
      %v252 = vld [vmem:[%s192 + $0xf9] sm:$0xff]
      %v253 = vld [vmem:[%s192 + $0x109] sm:$0xff]
      %v254 = vld [vmem:[%s192 + $0x111] sm:$0xff]
      %v255 = vld [vmem:[%s192 + $0x121] sm:$0xff]
      %v256 = vld [vmem:[%s192 + $0x129] sm:$0xff]
      %v257 = vld [vmem:[%s192 + $0x139] sm:$0xff]
      %v258 = vld [vmem:[%s192 + $0x141] sm:$0xff]
      %v259 = vld [vmem:[%s192 + $0x151] sm:$0xff]
      %v260 = vld [vmem:[%s192 + $0x159] sm:$0xff]
      %v261 = vld [vmem:[%s192 + $0x169] sm:$0xff]
      %v262 = vld [vmem:[%s192 + $0x171] sm:$0xff]
      %s263 = scalar_lea.vmem %s1, 8
      %v264 = vld [vmem:[%s263] sm:$0xff]
      %vm265 = vcmask 64512
      %v267 = vsel %vm265, %v231, 0
      %v270 = vsel %vm265, %v232, 0
      %v273 = vsel %vm265, %v233, 0
      %v276 = vsel %vm265, %v234, 0
      %v279 = vsel %vm265, %v235, 0
      %v282 = vsel %vm265, %v236, 0
      %v285 = vsel %vm265, %v237, 0
      %v288 = vsel %vm265, %v238, 0
      %v291 = vsel %vm265, %v239, 0
      %v294 = vsel %vm265, %v240, 0
      %v297 = vsel %vm265, %v241, 0
      %v300 = vsel %vm265, %v242, 0
      %v303 = vsel %vm265, %v243, 0
      %v306 = vsel %vm265, %v244, 0
      %v309 = vsel %vm265, %v245, 0
      %v312 = vsel %vm265, %v246, 0
      %v315 = vsel %vm265, %v247, 0
      %v318 = vsel %vm265, %v248, 0
      %v321 = vsel %vm265, %v249, 0
      %v324 = vsel %vm265, %v250, 0
      %v327 = vsel %vm265, %v251, 0
      %v330 = vsel %vm265, %v252, 0
      %v333 = vsel %vm265, %v253, 0
      %v336 = vsel %vm265, %v254, 0
      %v339 = vsel %vm265, %v255, 0
      %v342 = vsel %vm265, %v256, 0
      %v345 = vsel %vm265, %v257, 0
      %v348 = vsel %vm265, %v258, 0
      %v351 = vsel %vm265, %v259, 0
      %v354 = vsel %vm265, %v260, 0
      %v357 = vsel %vm265, %v261, 0
      %v360 = vsel %vm265, %v262, 0
      %362 = vmatprep.subr.mxu0 0.0
      %363 = vmatpush1.msra.mxu0 %v264
      %364 = vmatprep.subr.mxu0 0.0
      %365 = vmatpush1.msra.mxu0 0.0
      %366 = vmatprep.subr.mxu0 0.0
      %367 = vmatpush1.msra.mxu0 0.0
      %368 = vmatprep.subr.mxu0 0.0
      %369 = vmatpush1.msra.mxu0 0.0
      %370 = vmatprep.subr.mxu0 0.0
      %371 = vmatpush1.msra.mxu0 0.0
      %372 = vmatprep.subr.mxu0 0.0
      %373 = vmatpush1.msra.mxu0 0.0
      %374 = vmatprep.subr.mxu0 0.0
      %375 = vmatpush1.msra.mxu0 0.0
      %376 = vmatprep.subr.mxu0 0.0
      %377 = vmatpush1.msra.mxu0 0.0
      %378 = vmatprep.subr.mxu0 0.0
      %379 = vmatpush1.msra.mxu0 0.0
      %380 = vmatprep.subr.mxu0 0.0
      %381 = vmatpush1.msra.mxu0 0.0
      %382 = vmatprep.subr.mxu0 0.0
      %383 = vmatpush1.msra.mxu0 0.0
      %384 = vmatprep.subr.mxu0 0.0
      %385 = vmatpush1.msra.mxu0 0.0
      %386 = vmatprep.subr.mxu0 0.0
      %387 = vmatpush1.msra.mxu0 0.0
      %388 = vmatprep.subr.mxu0 0.0
      %389 = vmatpush1.msra.mxu0 0.0
      %390 = vmatprep.subr.mxu0 0.0
      %391 = vmatpush1.msra.mxu0 0.0
      %392 = vmatprep.subr.mxu0 0.0
      %393 = vmatpush1.msra.mxu0 0.0
      %394 = vmatprep.subr.mxu0 0.0
      %395 = vmatpush1.msra.mxu0 0.0
      %396 = vmatprep.subr.mxu0 0.0
      %397 = vmatpush1.msra.mxu0 0.0
      %398 = vmatprep.subr.mxu0 0.0
      %399 = vmatpush1.msra.mxu0 0.0
      %400 = vmatprep.subr.mxu0 0.0
      %401 = vmatpush1.msra.mxu0 0.0
      %402 = vmatprep.subr.mxu0 0.0
      %403 = vmatpush1.msra.mxu0 0.0
      %404 = vmatprep.subr.mxu0 0.0
      %405 = vmatpush1.msra.mxu0 0.0
      %406 = vmatprep.subr.mxu0 0.0
      %407 = vmatpush1.msra.mxu0 0.0
      %408 = vmatprep.subr.mxu0 0.0
      %409 = vmatpush1.msra.mxu0 0.0
      %410 = vmatprep.subr.mxu0 0.0
      %411 = vmatpush1.msra.mxu0 0.0
      %412 = vmatprep.subr.mxu0 0.0
      %413 = vmatpush1.msra.mxu0 0.0
      %414 = vmatprep.subr.mxu0 0.0
      %415 = vmatpush1.msra.mxu0 0.0
      %416 = vmatprep.subr.mxu0 0.0
      %417 = vmatpush1.msra.mxu0 0.0
      %418 = vmatprep.subr.mxu0 0.0
      %419 = vmatpush1.msra.mxu0 0.0
      %420 = vmatprep.subr.mxu0 0.0
      %421 = vmatpush1.msra.mxu0 0.0
      %422 = vmatprep.subr.mxu0 0.0
      %423 = vmatpush1.msra.mxu0 0.0
      %424 = vmatprep.subr.mxu0 0.0
      %425 = vmatpush1.msra.mxu0 0.0
      %426 = vmatprep.mubr.f32.mxu0 0.0
      %427 = vmatmul.mubr.f32.gmra.mrb[0].mxu0 %v267
      %v428 = vpop.f32.mrb[0].mxu0
      %v429 = vadd.f32 0.0, %v428
      %v430 = vpop.f32.mrb[0].mxu0
      %431 = vmatprep.mubr.f32.mxu0 0.0
      %432 = vmatmul.mubr.f32.gmra.mrb[0].mxu0 %v270
      %v433 = vpop.f32.mrb[0].mxu0
      %v434 = vadd.f32 0.0, %v433
      %v435 = vpop.f32.mrb[0].mxu0
      %436 = vmatprep.mubr.f32.mxu0 0.0
      %437 = vmatmul.mubr.f32.gmra.mrb[0].mxu0 %v273
      %v438 = vpop.f32.mrb[0].mxu0
      %v439 = vadd.f32 0.0, %v438
      %v440 = vpop.f32.mrb[0].mxu0
      %441 = vmatprep.mubr.f32.mxu0 0.0
      %442 = vmatmul.mubr.f32.gmra.mrb[0].mxu0 %v276
      %v443 = vpop.f32.mrb[0].mxu0
      %v444 = vadd.f32 0.0, %v443
      %v445 = vpop.f32.mrb[0].mxu0
      %446 = vmatprep.mubr.f32.mxu0 0.0
      %447 = vmatmul.mubr.f32.gmra.mrb[0].mxu0 %v279
      %v448 = vpop.f32.mrb[0].mxu0
      %v449 = vadd.f32 0.0, %v448
      %v450 = vpop.f32.mrb[0].mxu0
      %451 = vmatprep.mubr.f32.mxu0 0.0
      %452 = vmatmul.mubr.f32.gmra.mrb[0].mxu0 %v282
      %v453 = vpop.f32.mrb[0].mxu0
      %v454 = vadd.f32 0.0, %v453
      %v455 = vpop.f32.mrb[0].mxu0
      %456 = vmatprep.mubr.f32.mxu0 0.0
      %457 = vmatmul.mubr.f32.gmra.mrb[0].mxu0 %v285
      %v458 = vpop.f32.mrb[0].mxu0
      %v459 = vadd.f32 0.0, %v458
      %v460 = vpop.f32.mrb[0].mxu0
      %461 = vmatprep.mubr.f32.mxu0 0.0
      %462 = vmatmul.mubr.f32.gmra.mrb[0].mxu0 %v288
      %v463 = vpop.f32.mrb[0].mxu0
      %v464 = vadd.f32 0.0, %v463
      %v465 = vpop.f32.mrb[0].mxu0
      %466 = vmatprep.mubr.f32.mxu0 0.0
      %467 = vmatmul.mubr.f32.gmra.mrb[0].mxu0 %v291
      %v468 = vpop.f32.mrb[0].mxu0
      %v469 = vadd.f32 0.0, %v468
      %v470 = vpop.f32.mrb[0].mxu0
      %471 = vmatprep.mubr.f32.mxu0 0.0
      %472 = vmatmul.mubr.f32.gmra.mrb[0].mxu0 %v294
      %v473 = vpop.f32.mrb[0].mxu0
      %v474 = vadd.f32 0.0, %v473
      %v475 = vpop.f32.mrb[0].mxu0
      %476 = vmatprep.mubr.f32.mxu0 0.0
      %477 = vmatmul.mubr.f32.gmra.mrb[0].mxu0 %v297
      %v478 = vpop.f32.mrb[0].mxu0
      %v479 = vadd.f32 0.0, %v478
      %v480 = vpop.f32.mrb[0].mxu0
      %481 = vmatprep.mubr.f32.mxu0 0.0
      %482 = vmatmul.mubr.f32.gmra.mrb[0].mxu0 %v300
      %v483 = vpop.f32.mrb[0].mxu0
      %v484 = vadd.f32 0.0, %v483
      %v485 = vpop.f32.mrb[0].mxu0
      %486 = vmatprep.mubr.f32.mxu0 0.0
      %487 = vmatmul.mubr.f32.gmra.mrb[0].mxu0 %v303
      %v488 = vpop.f32.mrb[0].mxu0
      %v489 = vadd.f32 0.0, %v488
      %v490 = vpop.f32.mrb[0].mxu0
      %491 = vmatprep.mubr.f32.mxu0 0.0
      %492 = vmatmul.mubr.f32.gmra.mrb[0].mxu0 %v306
      %v493 = vpop.f32.mrb[0].mxu0
      %v494 = vadd.f32 0.0, %v493
      %v495 = vpop.f32.mrb[0].mxu0
      %496 = vmatprep.mubr.f32.mxu0 0.0
      %497 = vmatmul.mubr.f32.gmra.mrb[0].mxu0 %v309
      %v498 = vpop.f32.mrb[0].mxu0
      %v499 = vadd.f32 0.0, %v498
      %v500 = vpop.f32.mrb[0].mxu0
      %501 = vmatprep.mubr.f32.mxu0 0.0
      %502 = vmatmul.mubr.f32.gmra.mrb[0].mxu0 %v312
      %v503 = vpop.f32.mrb[0].mxu0
      %v504 = vadd.f32 0.0, %v503
      %v505 = vpop.f32.mrb[0].mxu0
      %506 = vmatprep.mubr.f32.mxu0 0.0
      %507 = vmatmul.mubr.f32.gmra.mrb[0].mxu0 %v315
      %v508 = vpop.f32.mrb[0].mxu0
      %v509 = vadd.f32 0.0, %v508
      %v510 = vpop.f32.mrb[0].mxu0
      %511 = vmatprep.mubr.f32.mxu0 0.0
      %512 = vmatmul.mubr.f32.gmra.mrb[0].mxu0 %v318
      %v513 = vpop.f32.mrb[0].mxu0
      %v514 = vadd.f32 0.0, %v513
      %v515 = vpop.f32.mrb[0].mxu0
      %516 = vmatprep.mubr.f32.mxu0 0.0
      %517 = vmatmul.mubr.f32.gmra.mrb[0].mxu0 %v321
      %v518 = vpop.f32.mrb[0].mxu0
      %v519 = vadd.f32 0.0, %v518
      %v520 = vpop.f32.mrb[0].mxu0
      %521 = vmatprep.mubr.f32.mxu0 0.0
      %522 = vmatmul.mubr.f32.gmra.mrb[0].mxu0 %v324
      %v523 = vpop.f32.mrb[0].mxu0
      %v524 = vadd.f32 0.0, %v523
      %v525 = vpop.f32.mrb[0].mxu0
      %526 = vmatprep.mubr.f32.mxu0 0.0
      %527 = vmatmul.mubr.f32.gmra.mrb[0].mxu0 %v327
      %v528 = vpop.f32.mrb[0].mxu0
      %v529 = vadd.f32 0.0, %v528
      %v530 = vpop.f32.mrb[0].mxu0
      %531 = vmatprep.mubr.f32.mxu0 0.0
      %532 = vmatmul.mubr.f32.gmra.mrb[0].mxu0 %v330
      %v533 = vpop.f32.mrb[0].mxu0
      %v534 = vadd.f32 0.0, %v533
      %v535 = vpop.f32.mrb[0].mxu0
      %536 = vmatprep.mubr.f32.mxu0 0.0
      %537 = vmatmul.mubr.f32.gmra.mrb[0].mxu0 %v333
      %v538 = vpop.f32.mrb[0].mxu0
      %v539 = vadd.f32 0.0, %v538
      %v540 = vpop.f32.mrb[0].mxu0
      %541 = vmatprep.mubr.f32.mxu0 0.0
      %542 = vmatmul.mubr.f32.gmra.mrb[0].mxu0 %v336
      %v543 = vpop.f32.mrb[0].mxu0
      %v544 = vadd.f32 0.0, %v543
      %v545 = vpop.f32.mrb[0].mxu0
      %546 = vmatprep.mubr.f32.mxu0 0.0
      %547 = vmatmul.mubr.f32.gmra.mrb[0].mxu0 %v339
      %v548 = vpop.f32.mrb[0].mxu0
      %v549 = vadd.f32 0.0, %v548
      %v550 = vpop.f32.mrb[0].mxu0
      %551 = vmatprep.mubr.f32.mxu0 0.0
      %552 = vmatmul.mubr.f32.gmra.mrb[0].mxu0 %v342
      %v553 = vpop.f32.mrb[0].mxu0
      %v554 = vadd.f32 0.0, %v553
      %v555 = vpop.f32.mrb[0].mxu0
      %556 = vmatprep.mubr.f32.mxu0 0.0
      %557 = vmatmul.mubr.f32.gmra.mrb[0].mxu0 %v345
      %v558 = vpop.f32.mrb[0].mxu0
      %v559 = vadd.f32 0.0, %v558
      %v560 = vpop.f32.mrb[0].mxu0
      %561 = vmatprep.mubr.f32.mxu0 0.0
      %562 = vmatmul.mubr.f32.gmra.mrb[0].mxu0 %v348
      %v563 = vpop.f32.mrb[0].mxu0
      %v564 = vadd.f32 0.0, %v563
      %v565 = vpop.f32.mrb[0].mxu0
      %566 = vmatprep.mubr.f32.mxu0 0.0
      %567 = vmatmul.mubr.f32.gmra.mrb[0].mxu0 %v351
      %v568 = vpop.f32.mrb[0].mxu0
      %v569 = vadd.f32 0.0, %v568
      %v570 = vpop.f32.mrb[0].mxu0
      %571 = vmatprep.mubr.f32.mxu0 0.0
      %572 = vmatmul.mubr.f32.gmra.mrb[0].mxu0 %v354
      %v573 = vpop.f32.mrb[0].mxu0
      %v574 = vadd.f32 0.0, %v573
      %v575 = vpop.f32.mrb[0].mxu0
      %576 = vmatprep.mubr.f32.mxu0 0.0
      %577 = vmatmul.mubr.f32.gmra.mrb[0].mxu0 %v357
      %v578 = vpop.f32.mrb[0].mxu0
      %v579 = vadd.f32 0.0, %v578
      %v580 = vpop.f32.mrb[0].mxu0
      %581 = vmatprep.mubr.f32.mxu0 0.0
      %582 = vmatmul.mubr.f32.gmra.mrb[0].mxu0 %v360
      %v583 = vpop.f32.mrb[0].mxu0
      %v584 = vadd.f32 0.0, %v583
      %v585 = vpop.f32.mrb[0].mxu0
      %586 = vdwg.mxu0
      %v588 = vsel %vm265, %v198, 0
      %v591 = vsel %vm265, %v199, 0
      %v594 = vsel %vm265, %v200, 0
      %v597 = vsel %vm265, %v201, 0
      %v600 = vsel %vm265, %v202, 0
      %v603 = vsel %vm265, %v203, 0
      %v606 = vsel %vm265, %v204, 0
      %v609 = vsel %vm265, %v205, 0
      %v612 = vsel %vm265, %v206, 0
      %v615 = vsel %vm265, %v207, 0
      %v618 = vsel %vm265, %v208, 0
      %v621 = vsel %vm265, %v209, 0
      %v624 = vsel %vm265, %v210, 0
      %v627 = vsel %vm265, %v211, 0
      %v630 = vsel %vm265, %v212, 0
      %v633 = vsel %vm265, %v213, 0
      %v636 = vsel %vm265, %v214, 0
      %v639 = vsel %vm265, %v215, 0
      %v642 = vsel %vm265, %v216, 0
      %v645 = vsel %vm265, %v217, 0
      %v648 = vsel %vm265, %v218, 0
      %v651 = vsel %vm265, %v219, 0
      %v654 = vsel %vm265, %v220, 0
      %v657 = vsel %vm265, %v221, 0
      %v660 = vsel %vm265, %v222, 0
      %v663 = vsel %vm265, %v223, 0
      %v666 = vsel %vm265, %v224, 0
      %v669 = vsel %vm265, %v225, 0
      %v672 = vsel %vm265, %v226, 0
      %v675 = vsel %vm265, %v227, 0
      %v678 = vsel %vm265, %v228, 0
      %v681 = vsel %vm265, %v229, 0
      %683 = vmatprep.subr.mxu0 0.0
      %684 = vmatpush1.msra.mxu0 %v230
      %685 = vmatprep.subr.mxu0 0.0
      %686 = vmatpush1.msra.mxu0 0.0
      %687 = vmatprep.subr.mxu0 0.0
      %688 = vmatpush1.msra.mxu0 0.0
      %689 = vmatprep.subr.mxu0 0.0
      %690 = vmatpush1.msra.mxu0 0.0
      %691 = vmatprep.subr.mxu0 0.0
      %692 = vmatpush1.msra.mxu0 0.0
      %693 = vmatprep.subr.mxu0 0.0
      %694 = vmatpush1.msra.mxu0 0.0
      %695 = vmatprep.subr.mxu0 0.0
      %696 = vmatpush1.msra.mxu0 0.0
      %697 = vmatprep.subr.mxu0 0.0
      %698 = vmatpush1.msra.mxu0 0.0
      %699 = vmatprep.subr.mxu0 0.0
      %700 = vmatpush1.msra.mxu0 0.0
      %701 = vmatprep.subr.mxu0 0.0
      %702 = vmatpush1.msra.mxu0 0.0
      %703 = vmatprep.subr.mxu0 0.0
      %704 = vmatpush1.msra.mxu0 0.0
      %705 = vmatprep.subr.mxu0 0.0
      %706 = vmatpush1.msra.mxu0 0.0
      %707 = vmatprep.subr.mxu0 0.0
      %708 = vmatpush1.msra.mxu0 0.0
      %709 = vmatprep.subr.mxu0 0.0
      %710 = vmatpush1.msra.mxu0 0.0
      %711 = vmatprep.subr.mxu0 0.0
      %712 = vmatpush1.msra.mxu0 0.0
      %713 = vmatprep.subr.mxu0 0.0
      %714 = vmatpush1.msra.mxu0 0.0
      %715 = vmatprep.subr.mxu0 0.0
      %716 = vmatpush1.msra.mxu0 0.0
      %717 = vmatprep.subr.mxu0 0.0
      %718 = vmatpush1.msra.mxu0 0.0
      %719 = vmatprep.subr.mxu0 0.0
      %720 = vmatpush1.msra.mxu0 0.0
      %721 = vmatprep.subr.mxu0 0.0
      %722 = vmatpush1.msra.mxu0 0.0
      %723 = vmatprep.subr.mxu0 0.0
      %724 = vmatpush1.msra.mxu0 0.0
      %725 = vmatprep.subr.mxu0 0.0
      %726 = vmatpush1.msra.mxu0 0.0
      %727 = vmatprep.subr.mxu0 0.0
      %728 = vmatpush1.msra.mxu0 0.0
      %729 = vmatprep.subr.mxu0 0.0
      %730 = vmatpush1.msra.mxu0 0.0
      %731 = vmatprep.subr.mxu0 0.0
      %732 = vmatpush1.msra.mxu0 0.0
      %733 = vmatprep.subr.mxu0 0.0
      %734 = vmatpush1.msra.mxu0 0.0
      %735 = vmatprep.subr.mxu0 0.0
      %736 = vmatpush1.msra.mxu0 0.0
      %737 = vmatprep.subr.mxu0 0.0
      %738 = vmatpush1.msra.mxu0 0.0
      %739 = vmatprep.subr.mxu0 0.0
      %740 = vmatpush1.msra.mxu0 0.0
      %741 = vmatprep.subr.mxu0 0.0
      %742 = vmatpush1.msra.mxu0 0.0
      %743 = vmatprep.subr.mxu0 0.0
      %744 = vmatpush1.msra.mxu0 0.0
      %745 = vmatprep.subr.mxu0 0.0
      %746 = vmatpush1.msra.mxu0 0.0
      %747 = vmatprep.mubr.f32.mxu0 0.0
      %748 = vmatmul.mubr.f32.gmra.mrb[0].mxu0 %v588
      %v749 = vpop.f32.mrb[0].mxu0
      %v750 = vadd.f32 %v429, %v749
      %v751 = vpop.f32.mrb[0].mxu0
      %752 = vmatprep.mubr.f32.mxu0 0.0
      %753 = vmatmul.mubr.f32.gmra.mrb[0].mxu0 %v591
      %v754 = vpop.f32.mrb[0].mxu0
      %v755 = vadd.f32 %v434, %v754
      %v756 = vpop.f32.mrb[0].mxu0
      %757 = vmatprep.mubr.f32.mxu0 0.0
      %758 = vmatmul.mubr.f32.gmra.mrb[0].mxu0 %v594
      %v759 = vpop.f32.mrb[0].mxu0
      %v760 = vadd.f32 %v439, %v759
      %v761 = vpop.f32.mrb[0].mxu0
      %762 = vmatprep.mubr.f32.mxu0 0.0
      %763 = vmatmul.mubr.f32.gmra.mrb[0].mxu0 %v597
      %v764 = vpop.f32.mrb[0].mxu0
      %v765 = vadd.f32 %v444, %v764
      %v766 = vpop.f32.mrb[0].mxu0
      %767 = vmatprep.mubr.f32.mxu0 0.0
      %768 = vmatmul.mubr.f32.gmra.mrb[0].mxu0 %v600
      %v769 = vpop.f32.mrb[0].mxu0
      %v770 = vadd.f32 %v449, %v769
      %v771 = vpop.f32.mrb[0].mxu0
      %772 = vmatprep.mubr.f32.mxu0 0.0
      %773 = vmatmul.mubr.f32.gmra.mrb[0].mxu0 %v603
      %v774 = vpop.f32.mrb[0].mxu0
      %v775 = vadd.f32 %v454, %v774
      %v776 = vpop.f32.mrb[0].mxu0
      %777 = vmatprep.mubr.f32.mxu0 0.0
      %778 = vmatmul.mubr.f32.gmra.mrb[0].mxu0 %v606
      %v779 = vpop.f32.mrb[0].mxu0
      %v780 = vadd.f32 %v459, %v779
      %v781 = vpop.f32.mrb[0].mxu0
      %782 = vmatprep.mubr.f32.mxu0 0.0
      %783 = vmatmul.mubr.f32.gmra.mrb[0].mxu0 %v609
      %v784 = vpop.f32.mrb[0].mxu0
      %v785 = vadd.f32 %v464, %v784
      %v786 = vpop.f32.mrb[0].mxu0
      %787 = vmatprep.mubr.f32.mxu0 0.0
      %788 = vmatmul.mubr.f32.gmra.mrb[0].mxu0 %v612
      %v789 = vpop.f32.mrb[0].mxu0
      %v790 = vadd.f32 %v469, %v789
      %v791 = vpop.f32.mrb[0].mxu0
      %792 = vmatprep.mubr.f32.mxu0 0.0
      %793 = vmatmul.mubr.f32.gmra.mrb[0].mxu0 %v615
      %v794 = vpop.f32.mrb[0].mxu0
      %v795 = vadd.f32 %v474, %v794
      %v796 = vpop.f32.mrb[0].mxu0
      %797 = vmatprep.mubr.f32.mxu0 0.0
      %798 = vmatmul.mubr.f32.gmra.mrb[0].mxu0 %v618
      %v799 = vpop.f32.mrb[0].mxu0
      %v800 = vadd.f32 %v479, %v799
      %v801 = vpop.f32.mrb[0].mxu0
      %802 = vmatprep.mubr.f32.mxu0 0.0
      %803 = vmatmul.mubr.f32.gmra.mrb[0].mxu0 %v621
      %v804 = vpop.f32.mrb[0].mxu0
      %v805 = vadd.f32 %v484, %v804
      %v806 = vpop.f32.mrb[0].mxu0
      %807 = vmatprep.mubr.f32.mxu0 0.0
      %808 = vmatmul.mubr.f32.gmra.mrb[0].mxu0 %v624
      %v809 = vpop.f32.mrb[0].mxu0
      %v810 = vadd.f32 %v489, %v809
      %v811 = vpop.f32.mrb[0].mxu0
      %812 = vmatprep.mubr.f32.mxu0 0.0
      %813 = vmatmul.mubr.f32.gmra.mrb[0].mxu0 %v627
      %v814 = vpop.f32.mrb[0].mxu0
      %v815 = vadd.f32 %v494, %v814
      %v816 = vpop.f32.mrb[0].mxu0
      %817 = vmatprep.mubr.f32.mxu0 0.0
      %818 = vmatmul.mubr.f32.gmra.mrb[0].mxu0 %v630
      %v819 = vpop.f32.mrb[0].mxu0
      %v820 = vadd.f32 %v499, %v819
      %v821 = vpop.f32.mrb[0].mxu0
      %822 = vmatprep.mubr.f32.mxu0 0.0
      %823 = vmatmul.mubr.f32.gmra.mrb[0].mxu0 %v633
      %v824 = vpop.f32.mrb[0].mxu0
      %v825 = vadd.f32 %v504, %v824
      %v826 = vpop.f32.mrb[0].mxu0
      %827 = vmatprep.mubr.f32.mxu0 0.0
      %828 = vmatmul.mubr.f32.gmra.mrb[0].mxu0 %v636
      %v829 = vpop.f32.mrb[0].mxu0
      %v830 = vadd.f32 %v509, %v829
      %v831 = vpop.f32.mrb[0].mxu0
      %832 = vmatprep.mubr.f32.mxu0 0.0
      %833 = vmatmul.mubr.f32.gmra.mrb[0].mxu0 %v639
      %v834 = vpop.f32.mrb[0].mxu0
      %v835 = vadd.f32 %v514, %v834
      %v836 = vpop.f32.mrb[0].mxu0
      %837 = vmatprep.mubr.f32.mxu0 0.0
      %838 = vmatmul.mubr.f32.gmra.mrb[0].mxu0 %v642
      %v839 = vpop.f32.mrb[0].mxu0
      %v840 = vadd.f32 %v519, %v839
      %v841 = vpop.f32.mrb[0].mxu0
      %842 = vmatprep.mubr.f32.mxu0 0.0
      %843 = vmatmul.mubr.f32.gmra.mrb[0].mxu0 %v645
      %v844 = vpop.f32.mrb[0].mxu0
      %v845 = vadd.f32 %v524, %v844
      %v846 = vpop.f32.mrb[0].mxu0
      %847 = vmatprep.mubr.f32.mxu0 0.0
      %848 = vmatmul.mubr.f32.gmra.mrb[0].mxu0 %v648
      %v849 = vpop.f32.mrb[0].mxu0
      %v850 = vadd.f32 %v529, %v849
      %v851 = vpop.f32.mrb[0].mxu0
      %852 = vmatprep.mubr.f32.mxu0 0.0
      %853 = vmatmul.mubr.f32.gmra.mrb[0].mxu0 %v651
      %v854 = vpop.f32.mrb[0].mxu0
      %v855 = vadd.f32 %v534, %v854
      %v856 = vpop.f32.mrb[0].mxu0
      %857 = vmatprep.mubr.f32.mxu0 0.0
      %858 = vmatmul.mubr.f32.gmra.mrb[0].mxu0 %v654
      %v859 = vpop.f32.mrb[0].mxu0
      %v860 = vadd.f32 %v539, %v859
      %v861 = vpop.f32.mrb[0].mxu0
      %862 = vmatprep.mubr.f32.mxu0 0.0
      %863 = vmatmul.mubr.f32.gmra.mrb[0].mxu0 %v657
      %v864 = vpop.f32.mrb[0].mxu0
      %v865 = vadd.f32 %v544, %v864
      %v866 = vpop.f32.mrb[0].mxu0
      %867 = vmatprep.mubr.f32.mxu0 0.0
      %868 = vmatmul.mubr.f32.gmra.mrb[0].mxu0 %v660
      %v869 = vpop.f32.mrb[0].mxu0
      %v870 = vadd.f32 %v549, %v869
      %v871 = vpop.f32.mrb[0].mxu0
      %872 = vmatprep.mubr.f32.mxu0 0.0
      %873 = vmatmul.mubr.f32.gmra.mrb[0].mxu0 %v663
      %v874 = vpop.f32.mrb[0].mxu0
      %v875 = vadd.f32 %v554, %v874
      %v876 = vpop.f32.mrb[0].mxu0
      %877 = vmatprep.mubr.f32.mxu0 0.0
      %878 = vmatmul.mubr.f32.gmra.mrb[0].mxu0 %v666
      %v879 = vpop.f32.mrb[0].mxu0
      %v880 = vadd.f32 %v559, %v879
      %v881 = vpop.f32.mrb[0].mxu0
      %882 = vmatprep.mubr.f32.mxu0 0.0
      %883 = vmatmul.mubr.f32.gmra.mrb[0].mxu0 %v669
      %v884 = vpop.f32.mrb[0].mxu0
      %v885 = vadd.f32 %v564, %v884
      %v886 = vpop.f32.mrb[0].mxu0
      %887 = vmatprep.mubr.f32.mxu0 0.0
      %888 = vmatmul.mubr.f32.gmra.mrb[0].mxu0 %v672
      %v889 = vpop.f32.mrb[0].mxu0
      %v890 = vadd.f32 %v569, %v889
      %v891 = vpop.f32.mrb[0].mxu0
      %892 = vmatprep.mubr.f32.mxu0 0.0
      %893 = vmatmul.mubr.f32.gmra.mrb[0].mxu0 %v675
      %v894 = vpop.f32.mrb[0].mxu0
      %v895 = vadd.f32 %v574, %v894
      %v896 = vpop.f32.mrb[0].mxu0
      %897 = vmatprep.mubr.f32.mxu0 0.0
      %898 = vmatmul.mubr.f32.gmra.mrb[0].mxu0 %v678
      %v899 = vpop.f32.mrb[0].mxu0
      %v900 = vadd.f32 %v579, %v899
      %v901 = vpop.f32.mrb[0].mxu0
      %902 = vmatprep.mubr.f32.mxu0 0.0
      %903 = vmatmul.mubr.f32.gmra.mrb[0].mxu0 %v681
      %v904 = vpop.f32.mrb[0].mxu0
      %v905 = vadd.f32 %v584, %v904
      %v906 = vpop.f32.mrb[0].mxu0
      %907 = vdwg.mxu0
      %v908 = vld [vmem:[%s192 + $0x2] sm:$0xff]
      %v909 = vld [vmem:[%s192 + $0xa] sm:$0xff]
      %v910 = vld [vmem:[%s192 + $0x1a] sm:$0xff]
      %v911 = vld [vmem:[%s192 + $0x22] sm:$0xff]
      %v912 = vld [vmem:[%s192 + $0x32] sm:$0xff]
      %v913 = vld [vmem:[%s192 + $0x3a] sm:$0xff]
      %v914 = vld [vmem:[%s192 + $0x4a] sm:$0xff]
      %v915 = vld [vmem:[%s192 + $0x52] sm:$0xff]
      %v916 = vld [vmem:[%s192 + $0x62] sm:$0xff]
      %v917 = vld [vmem:[%s192 + $0x6a] sm:$0xff]
      %v918 = vld [vmem:[%s192 + $0x7a] sm:$0xff]
      %v919 = vld [vmem:[%s192 + $0x82] sm:$0xff]
      %v920 = vld [vmem:[%s192 + $0x92] sm:$0xff]
      %v921 = vld [vmem:[%s192 + $0x9a] sm:$0xff]
      %v922 = vld [vmem:[%s192 + $0xaa] sm:$0xff]
      %v923 = vld [vmem:[%s192 + $0xb2] sm:$0xff]
      %v924 = vld [vmem:[%s192 + $0xc2] sm:$0xff]
      %v925 = vld [vmem:[%s192 + $0xca] sm:$0xff]
      %v926 = vld [vmem:[%s192 + $0xda] sm:$0xff]
      %v927 = vld [vmem:[%s192 + $0xe2] sm:$0xff]
      %v928 = vld [vmem:[%s192 + $0xf2] sm:$0xff]
      %v929 = vld [vmem:[%s192 + $0xfa] sm:$0xff]
      %v930 = vld [vmem:[%s192 + $0x10a] sm:$0xff]
      %v931 = vld [vmem:[%s192 + $0x112] sm:$0xff]
      %v932 = vld [vmem:[%s192 + $0x122] sm:$0xff]
      %v933 = vld [vmem:[%s192 + $0x12a] sm:$0xff]
      %v934 = vld [vmem:[%s192 + $0x13a] sm:$0xff]
      %v935 = vld [vmem:[%s192 + $0x142] sm:$0xff]
      %v936 = vld [vmem:[%s192 + $0x152] sm:$0xff]
      %v937 = vld [vmem:[%s192 + $0x15a] sm:$0xff]
      %v938 = vld [vmem:[%s192 + $0x16a] sm:$0xff]
      %v939 = vld [vmem:[%s192 + $0x172] sm:$0xff]
      %s940 = scalar_lea.vmem %s1, 16
      %v941 = vld [vmem:[%s940] sm:$0xff]
      %v943 = vsel %vm265, %v908, 0
      %v946 = vsel %vm265, %v909, 0
      %v949 = vsel %vm265, %v910, 0
      %v952 = vsel %vm265, %v911, 0
      %v955 = vsel %vm265, %v912, 0
      %v958 = vsel %vm265, %v913, 0
      %v961 = vsel %vm265, %v914, 0
      %v964 = vsel %vm265, %v915, 0
      %v967 = vsel %vm265, %v916, 0
      %v970 = vsel %vm265, %v917, 0
      %v973 = vsel %vm265, %v918, 0
      %v976 = vsel %vm265, %v919, 0
      %v979 = vsel %vm265, %v920, 0
      %v982 = vsel %vm265, %v921, 0
      %v985 = vsel %vm265, %v922, 0
      %v988 = vsel %vm265, %v923, 0
      %v991 = vsel %vm265, %v924, 0
      %v994 = vsel %vm265, %v925, 0
      %v997 = vsel %vm265, %v926, 0
      %v1000 = vsel %vm265, %v927, 0
      %v1003 = vsel %vm265, %v928, 0
      %v1006 = vsel %vm265, %v929, 0
      %v1009 = vsel %vm265, %v930, 0
      %v1012 = vsel %vm265, %v931, 0
      %v1015 = vsel %vm265, %v932, 0
      %v1018 = vsel %vm265, %v933, 0
      %v1021 = vsel %vm265, %v934, 0
      %v1024 = vsel %vm265, %v935, 0
      %v1027 = vsel %vm265, %v936, 0
      %v1030 = vsel %vm265, %v937, 0
      %v1033 = vsel %vm265, %v938, 0
      %v1036 = vsel %vm265, %v939, 0
      %1038 = vmatprep.subr.mxu0 0.0
      %1039 = vmatpush1.msra.mxu0 %v941
      %1040 = vmatprep.subr.mxu0 0.0
      %1041 = vmatpush1.msra.mxu0 0.0
      %1042 = vmatprep.subr.mxu0 0.0
      %1043 = vmatpush1.msra.mxu0 0.0
      %1044 = vmatprep.subr.mxu0 0.0
      %1045 = vmatpush1.msra.mxu0 0.0
      %1046 = vmatprep.subr.mxu0 0.0
      %1047 = vmatpush1.msra.mxu0 0.0
      %1048 = vmatprep.subr.mxu0 0.0
      %1049 = vmatpush1.msra.mxu0 0.0
      %1050 = vmatprep.subr.mxu0 0.0
      %1051 = vmatpush1.msra.mxu0 0.0
      %1052 = vmatprep.subr.mxu0 0.0
      %1053 = vmatpush1.msra.mxu0 0.0
      %1054 = vmatprep.subr.mxu0 0.0
      %1055 = vmatpush1.msra.mxu0 0.0
      %1056 = vmatprep.subr.mxu0 0.0
      %1057 = vmatpush1.msra.mxu0 0.0
      %1058 = vmatprep.subr.mxu0 0.0
      %1059 = vmatpush1.msra.mxu0 0.0
      %1060 = vmatprep.subr.mxu0 0.0
      %1061 = vmatpush1.msra.mxu0 0.0
      %1062 = vmatprep.subr.mxu0 0.0
      %1063 = vmatpush1.msra.mxu0 0.0
      %1064 = vmatprep.subr.mxu0 0.0
      %1065 = vmatpush1.msra.mxu0 0.0
      %1066 = vmatprep.subr.mxu0 0.0
      %1067 = vmatpush1.msra.mxu0 0.0
      %1068 = vmatprep.subr.mxu0 0.0
      %1069 = vmatpush1.msra.mxu0 0.0
      %1070 = vmatprep.subr.mxu0 0.0
      %1071 = vmatpush1.msra.mxu0 0.0
      %1072 = vmatprep.subr.mxu0 0.0
      %1073 = vmatpush1.msra.mxu0 0.0
      %1074 = vmatprep.subr.mxu0 0.0
      %1075 = vmatpush1.msra.mxu0 0.0
      %1076 = vmatprep.subr.mxu0 0.0
      %1077 = vmatpush1.msra.mxu0 0.0
      %1078 = vmatprep.subr.mxu0 0.0
      %1079 = vmatpush1.msra.mxu0 0.0
      %1080 = vmatprep.subr.mxu0 0.0
      %1081 = vmatpush1.msra.mxu0 0.0
      %1082 = vmatprep.subr.mxu0 0.0
      %1083 = vmatpush1.msra.mxu0 0.0
      %1084 = vmatprep.subr.mxu0 0.0
      %1085 = vmatpush1.msra.mxu0 0.0
      %1086 = vmatprep.subr.mxu0 0.0
      %1087 = vmatpush1.msra.mxu0 0.0
      %1088 = vmatprep.subr.mxu0 0.0
      %1089 = vmatpush1.msra.mxu0 0.0
      %1090 = vmatprep.subr.mxu0 0.0
      %1091 = vmatpush1.msra.mxu0 0.0
      %1092 = vmatprep.subr.mxu0 0.0
      %1093 = vmatpush1.msra.mxu0 0.0
      %1094 = vmatprep.subr.mxu0 0.0
      %1095 = vmatpush1.msra.mxu0 0.0
      %1096 = vmatprep.subr.mxu0 0.0
      %1097 = vmatpush1.msra.mxu0 0.0
      %1098 = vmatprep.subr.mxu0 0.0
      %1099 = vmatpush1.msra.mxu0 0.0
      %1100 = vmatprep.subr.mxu0 0.0
      %1101 = vmatpush1.msra.mxu0 0.0
      %1102 = vmatprep.mubr.f32.mxu0 0.0
      %1103 = vmatmul.mubr.f32.gmra.mrb[0].mxu0 %v943
      %v1104 = vpop.f32.mrb[0].mxu0
      %v1105 = vadd.f32 0.0, %v1104
      %v1106 = vpop.f32.mrb[0].mxu0
      %1107 = vmatprep.mubr.f32.mxu0 0.0
      %1108 = vmatmul.mubr.f32.gmra.mrb[0].mxu0 %v946
      %v1109 = vpop.f32.mrb[0].mxu0
      %v1110 = vadd.f32 0.0, %v1109
      %v1111 = vpop.f32.mrb[0].mxu0
      %1112 = vmatprep.mubr.f32.mxu0 0.0
      %1113 = vmatmul.mubr.f32.gmra.mrb[0].mxu0 %v949
      %v1114 = vpop.f32.mrb[0].mxu0
      %v1115 = vadd.f32 0.0, %v1114
      %v1116 = vpop.f32.mrb[0].mxu0
      %1117 = vmatprep.mubr.f32.mxu0 0.0
      %1118 = vmatmul.mubr.f32.gmra.mrb[0].mxu0 %v952
      %v1119 = vpop.f32.mrb[0].mxu0
      %v1120 = vadd.f32 0.0, %v1119
      %v1121 = vpop.f32.mrb[0].mxu0
      %1122 = vmatprep.mubr.f32.mxu0 0.0
      %1123 = vmatmul.mubr.f32.gmra.mrb[0].mxu0 %v955
      %v1124 = vpop.f32.mrb[0].mxu0
      %v1125 = vadd.f32 0.0, %v1124
      %v1126 = vpop.f32.mrb[0].mxu0
      %1127 = vmatprep.mubr.f32.mxu0 0.0
      %1128 = vmatmul.mubr.f32.gmra.mrb[0].mxu0 %v958
      %v1129 = vpop.f32.mrb[0].mxu0
      %v1130 = vadd.f32 0.0, %v1129
      %v1131 = vpop.f32.mrb[0].mxu0
      %1132 = vmatprep.mubr.f32.mxu0 0.0
      %1133 = vmatmul.mubr.f32.gmra.mrb[0].mxu0 %v961
      %v1134 = vpop.f32.mrb[0].mxu0
      %v1135 = vadd.f32 0.0, %v1134
      %v1136 = vpop.f32.mrb[0].mxu0
      %1137 = vmatprep.mubr.f32.mxu0 0.0
      %1138 = vmatmul.mubr.f32.gmra.mrb[0].mxu0 %v964
      %v1139 = vpop.f32.mrb[0].mxu0
      %v1140 = vadd.f32 0.0, %v1139
      %v1141 = vpop.f32.mrb[0].mxu0
      %1142 = vmatprep.mubr.f32.mxu0 0.0
      %1143 = vmatmul.mubr.f32.gmra.mrb[0].mxu0 %v967
      %v1144 = vpop.f32.mrb[0].mxu0
      %v1145 = vadd.f32 0.0, %v1144
      %v1146 = vpop.f32.mrb[0].mxu0
      %1147 = vmatprep.mubr.f32.mxu0 0.0
      %1148 = vmatmul.mubr.f32.gmra.mrb[0].mxu0 %v970
      %v1149 = vpop.f32.mrb[0].mxu0
      %v1150 = vadd.f32 0.0, %v1149
      %v1151 = vpop.f32.mrb[0].mxu0
      %1152 = vmatprep.mubr.f32.mxu0 0.0
      %1153 = vmatmul.mubr.f32.gmra.mrb[0].mxu0 %v973
      %v1154 = vpop.f32.mrb[0].mxu0
      %v1155 = vadd.f32 0.0, %v1154
      %v1156 = vpop.f32.mrb[0].mxu0
      %1157 = vmatprep.mubr.f32.mxu0 0.0
      %1158 = vmatmul.mubr.f32.gmra.mrb[0].mxu0 %v976
      %v1159 = vpop.f32.mrb[0].mxu0
      %v1160 = vadd.f32 0.0, %v1159
      %v1161 = vpop.f32.mrb[0].mxu0
      %1162 = vmatprep.mubr.f32.mxu0 0.0
      %1163 = vmatmul.mubr.f32.gmra.mrb[0].mxu0 %v979
      %v1164 = vpop.f32.mrb[0].mxu0
      %v1165 = vadd.f32 0.0, %v1164
      %v1166 = vpop.f32.mrb[0].mxu0
      %1167 = vmatprep.mubr.f32.mxu0 0.0
      %1168 = vmatmul.mubr.f32.gmra.mrb[0].mxu0 %v982
      %v1169 = vpop.f32.mrb[0].mxu0
      %v1170 = vadd.f32 0.0, %v1169
      %v1171 = vpop.f32.mrb[0].mxu0
      %1172 = vmatprep.mubr.f32.mxu0 0.0
      %1173 = vmatmul.mubr.f32.gmra.mrb[0].mxu0 %v985
      %v1174 = vpop.f32.mrb[0].mxu0
      %v1175 = vadd.f32 0.0, %v1174
      %v1176 = vpop.f32.mrb[0].mxu0
      %1177 = vmatprep.mubr.f32.mxu0 0.0
      %1178 = vmatmul.mubr.f32.gmra.mrb[0].mxu0 %v988
      %v1179 = vpop.f32.mrb[0].mxu0
      %v1180 = vadd.f32 0.0, %v1179
      %v1181 = vpop.f32.mrb[0].mxu0
      %1182 = vmatprep.mubr.f32.mxu0 0.0
      %1183 = vmatmul.mubr.f32.gmra.mrb[0].mxu0 %v991
      %v1184 = vpop.f32.mrb[0].mxu0
      %v1185 = vadd.f32 0.0, %v1184
      %v1186 = vpop.f32.mrb[0].mxu0
      %1187 = vmatprep.mubr.f32.mxu0 0.0
      %1188 = vmatmul.mubr.f32.gmra.mrb[0].mxu0 %v994
      %v1189 = vpop.f32.mrb[0].mxu0
      %v1190 = vadd.f32 0.0, %v1189
      %v1191 = vpop.f32.mrb[0].mxu0
      %1192 = vmatprep.mubr.f32.mxu0 0.0
      %1193 = vmatmul.mubr.f32.gmra.mrb[0].mxu0 %v997
      %v1194 = vpop.f32.mrb[0].mxu0
      %v1195 = vadd.f32 0.0, %v1194
      %v1196 = vpop.f32.mrb[0].mxu0
      %1197 = vmatprep.mubr.f32.mxu0 0.0
      %1198 = vmatmul.mubr.f32.gmra.mrb[0].mxu0 %v1000
      %v1199 = vpop.f32.mrb[0].mxu0
      %v1200 = vadd.f32 0.0, %v1199
      %v1201 = vpop.f32.mrb[0].mxu0
      %1202 = vmatprep.mubr.f32.mxu0 0.0
      %1203 = vmatmul.mubr.f32.gmra.mrb[0].mxu0 %v1003
      %v1204 = vpop.f32.mrb[0].mxu0
      %v1205 = vadd.f32 0.0, %v1204
      %v1206 = vpop.f32.mrb[0].mxu0
      %1207 = vmatprep.mubr.f32.mxu0 0.0
      %1208 = vmatmul.mubr.f32.gmra.mrb[0].mxu0 %v1006
      %v1209 = vpop.f32.mrb[0].mxu0
      %v1210 = vadd.f32 0.0, %v1209
      %v1211 = vpop.f32.mrb[0].mxu0
      %1212 = vmatprep.mubr.f32.mxu0 0.0
      %1213 = vmatmul.mubr.f32.gmra.mrb[0].mxu0 %v1009
      %v1214 = vpop.f32.mrb[0].mxu0
      %v1215 = vadd.f32 0.0, %v1214
      %v1216 = vpop.f32.mrb[0].mxu0
      %1217 = vmatprep.mubr.f32.mxu0 0.0
      %1218 = vmatmul.mubr.f32.gmra.mrb[0].mxu0 %v1012
      %v1219 = vpop.f32.mrb[0].mxu0
      %v1220 = vadd.f32 0.0, %v1219
      %v1221 = vpop.f32.mrb[0].mxu0
      %1222 = vmatprep.mubr.f32.mxu0 0.0
      %1223 = vmatmul.mubr.f32.gmra.mrb[0].mxu0 %v1015
      %v1224 = vpop.f32.mrb[0].mxu0
      %v1225 = vadd.f32 0.0, %v1224
      %v1226 = vpop.f32.mrb[0].mxu0
      %1227 = vmatprep.mubr.f32.mxu0 0.0
      %1228 = vmatmul.mubr.f32.gmra.mrb[0].mxu0 %v1018
      %v1229 = vpop.f32.mrb[0].mxu0
      %v1230 = vadd.f32 0.0, %v1229
      %v1231 = vpop.f32.mrb[0].mxu0
      %1232 = vmatprep.mubr.f32.mxu0 0.0
      %1233 = vmatmul.mubr.f32.gmra.mrb[0].mxu0 %v1021
      %v1234 = vpop.f32.mrb[0].mxu0
      %v1235 = vadd.f32 0.0, %v1234
      %v1236 = vpop.f32.mrb[0].mxu0
      %1237 = vmatprep.mubr.f32.mxu0 0.0
      %1238 = vmatmul.mubr.f32.gmra.mrb[0].mxu0 %v1024
      %v1239 = vpop.f32.mrb[0].mxu0
      %v1240 = vadd.f32 0.0, %v1239
      %v1241 = vpop.f32.mrb[0].mxu0
      %1242 = vmatprep.mubr.f32.mxu0 0.0
      %1243 = vmatmul.mubr.f32.gmra.mrb[0].mxu0 %v1027
      %v1244 = vpop.f32.mrb[0].mxu0
      %v1245 = vadd.f32 0.0, %v1244
      %v1246 = vpop.f32.mrb[0].mxu0
      %1247 = vmatprep.mubr.f32.mxu0 0.0
      %1248 = vmatmul.mubr.f32.gmra.mrb[0].mxu0 %v1030
      %v1249 = vpop.f32.mrb[0].mxu0
      %v1250 = vadd.f32 0.0, %v1249
      %v1251 = vpop.f32.mrb[0].mxu0
      %1252 = vmatprep.mubr.f32.mxu0 0.0
      %1253 = vmatmul.mubr.f32.gmra.mrb[0].mxu0 %v1033
      %v1254 = vpop.f32.mrb[0].mxu0
      %v1255 = vadd.f32 0.0, %v1254
      %v1256 = vpop.f32.mrb[0].mxu0
      %1257 = vmatprep.mubr.f32.mxu0 0.0
      %1258 = vmatmul.mubr.f32.gmra.mrb[0].mxu0 %v1036
      %v1259 = vpop.f32.mrb[0].mxu0
      %v1260 = vadd.f32 0.0, %v1259
      %v1261 = vpop.f32.mrb[0].mxu0
      %1262 = vdwg.mxu0
      %v1263 = vadd.f32 %v750, %v1105
      %v1264 = vadd.f32 %v755, %v1110
      %v1265 = vadd.f32 %v760, %v1115
      %v1266 = vadd.f32 %v765, %v1120
      %v1267 = vadd.f32 %v770, %v1125
      %v1268 = vadd.f32 %v775, %v1130
      %v1269 = vadd.f32 %v780, %v1135
      %v1270 = vadd.f32 %v785, %v1140
      %v1271 = vadd.f32 %v790, %v1145
      %v1272 = vadd.f32 %v795, %v1150
      %v1273 = vadd.f32 %v800, %v1155
      %v1274 = vadd.f32 %v805, %v1160
      %v1275 = vadd.f32 %v810, %v1165
      %v1276 = vadd.f32 %v815, %v1170
      %v1277 = vadd.f32 %v820, %v1175
      %v1278 = vadd.f32 %v825, %v1180
      %v1279 = vadd.f32 %v830, %v1185
      %v1280 = vadd.f32 %v835, %v1190
      %v1281 = vadd.f32 %v840, %v1195
      %v1282 = vadd.f32 %v845, %v1200
      %v1283 = vadd.f32 %v850, %v1205
      %v1284 = vadd.f32 %v855, %v1210
      %v1285 = vadd.f32 %v860, %v1215
      %v1286 = vadd.f32 %v865, %v1220
      %v1287 = vadd.f32 %v870, %v1225
      %v1288 = vadd.f32 %v875, %v1230
      %v1289 = vadd.f32 %v880, %v1235
      %v1290 = vadd.f32 %v885, %v1240
      %v1291 = vadd.f32 %v890, %v1245
      %v1292 = vadd.f32 %v895, %v1250
      %v1293 = vadd.f32 %v900, %v1255
      %v1294 = vadd.f32 %v905, %v1260
      %v1295 = vld [vmem:[%s192 + $0x3] sm:$0xff]
      %v1296 = vld [vmem:[%s192 + $0xb] sm:$0xff]
      %v1297 = vld [vmem:[%s192 + $0x1b] sm:$0xff]
      %v1298 = vld [vmem:[%s192 + $0x23] sm:$0xff]
      %v1299 = vld [vmem:[%s192 + $0x33] sm:$0xff]
      %v1300 = vld [vmem:[%s192 + $0x3b] sm:$0xff]
      %v1301 = vld [vmem:[%s192 + $0x4b] sm:$0xff]
      %v1302 = vld [vmem:[%s192 + $0x53] sm:$0xff]
      %v1303 = vld [vmem:[%s192 + $0x63] sm:$0xff]
      %v1304 = vld [vmem:[%s192 + $0x6b] sm:$0xff]
      %v1305 = vld [vmem:[%s192 + $0x7b] sm:$0xff]
      %v1306 = vld [vmem:[%s192 + $0x83] sm:$0xff]
      %v1307 = vld [vmem:[%s192 + $0x93] sm:$0xff]
      %v1308 = vld [vmem:[%s192 + $0x9b] sm:$0xff]
      %v1309 = vld [vmem:[%s192 + $0xab] sm:$0xff]
      %v1310 = vld [vmem:[%s192 + $0xb3] sm:$0xff]
      %v1311 = vld [vmem:[%s192 + $0xc3] sm:$0xff]
      %v1312 = vld [vmem:[%s192 + $0xcb] sm:$0xff]
      %v1313 = vld [vmem:[%s192 + $0xdb] sm:$0xff]
      %v1314 = vld [vmem:[%s192 + $0xe3] sm:$0xff]
      %v1315 = vld [vmem:[%s192 + $0xf3] sm:$0xff]
      %v1316 = vld [vmem:[%s192 + $0xfb] sm:$0xff]
      %v1317 = vld [vmem:[%s192 + $0x10b] sm:$0xff]
      %v1318 = vld [vmem:[%s192 + $0x113] sm:$0xff]
      %v1319 = vld [vmem:[%s192 + $0x123] sm:$0xff]
      %v1320 = vld [vmem:[%s192 + $0x12b] sm:$0xff]
      %v1321 = vld [vmem:[%s192 + $0x13b] sm:$0xff]
      %v1322 = vld [vmem:[%s192 + $0x143] sm:$0xff]
      %v1323 = vld [vmem:[%s192 + $0x153] sm:$0xff]
      %v1324 = vld [vmem:[%s192 + $0x15b] sm:$0xff]
      %v1325 = vld [vmem:[%s192 + $0x16b] sm:$0xff]
      %v1326 = vld [vmem:[%s192 + $0x173] sm:$0xff]
      %s1327 = scalar_lea.vmem %s1, 24
      %v1328 = vld [vmem:[%s1327] sm:$0xff]
      %v1330 = vsel %vm265, %v1295, 0
      %v1333 = vsel %vm265, %v1296, 0
      %v1336 = vsel %vm265, %v1297, 0
      %v1339 = vsel %vm265, %v1298, 0
      %v1342 = vsel %vm265, %v1299, 0
      %v1345 = vsel %vm265, %v1300, 0
      %v1348 = vsel %vm265, %v1301, 0
      %v1351 = vsel %vm265, %v1302, 0
      %v1354 = vsel %vm265, %v1303, 0
      %v1357 = vsel %vm265, %v1304, 0
      %v1360 = vsel %vm265, %v1305, 0
      %v1363 = vsel %vm265, %v1306, 0
      %v1366 = vsel %vm265, %v1307, 0
      %v1369 = vsel %vm265, %v1308, 0
      %v1372 = vsel %vm265, %v1309, 0
      %v1375 = vsel %vm265, %v1310, 0
      %v1378 = vsel %vm265, %v1311, 0
      %v1381 = vsel %vm265, %v1312, 0
      %v1384 = vsel %vm265, %v1313, 0
      %v1387 = vsel %vm265, %v1314, 0
      %v1390 = vsel %vm265, %v1315, 0
      %v1393 = vsel %vm265, %v1316, 0
      %v1396 = vsel %vm265, %v1317, 0
      %v1399 = vsel %vm265, %v1318, 0
      %v1402 = vsel %vm265, %v1319, 0
      %v1405 = vsel %vm265, %v1320, 0
      %v1408 = vsel %vm265, %v1321, 0
      %v1411 = vsel %vm265, %v1322, 0
      %v1414 = vsel %vm265, %v1323, 0
      %v1417 = vsel %vm265, %v1324, 0
      %v1420 = vsel %vm265, %v1325, 0
      %v1423 = vsel %vm265, %v1326, 0
      %1425 = vmatprep.subr.mxu0 0.0
      %1426 = vmatpush1.msra.mxu0 %v1328
      %1427 = vmatprep.subr.mxu0 0.0
      %1428 = vmatpush1.msra.mxu0 0.0
      %1429 = vmatprep.subr.mxu0 0.0
      %1430 = vmatpush1.msra.mxu0 0.0
      %1431 = vmatprep.subr.mxu0 0.0
      %1432 = vmatpush1.msra.mxu0 0.0
      %1433 = vmatprep.subr.mxu0 0.0
      %1434 = vmatpush1.msra.mxu0 0.0
      %1435 = vmatprep.subr.mxu0 0.0
      %1436 = vmatpush1.msra.mxu0 0.0
      %1437 = vmatprep.subr.mxu0 0.0
      %1438 = vmatpush1.msra.mxu0 0.0
      %1439 = vmatprep.subr.mxu0 0.0
      %1440 = vmatpush1.msra.mxu0 0.0
      %1441 = vmatprep.subr.mxu0 0.0
      %1442 = vmatpush1.msra.mxu0 0.0
      %1443 = vmatprep.subr.mxu0 0.0
      %1444 = vmatpush1.msra.mxu0 0.0
      %1445 = vmatprep.subr.mxu0 0.0
      %1446 = vmatpush1.msra.mxu0 0.0
      %1447 = vmatprep.subr.mxu0 0.0
      %1448 = vmatpush1.msra.mxu0 0.0
      %1449 = vmatprep.subr.mxu0 0.0
      %1450 = vmatpush1.msra.mxu0 0.0
      %1451 = vmatprep.subr.mxu0 0.0
      %1452 = vmatpush1.msra.mxu0 0.0
      %1453 = vmatprep.subr.mxu0 0.0
      %1454 = vmatpush1.msra.mxu0 0.0
      %1455 = vmatprep.subr.mxu0 0.0
      %1456 = vmatpush1.msra.mxu0 0.0
      %1457 = vmatprep.subr.mxu0 0.0
      %1458 = vmatpush1.msra.mxu0 0.0
      %1459 = vmatprep.subr.mxu0 0.0
      %1460 = vmatpush1.msra.mxu0 0.0
      %1461 = vmatprep.subr.mxu0 0.0
      %1462 = vmatpush1.msra.mxu0 0.0
      %1463 = vmatprep.subr.mxu0 0.0
      %1464 = vmatpush1.msra.mxu0 0.0
      %1465 = vmatprep.subr.mxu0 0.0
      %1466 = vmatpush1.msra.mxu0 0.0
      %1467 = vmatprep.subr.mxu0 0.0
      %1468 = vmatpush1.msra.mxu0 0.0
      %1469 = vmatprep.subr.mxu0 0.0
      %1470 = vmatpush1.msra.mxu0 0.0
      %1471 = vmatprep.subr.mxu0 0.0
      %1472 = vmatpush1.msra.mxu0 0.0
      %1473 = vmatprep.subr.mxu0 0.0
      %1474 = vmatpush1.msra.mxu0 0.0
      %1475 = vmatprep.subr.mxu0 0.0
      %1476 = vmatpush1.msra.mxu0 0.0
      %1477 = vmatprep.subr.mxu0 0.0
      %1478 = vmatpush1.msra.mxu0 0.0
      %1479 = vmatprep.subr.mxu0 0.0
      %1480 = vmatpush1.msra.mxu0 0.0
      %1481 = vmatprep.subr.mxu0 0.0
      %1482 = vmatpush1.msra.mxu0 0.0
      %1483 = vmatprep.subr.mxu0 0.0
      %1484 = vmatpush1.msra.mxu0 0.0
      %1485 = vmatprep.subr.mxu0 0.0
      %1486 = vmatpush1.msra.mxu0 0.0
      %1487 = vmatprep.subr.mxu0 0.0
      %1488 = vmatpush1.msra.mxu0 0.0
      %1489 = vmatprep.mubr.f32.mxu0 0.0
      %1490 = vmatmul.mubr.f32.gmra.mrb[0].mxu0 %v1330
      %v1491 = vpop.f32.mrb[0].mxu0
      %v1492 = vadd.f32 0.0, %v1491
      %v1493 = vpop.f32.mrb[0].mxu0
      %1494 = vmatprep.mubr.f32.mxu0 0.0
      %1495 = vmatmul.mubr.f32.gmra.mrb[0].mxu0 %v1333
      %v1496 = vpop.f32.mrb[0].mxu0
      %v1497 = vadd.f32 0.0, %v1496
      %v1498 = vpop.f32.mrb[0].mxu0
      %1499 = vmatprep.mubr.f32.mxu0 0.0
      %1500 = vmatmul.mubr.f32.gmra.mrb[0].mxu0 %v1336
      %v1501 = vpop.f32.mrb[0].mxu0
      %v1502 = vadd.f32 0.0, %v1501
      %v1503 = vpop.f32.mrb[0].mxu0
      %1504 = vmatprep.mubr.f32.mxu0 0.0
      %1505 = vmatmul.mubr.f32.gmra.mrb[0].mxu0 %v1339
      %v1506 = vpop.f32.mrb[0].mxu0
      %v1507 = vadd.f32 0.0, %v1506
      %v1508 = vpop.f32.mrb[0].mxu0
      %1509 = vmatprep.mubr.f32.mxu0 0.0
      %1510 = vmatmul.mubr.f32.gmra.mrb[0].mxu0 %v1342
      %v1511 = vpop.f32.mrb[0].mxu0
      %v1512 = vadd.f32 0.0, %v1511
      %v1513 = vpop.f32.mrb[0].mxu0
      %1514 = vmatprep.mubr.f32.mxu0 0.0
      %1515 = vmatmul.mubr.f32.gmra.mrb[0].mxu0 %v1345
      %v1516 = vpop.f32.mrb[0].mxu0
      %v1517 = vadd.f32 0.0, %v1516
      %v1518 = vpop.f32.mrb[0].mxu0
      %1519 = vmatprep.mubr.f32.mxu0 0.0
      %1520 = vmatmul.mubr.f32.gmra.mrb[0].mxu0 %v1348
      %v1521 = vpop.f32.mrb[0].mxu0
      %v1522 = vadd.f32 0.0, %v1521
      %v1523 = vpop.f32.mrb[0].mxu0
      %1524 = vmatprep.mubr.f32.mxu0 0.0
      %1525 = vmatmul.mubr.f32.gmra.mrb[0].mxu0 %v1351
      %v1526 = vpop.f32.mrb[0].mxu0
      %v1527 = vadd.f32 0.0, %v1526
      %v1528 = vpop.f32.mrb[0].mxu0
      %1529 = vmatprep.mubr.f32.mxu0 0.0
      %1530 = vmatmul.mubr.f32.gmra.mrb[0].mxu0 %v1354
      %v1531 = vpop.f32.mrb[0].mxu0
      %v1532 = vadd.f32 0.0, %v1531
      %v1533 = vpop.f32.mrb[0].mxu0
      %1534 = vmatprep.mubr.f32.mxu0 0.0
      %1535 = vmatmul.mubr.f32.gmra.mrb[0].mxu0 %v1357
      %v1536 = vpop.f32.mrb[0].mxu0
      %v1537 = vadd.f32 0.0, %v1536
      %v1538 = vpop.f32.mrb[0].mxu0
      %1539 = vmatprep.mubr.f32.mxu0 0.0
      %1540 = vmatmul.mubr.f32.gmra.mrb[0].mxu0 %v1360
      %v1541 = vpop.f32.mrb[0].mxu0
      %v1542 = vadd.f32 0.0, %v1541
      %v1543 = vpop.f32.mrb[0].mxu0
      %1544 = vmatprep.mubr.f32.mxu0 0.0
      %1545 = vmatmul.mubr.f32.gmra.mrb[0].mxu0 %v1363
      %v1546 = vpop.f32.mrb[0].mxu0
      %v1547 = vadd.f32 0.0, %v1546
      %v1548 = vpop.f32.mrb[0].mxu0
      %1549 = vmatprep.mubr.f32.mxu0 0.0
      %1550 = vmatmul.mubr.f32.gmra.mrb[0].mxu0 %v1366
      %v1551 = vpop.f32.mrb[0].mxu0
      %v1552 = vadd.f32 0.0, %v1551
      %v1553 = vpop.f32.mrb[0].mxu0
      %1554 = vmatprep.mubr.f32.mxu0 0.0
      %1555 = vmatmul.mubr.f32.gmra.mrb[0].mxu0 %v1369
      %v1556 = vpop.f32.mrb[0].mxu0
      %v1557 = vadd.f32 0.0, %v1556
      %v1558 = vpop.f32.mrb[0].mxu0
      %1559 = vmatprep.mubr.f32.mxu0 0.0
      %1560 = vmatmul.mubr.f32.gmra.mrb[0].mxu0 %v1372
      %v1561 = vpop.f32.mrb[0].mxu0
      %v1562 = vadd.f32 0.0, %v1561
      %v1563 = vpop.f32.mrb[0].mxu0
      %1564 = vmatprep.mubr.f32.mxu0 0.0
      %1565 = vmatmul.mubr.f32.gmra.mrb[0].mxu0 %v1375
      %v1566 = vpop.f32.mrb[0].mxu0
      %v1567 = vadd.f32 0.0, %v1566
      %v1568 = vpop.f32.mrb[0].mxu0
      %1569 = vmatprep.mubr.f32.mxu0 0.0
      %1570 = vmatmul.mubr.f32.gmra.mrb[0].mxu0 %v1378
      %v1571 = vpop.f32.mrb[0].mxu0
      %v1572 = vadd.f32 0.0, %v1571
      %v1573 = vpop.f32.mrb[0].mxu0
      %1574 = vmatprep.mubr.f32.mxu0 0.0
      %1575 = vmatmul.mubr.f32.gmra.mrb[0].mxu0 %v1381
      %v1576 = vpop.f32.mrb[0].mxu0
      %v1577 = vadd.f32 0.0, %v1576
      %v1578 = vpop.f32.mrb[0].mxu0
      %1579 = vmatprep.mubr.f32.mxu0 0.0
      %1580 = vmatmul.mubr.f32.gmra.mrb[0].mxu0 %v1384
      %v1581 = vpop.f32.mrb[0].mxu0
      %v1582 = vadd.f32 0.0, %v1581
      %v1583 = vpop.f32.mrb[0].mxu0
      %1584 = vmatprep.mubr.f32.mxu0 0.0
      %1585 = vmatmul.mubr.f32.gmra.mrb[0].mxu0 %v1387
      %v1586 = vpop.f32.mrb[0].mxu0
      %v1587 = vadd.f32 0.0, %v1586
      %v1588 = vpop.f32.mrb[0].mxu0
      %1589 = vmatprep.mubr.f32.mxu0 0.0
      %1590 = vmatmul.mubr.f32.gmra.mrb[0].mxu0 %v1390
      %v1591 = vpop.f32.mrb[0].mxu0
      %v1592 = vadd.f32 0.0, %v1591
      %v1593 = vpop.f32.mrb[0].mxu0
      %1594 = vmatprep.mubr.f32.mxu0 0.0
      %1595 = vmatmul.mubr.f32.gmra.mrb[0].mxu0 %v1393
      %v1596 = vpop.f32.mrb[0].mxu0
      %v1597 = vadd.f32 0.0, %v1596
      %v1598 = vpop.f32.mrb[0].mxu0
      %1599 = vmatprep.mubr.f32.mxu0 0.0
      %1600 = vmatmul.mubr.f32.gmra.mrb[0].mxu0 %v1396
      %v1601 = vpop.f32.mrb[0].mxu0
      %v1602 = vadd.f32 0.0, %v1601
      %v1603 = vpop.f32.mrb[0].mxu0
      %1604 = vmatprep.mubr.f32.mxu0 0.0
      %1605 = vmatmul.mubr.f32.gmra.mrb[0].mxu0 %v1399
      %v1606 = vpop.f32.mrb[0].mxu0
      %v1607 = vadd.f32 0.0, %v1606
      %v1608 = vpop.f32.mrb[0].mxu0
      %1609 = vmatprep.mubr.f32.mxu0 0.0
      %1610 = vmatmul.mubr.f32.gmra.mrb[0].mxu0 %v1402
      %v1611 = vpop.f32.mrb[0].mxu0
      %v1612 = vadd.f32 0.0, %v1611
      %v1613 = vpop.f32.mrb[0].mxu0
      %1614 = vmatprep.mubr.f32.mxu0 0.0
      %1615 = vmatmul.mubr.f32.gmra.mrb[0].mxu0 %v1405
      %v1616 = vpop.f32.mrb[0].mxu0
      %v1617 = vadd.f32 0.0, %v1616
      %v1618 = vpop.f32.mrb[0].mxu0
      %1619 = vmatprep.mubr.f32.mxu0 0.0
      %1620 = vmatmul.mubr.f32.gmra.mrb[0].mxu0 %v1408
      %v1621 = vpop.f32.mrb[0].mxu0
      %v1622 = vadd.f32 0.0, %v1621
      %v1623 = vpop.f32.mrb[0].mxu0
      %1624 = vmatprep.mubr.f32.mxu0 0.0
      %1625 = vmatmul.mubr.f32.gmra.mrb[0].mxu0 %v1411
      %v1626 = vpop.f32.mrb[0].mxu0
      %v1627 = vadd.f32 0.0, %v1626
      %v1628 = vpop.f32.mrb[0].mxu0
      %1629 = vmatprep.mubr.f32.mxu0 0.0
      %1630 = vmatmul.mubr.f32.gmra.mrb[0].mxu0 %v1414
      %v1631 = vpop.f32.mrb[0].mxu0
      %v1632 = vadd.f32 0.0, %v1631
      %v1633 = vpop.f32.mrb[0].mxu0
      %1634 = vmatprep.mubr.f32.mxu0 0.0
      %1635 = vmatmul.mubr.f32.gmra.mrb[0].mxu0 %v1417
      %v1636 = vpop.f32.mrb[0].mxu0
      %v1637 = vadd.f32 0.0, %v1636
      %v1638 = vpop.f32.mrb[0].mxu0
      %1639 = vmatprep.mubr.f32.mxu0 0.0
      %1640 = vmatmul.mubr.f32.gmra.mrb[0].mxu0 %v1420
      %v1641 = vpop.f32.mrb[0].mxu0
      %v1642 = vadd.f32 0.0, %v1641
      %v1643 = vpop.f32.mrb[0].mxu0
      %1644 = vmatprep.mubr.f32.mxu0 0.0
      %1645 = vmatmul.mubr.f32.gmra.mrb[0].mxu0 %v1423
      %v1646 = vpop.f32.mrb[0].mxu0
      %v1647 = vadd.f32 0.0, %v1646
      %v1648 = vpop.f32.mrb[0].mxu0
      %1649 = vdwg.mxu0
      %v1650 = vadd.f32 %v1263, %v1492
      %v1651 = vadd.f32 %v1264, %v1497
      %v1652 = vadd.f32 %v1265, %v1502
      %v1653 = vadd.f32 %v1266, %v1507
      %v1654 = vadd.f32 %v1267, %v1512
      %v1655 = vadd.f32 %v1268, %v1517
      %v1656 = vadd.f32 %v1269, %v1522
      %v1657 = vadd.f32 %v1270, %v1527
      %v1658 = vadd.f32 %v1271, %v1532
      %v1659 = vadd.f32 %v1272, %v1537
      %v1660 = vadd.f32 %v1273, %v1542
      %v1661 = vadd.f32 %v1274, %v1547
      %v1662 = vadd.f32 %v1275, %v1552
      %v1663 = vadd.f32 %v1276, %v1557
      %v1664 = vadd.f32 %v1277, %v1562
      %v1665 = vadd.f32 %v1278, %v1567
      %v1666 = vadd.f32 %v1279, %v1572
      %v1667 = vadd.f32 %v1280, %v1577
      %v1668 = vadd.f32 %v1281, %v1582
      %v1669 = vadd.f32 %v1282, %v1587
      %v1670 = vadd.f32 %v1283, %v1592
      %v1671 = vadd.f32 %v1284, %v1597
      %v1672 = vadd.f32 %v1285, %v1602
      %v1673 = vadd.f32 %v1286, %v1607
      %v1674 = vadd.f32 %v1287, %v1612
      %v1675 = vadd.f32 %v1288, %v1617
      %v1676 = vadd.f32 %v1289, %v1622
      %v1677 = vadd.f32 %v1290, %v1627
      %v1678 = vadd.f32 %v1291, %v1632
      %v1679 = vadd.f32 %v1292, %v1637
      %v1680 = vadd.f32 %v1293, %v1642
      %v1681 = vadd.f32 %v1294, %v1647
      %s1682 = scalar_lea.vmem %s192, 24
      %v1683 = vld [vmem:[%s1682] sm:$0xff]
      %v1684 = vld [vmem:[%s1682 + $0x8] sm:$0xff]
      %v1685 = vld [vmem:[%s1682 + $0x18] sm:$0xff]
      %v1686 = vld [vmem:[%s1682 + $0x20] sm:$0xff]
      %v1687 = vld [vmem:[%s1682 + $0x30] sm:$0xff]
      %v1688 = vld [vmem:[%s1682 + $0x38] sm:$0xff]
      %v1689 = vld [vmem:[%s1682 + $0x48] sm:$0xff]
      %v1690 = vld [vmem:[%s1682 + $0x50] sm:$0xff]
      %v1691 = vld [vmem:[%s1682 + $0x60] sm:$0xff]
      %v1692 = vld [vmem:[%s1682 + $0x68] sm:$0xff]
      %v1693 = vld [vmem:[%s1682 + $0x78] sm:$0xff]
      %v1694 = vld [vmem:[%s1682 + $0x80] sm:$0xff]
      %v1695 = vld [vmem:[%s1682 + $0x90] sm:$0xff]
      %v1696 = vld [vmem:[%s1682 + $0x98] sm:$0xff]
      %v1697 = vld [vmem:[%s1682 + $0xa8] sm:$0xff]
      %v1698 = vld [vmem:[%s1682 + $0xb0] sm:$0xff]
      %v1699 = vld [vmem:[%s1682 + $0xc0] sm:$0xff]
      %v1700 = vld [vmem:[%s1682 + $0xc8] sm:$0xff]
      %v1701 = vld [vmem:[%s1682 + $0xd8] sm:$0xff]
      %v1702 = vld [vmem:[%s1682 + $0xe0] sm:$0xff]
      %v1703 = vld [vmem:[%s1682 + $0xf0] sm:$0xff]
      %v1704 = vld [vmem:[%s1682 + $0xf8] sm:$0xff]
      %v1705 = vld [vmem:[%s1682 + $0x108] sm:$0xff]
      %v1706 = vld [vmem:[%s1682 + $0x110] sm:$0xff]
      %v1707 = vld [vmem:[%s1682 + $0x120] sm:$0xff]
      %v1708 = vld [vmem:[%s1682 + $0x128] sm:$0xff]
      %v1709 = vld [vmem:[%s1682 + $0x138] sm:$0xff]
      %v1710 = vld [vmem:[%s1682 + $0x140] sm:$0xff]
      %v1711 = vld [vmem:[%s1682 + $0x150] sm:$0xff]
      %v1712 = vld [vmem:[%s1682 + $0x158] sm:$0xff]
      %v1713 = vld [vmem:[%s1682 + $0x168] sm:$0xff]
      %v1714 = vld [vmem:[%s1682 + $0x170] sm:$0xff]
      %s1715 = scalar_lea.vmem %s1, 32
      %v1716 = vld [vmem:[%s1715] sm:$0xff]
      %v1718 = vsel %vm265, %v1683, 0
      %v1721 = vsel %vm265, %v1684, 0
      %v1724 = vsel %vm265, %v1685, 0
      %v1727 = vsel %vm265, %v1686, 0
      %v1730 = vsel %vm265, %v1687, 0
      %v1733 = vsel %vm265, %v1688, 0
      %v1736 = vsel %vm265, %v1689, 0
      %v1739 = vsel %vm265, %v1690, 0
      %v1742 = vsel %vm265, %v1691, 0
      %v1745 = vsel %vm265, %v1692, 0
      %v1748 = vsel %vm265, %v1693, 0
      %v1751 = vsel %vm265, %v1694, 0
      %v1754 = vsel %vm265, %v1695, 0
      %v1757 = vsel %vm265, %v1696, 0
      %v1760 = vsel %vm265, %v1697, 0
      %v1763 = vsel %vm265, %v1698, 0
      %v1766 = vsel %vm265, %v1699, 0
      %v1769 = vsel %vm265, %v1700, 0
      %v1772 = vsel %vm265, %v1701, 0
      %v1775 = vsel %vm265, %v1702, 0
      %v1778 = vsel %vm265, %v1703, 0
      %v1781 = vsel %vm265, %v1704, 0
      %v1784 = vsel %vm265, %v1705, 0
      %v1787 = vsel %vm265, %v1706, 0
      %v1790 = vsel %vm265, %v1707, 0
      %v1793 = vsel %vm265, %v1708, 0
      %v1796 = vsel %vm265, %v1709, 0
      %v1799 = vsel %vm265, %v1710, 0
      %v1802 = vsel %vm265, %v1711, 0
      %v1805 = vsel %vm265, %v1712, 0
      %v1808 = vsel %vm265, %v1713, 0
      %v1811 = vsel %vm265, %v1714, 0
      %1813 = vmatprep.subr.mxu0 0.0
      %1814 = vmatpush1.msra.mxu0 %v1716
      %1815 = vmatprep.subr.mxu0 0.0
      %1816 = vmatpush1.msra.mxu0 0.0
      %1817 = vmatprep.subr.mxu0 0.0
      %1818 = vmatpush1.msra.mxu0 0.0
      %1819 = vmatprep.subr.mxu0 0.0
      %1820 = vmatpush1.msra.mxu0 0.0
      %1821 = vmatprep.subr.mxu0 0.0
      %1822 = vmatpush1.msra.mxu0 0.0
      %1823 = vmatprep.subr.mxu0 0.0
      %1824 = vmatpush1.msra.mxu0 0.0
      %1825 = vmatprep.subr.mxu0 0.0
      %1826 = vmatpush1.msra.mxu0 0.0
      %1827 = vmatprep.subr.mxu0 0.0
      %1828 = vmatpush1.msra.mxu0 0.0
      %1829 = vmatprep.subr.mxu0 0.0
      %1830 = vmatpush1.msra.mxu0 0.0
      %1831 = vmatprep.subr.mxu0 0.0
      %1832 = vmatpush1.msra.mxu0 0.0
      %1833 = vmatprep.subr.mxu0 0.0
      %1834 = vmatpush1.msra.mxu0 0.0
      %1835 = vmatprep.subr.mxu0 0.0
      %1836 = vmatpush1.msra.mxu0 0.0
      %1837 = vmatprep.subr.mxu0 0.0
      %1838 = vmatpush1.msra.mxu0 0.0
      %1839 = vmatprep.subr.mxu0 0.0
      %1840 = vmatpush1.msra.mxu0 0.0
      %1841 = vmatprep.subr.mxu0 0.0
      %1842 = vmatpush1.msra.mxu0 0.0
      %1843 = vmatprep.subr.mxu0 0.0
      %1844 = vmatpush1.msra.mxu0 0.0
      %1845 = vmatprep.subr.mxu0 0.0
      %1846 = vmatpush1.msra.mxu0 0.0
      %1847 = vmatprep.subr.mxu0 0.0
      %1848 = vmatpush1.msra.mxu0 0.0
      %1849 = vmatprep.subr.mxu0 0.0
      %1850 = vmatpush1.msra.mxu0 0.0
      %1851 = vmatprep.subr.mxu0 0.0
      %1852 = vmatpush1.msra.mxu0 0.0
      %1853 = vmatprep.subr.mxu0 0.0
      %1854 = vmatpush1.msra.mxu0 0.0
      %1855 = vmatprep.subr.mxu0 0.0
      %1856 = vmatpush1.msra.mxu0 0.0
      %1857 = vmatprep.subr.mxu0 0.0
      %1858 = vmatpush1.msra.mxu0 0.0
      %1859 = vmatprep.subr.mxu0 0.0
      %1860 = vmatpush1.msra.mxu0 0.0
      %1861 = vmatprep.subr.mxu0 0.0
      %1862 = vmatpush1.msra.mxu0 0.0
      %1863 = vmatprep.subr.mxu0 0.0
      %1864 = vmatpush1.msra.mxu0 0.0
      %1865 = vmatprep.subr.mxu0 0.0
      %1866 = vmatpush1.msra.mxu0 0.0
      %1867 = vmatprep.subr.mxu0 0.0
      %1868 = vmatpush1.msra.mxu0 0.0
      %1869 = vmatprep.subr.mxu0 0.0
      %1870 = vmatpush1.msra.mxu0 0.0
      %1871 = vmatprep.subr.mxu0 0.0
      %1872 = vmatpush1.msra.mxu0 0.0
      %1873 = vmatprep.subr.mxu0 0.0
      %1874 = vmatpush1.msra.mxu0 0.0
      %1875 = vmatprep.subr.mxu0 0.0
      %1876 = vmatpush1.msra.mxu0 0.0
      %1877 = vmatprep.mubr.f32.mxu0 0.0
      %1878 = vmatmul.mubr.f32.gmra.mrb[0].mxu0 %v1718
      %v1879 = vpop.f32.mrb[0].mxu0
      %v1880 = vadd.f32 0.0, %v1879
      %v1881 = vpop.f32.mrb[0].mxu0
      %1882 = vmatprep.mubr.f32.mxu0 0.0
      %1883 = vmatmul.mubr.f32.gmra.mrb[0].mxu0 %v1721
      %v1884 = vpop.f32.mrb[0].mxu0
      %v1885 = vadd.f32 0.0, %v1884
      %v1886 = vpop.f32.mrb[0].mxu0
      %1887 = vmatprep.mubr.f32.mxu0 0.0
      %1888 = vmatmul.mubr.f32.gmra.mrb[0].mxu0 %v1724
      %v1889 = vpop.f32.mrb[0].mxu0
      %v1890 = vadd.f32 0.0, %v1889
      %v1891 = vpop.f32.mrb[0].mxu0
      %1892 = vmatprep.mubr.f32.mxu0 0.0
      %1893 = vmatmul.mubr.f32.gmra.mrb[0].mxu0 %v1727
      %v1894 = vpop.f32.mrb[0].mxu0
      %v1895 = vadd.f32 0.0, %v1894
      %v1896 = vpop.f32.mrb[0].mxu0
      %1897 = vmatprep.mubr.f32.mxu0 0.0
      %1898 = vmatmul.mubr.f32.gmra.mrb[0].mxu0 %v1730
      %v1899 = vpop.f32.mrb[0].mxu0
      %v1900 = vadd.f32 0.0, %v1899
      %v1901 = vpop.f32.mrb[0].mxu0
      %1902 = vmatprep.mubr.f32.mxu0 0.0
      %1903 = vmatmul.mubr.f32.gmra.mrb[0].mxu0 %v1733
      %v1904 = vpop.f32.mrb[0].mxu0
      %v1905 = vadd.f32 0.0, %v1904
      %v1906 = vpop.f32.mrb[0].mxu0
      %1907 = vmatprep.mubr.f32.mxu0 0.0
      %1908 = vmatmul.mubr.f32.gmra.mrb[0].mxu0 %v1736
      %v1909 = vpop.f32.mrb[0].mxu0
      %v1910 = vadd.f32 0.0, %v1909
      %v1911 = vpop.f32.mrb[0].mxu0
      %1912 = vmatprep.mubr.f32.mxu0 0.0
      %1913 = vmatmul.mubr.f32.gmra.mrb[0].mxu0 %v1739
      %v1914 = vpop.f32.mrb[0].mxu0
      %v1915 = vadd.f32 0.0, %v1914
      %v1916 = vpop.f32.mrb[0].mxu0
      %1917 = vmatprep.mubr.f32.mxu0 0.0
      %1918 = vmatmul.mubr.f32.gmra.mrb[0].mxu0 %v1742
      %v1919 = vpop.f32.mrb[0].mxu0
      %v1920 = vadd.f32 0.0, %v1919
      %v1921 = vpop.f32.mrb[0].mxu0
      %1922 = vmatprep.mubr.f32.mxu0 0.0
      %1923 = vmatmul.mubr.f32.gmra.mrb[0].mxu0 %v1745
      %v1924 = vpop.f32.mrb[0].mxu0
      %v1925 = vadd.f32 0.0, %v1924
      %v1926 = vpop.f32.mrb[0].mxu0
      %1927 = vmatprep.mubr.f32.mxu0 0.0
      %1928 = vmatmul.mubr.f32.gmra.mrb[0].mxu0 %v1748
      %v1929 = vpop.f32.mrb[0].mxu0
      %v1930 = vadd.f32 0.0, %v1929
      %v1931 = vpop.f32.mrb[0].mxu0
      %1932 = vmatprep.mubr.f32.mxu0 0.0
      %1933 = vmatmul.mubr.f32.gmra.mrb[0].mxu0 %v1751
      %v1934 = vpop.f32.mrb[0].mxu0
      %v1935 = vadd.f32 0.0, %v1934
      %v1936 = vpop.f32.mrb[0].mxu0
      %1937 = vmatprep.mubr.f32.mxu0 0.0
      %1938 = vmatmul.mubr.f32.gmra.mrb[0].mxu0 %v1754
      %v1939 = vpop.f32.mrb[0].mxu0
      %v1940 = vadd.f32 0.0, %v1939
      %v1941 = vpop.f32.mrb[0].mxu0
      %1942 = vmatprep.mubr.f32.mxu0 0.0
      %1943 = vmatmul.mubr.f32.gmra.mrb[0].mxu0 %v1757
      %v1944 = vpop.f32.mrb[0].mxu0
      %v1945 = vadd.f32 0.0, %v1944
      %v1946 = vpop.f32.mrb[0].mxu0
      %1947 = vmatprep.mubr.f32.mxu0 0.0
      %1948 = vmatmul.mubr.f32.gmra.mrb[0].mxu0 %v1760
      %v1949 = vpop.f32.mrb[0].mxu0
      %v1950 = vadd.f32 0.0, %v1949
      %v1951 = vpop.f32.mrb[0].mxu0
      %1952 = vmatprep.mubr.f32.mxu0 0.0
      %1953 = vmatmul.mubr.f32.gmra.mrb[0].mxu0 %v1763
      %v1954 = vpop.f32.mrb[0].mxu0
      %v1955 = vadd.f32 0.0, %v1954
      %v1956 = vpop.f32.mrb[0].mxu0
      %1957 = vmatprep.mubr.f32.mxu0 0.0
      %1958 = vmatmul.mubr.f32.gmra.mrb[0].mxu0 %v1766
      %v1959 = vpop.f32.mrb[0].mxu0
      %v1960 = vadd.f32 0.0, %v1959
      %v1961 = vpop.f32.mrb[0].mxu0
      %1962 = vmatprep.mubr.f32.mxu0 0.0
      %1963 = vmatmul.mubr.f32.gmra.mrb[0].mxu0 %v1769
      %v1964 = vpop.f32.mrb[0].mxu0
      %v1965 = vadd.f32 0.0, %v1964
      %v1966 = vpop.f32.mrb[0].mxu0
      %1967 = vmatprep.mubr.f32.mxu0 0.0
      %1968 = vmatmul.mubr.f32.gmra.mrb[0].mxu0 %v1772
      %v1969 = vpop.f32.mrb[0].mxu0
      %v1970 = vadd.f32 0.0, %v1969
      %v1971 = vpop.f32.mrb[0].mxu0
      %1972 = vmatprep.mubr.f32.mxu0 0.0
      %1973 = vmatmul.mubr.f32.gmra.mrb[0].mxu0 %v1775
      %v1974 = vpop.f32.mrb[0].mxu0
      %v1975 = vadd.f32 0.0, %v1974
      %v1976 = vpop.f32.mrb[0].mxu0
      %1977 = vmatprep.mubr.f32.mxu0 0.0
      %1978 = vmatmul.mubr.f32.gmra.mrb[0].mxu0 %v1778
      %v1979 = vpop.f32.mrb[0].mxu0
      %v1980 = vadd.f32 0.0, %v1979
      %v1981 = vpop.f32.mrb[0].mxu0
      %1982 = vmatprep.mubr.f32.mxu0 0.0
      %1983 = vmatmul.mubr.f32.gmra.mrb[0].mxu0 %v1781
      %v1984 = vpop.f32.mrb[0].mxu0
      %v1985 = vadd.f32 0.0, %v1984
      %v1986 = vpop.f32.mrb[0].mxu0
      %1987 = vmatprep.mubr.f32.mxu0 0.0
      %1988 = vmatmul.mubr.f32.gmra.mrb[0].mxu0 %v1784
      %v1989 = vpop.f32.mrb[0].mxu0
      %v1990 = vadd.f32 0.0, %v1989
      %v1991 = vpop.f32.mrb[0].mxu0
      %1992 = vmatprep.mubr.f32.mxu0 0.0
      %1993 = vmatmul.mubr.f32.gmra.mrb[0].mxu0 %v1787
      %v1994 = vpop.f32.mrb[0].mxu0
      %v1995 = vadd.f32 0.0, %v1994
      %v1996 = vpop.f32.mrb[0].mxu0
      %1997 = vmatprep.mubr.f32.mxu0 0.0
      %1998 = vmatmul.mubr.f32.gmra.mrb[0].mxu0 %v1790
      %v1999 = vpop.f32.mrb[0].mxu0
      %v2000 = vadd.f32 0.0, %v1999
      %v2001 = vpop.f32.mrb[0].mxu0
      %2002 = vmatprep.mubr.f32.mxu0 0.0
      %2003 = vmatmul.mubr.f32.gmra.mrb[0].mxu0 %v1793
      %v2004 = vpop.f32.mrb[0].mxu0
      %v2005 = vadd.f32 0.0, %v2004
      %v2006 = vpop.f32.mrb[0].mxu0
      %2007 = vmatprep.mubr.f32.mxu0 0.0
      %2008 = vmatmul.mubr.f32.gmra.mrb[0].mxu0 %v1796
      %v2009 = vpop.f32.mrb[0].mxu0
      %v2010 = vadd.f32 0.0, %v2009
      %v2011 = vpop.f32.mrb[0].mxu0
      %2012 = vmatprep.mubr.f32.mxu0 0.0
      %2013 = vmatmul.mubr.f32.gmra.mrb[0].mxu0 %v1799
      %v2014 = vpop.f32.mrb[0].mxu0
      %v2015 = vadd.f32 0.0, %v2014
      %v2016 = vpop.f32.mrb[0].mxu0
      %2017 = vmatprep.mubr.f32.mxu0 0.0
      %2018 = vmatmul.mubr.f32.gmra.mrb[0].mxu0 %v1802
      %v2019 = vpop.f32.mrb[0].mxu0
      %v2020 = vadd.f32 0.0, %v2019
      %v2021 = vpop.f32.mrb[0].mxu0
      %2022 = vmatprep.mubr.f32.mxu0 0.0
      %2023 = vmatmul.mubr.f32.gmra.mrb[0].mxu0 %v1805
      %v2024 = vpop.f32.mrb[0].mxu0
      %v2025 = vadd.f32 0.0, %v2024
      %v2026 = vpop.f32.mrb[0].mxu0
      %2027 = vmatprep.mubr.f32.mxu0 0.0
      %2028 = vmatmul.mubr.f32.gmra.mrb[0].mxu0 %v1808
      %v2029 = vpop.f32.mrb[0].mxu0
      %v2030 = vadd.f32 0.0, %v2029
      %v2031 = vpop.f32.mrb[0].mxu0
      %2032 = vmatprep.mubr.f32.mxu0 0.0
      %2033 = vmatmul.mubr.f32.gmra.mrb[0].mxu0 %v1811
      %v2034 = vpop.f32.mrb[0].mxu0
      %v2035 = vadd.f32 0.0, %v2034
      %v2036 = vpop.f32.mrb[0].mxu0
      %2037 = vdwg.mxu0
      %v2038 = vadd.f32 %v1650, %v1880
      %v2039 = vadd.f32 %v1651, %v1885
      %v2040 = vadd.f32 %v1652, %v1890
      %v2041 = vadd.f32 %v1653, %v1895
      %v2042 = vadd.f32 %v1654, %v1900
      %v2043 = vadd.f32 %v1655, %v1905
      %v2044 = vadd.f32 %v1656, %v1910
      %v2045 = vadd.f32 %v1657, %v1915
      %v2046 = vadd.f32 %v1658, %v1920
      %v2047 = vadd.f32 %v1659, %v1925
      %v2048 = vadd.f32 %v1660, %v1930
      %v2049 = vadd.f32 %v1661, %v1935
      %v2050 = vadd.f32 %v1662, %v1940
      %v2051 = vadd.f32 %v1663, %v1945
      %v2052 = vadd.f32 %v1664, %v1950
      %v2053 = vadd.f32 %v1665, %v1955
      %v2054 = vadd.f32 %v1666, %v1960
      %v2055 = vadd.f32 %v1667, %v1965
      %v2056 = vadd.f32 %v1668, %v1970
      %v2057 = vadd.f32 %v1669, %v1975
      %v2058 = vadd.f32 %v1670, %v1980
      %v2059 = vadd.f32 %v1671, %v1985
      %v2060 = vadd.f32 %v1672, %v1990
      %v2061 = vadd.f32 %v1673, %v1995
      %v2062 = vadd.f32 %v1674, %v2000
      %v2063 = vadd.f32 %v1675, %v2005
      %v2064 = vadd.f32 %v1676, %v2010
      %v2065 = vadd.f32 %v1677, %v2015
      %v2066 = vadd.f32 %v1678, %v2020
      %v2067 = vadd.f32 %v1679, %v2025
      %v2068 = vadd.f32 %v1680, %v2030
      %v2069 = vadd.f32 %v1681, %v2035
      %v2070 = vld [vmem:[%s1682 + $0x1] sm:$0xff]
      %v2071 = vld [vmem:[%s1682 + $0x9] sm:$0xff]
      %v2072 = vld [vmem:[%s1682 + $0x19] sm:$0xff]
      %v2073 = vld [vmem:[%s1682 + $0x21] sm:$0xff]
      %v2074 = vld [vmem:[%s1682 + $0x31] sm:$0xff]
      %v2075 = vld [vmem:[%s1682 + $0x39] sm:$0xff]
      %v2076 = vld [vmem:[%s1682 + $0x49] sm:$0xff]
      %v2077 = vld [vmem:[%s1682 + $0x51] sm:$0xff]
      %v2078 = vld [vmem:[%s1682 + $0x61] sm:$0xff]
      %v2079 = vld [vmem:[%s1682 + $0x69] sm:$0xff]
      %v2080 = vld [vmem:[%s1682 + $0x79] sm:$0xff]
      %v2081 = vld [vmem:[%s1682 + $0x81] sm:$0xff]
      %v2082 = vld [vmem:[%s1682 + $0x91] sm:$0xff]
      %v2083 = vld [vmem:[%s1682 + $0x99] sm:$0xff]
      %v2084 = vld [vmem:[%s1682 + $0xa9] sm:$0xff]
      %v2085 = vld [vmem:[%s1682 + $0xb1] sm:$0xff]
      %v2086 = vld [vmem:[%s1682 + $0xc1] sm:$0xff]
      %v2087 = vld [vmem:[%s1682 + $0xc9] sm:$0xff]
      %v2088 = vld [vmem:[%s1682 + $0xd9] sm:$0xff]
      %v2089 = vld [vmem:[%s1682 + $0xe1] sm:$0xff]
      %v2090 = vld [vmem:[%s1682 + $0xf1] sm:$0xff]
      %v2091 = vld [vmem:[%s1682 + $0xf9] sm:$0xff]
      %v2092 = vld [vmem:[%s1682 + $0x109] sm:$0xff]
      %v2093 = vld [vmem:[%s1682 + $0x111] sm:$0xff]
      %v2094 = vld [vmem:[%s1682 + $0x121] sm:$0xff]
      %v2095 = vld [vmem:[%s1682 + $0x129] sm:$0xff]
      %v2096 = vld [vmem:[%s1682 + $0x139] sm:$0xff]
      %v2097 = vld [vmem:[%s1682 + $0x141] sm:$0xff]
      %v2098 = vld [vmem:[%s1682 + $0x151] sm:$0xff]
      %v2099 = vld [vmem:[%s1682 + $0x159] sm:$0xff]
      %v2100 = vld [vmem:[%s1682 + $0x169] sm:$0xff]
      %v2101 = vld [vmem:[%s1682 + $0x171] sm:$0xff]
      %s2102 = scalar_lea.vmem %s1, 40
      %v2103 = vld [vmem:[%s2102] sm:$0xff]
      %v2105 = vsel %vm265, %v2070, 0
      %v2108 = vsel %vm265, %v2071, 0
      %v2111 = vsel %vm265, %v2072, 0
      %v2114 = vsel %vm265, %v2073, 0
      %v2117 = vsel %vm265, %v2074, 0
      %v2120 = vsel %vm265, %v2075, 0
      %v2123 = vsel %vm265, %v2076, 0
      %v2126 = vsel %vm265, %v2077, 0
      %v2129 = vsel %vm265, %v2078, 0
      %v2132 = vsel %vm265, %v2079, 0
      %v2135 = vsel %vm265, %v2080, 0
      %v2138 = vsel %vm265, %v2081, 0
      %v2141 = vsel %vm265, %v2082, 0
      %v2144 = vsel %vm265, %v2083, 0
      %v2147 = vsel %vm265, %v2084, 0
      %v2150 = vsel %vm265, %v2085, 0
      %v2153 = vsel %vm265, %v2086, 0
      %v2156 = vsel %vm265, %v2087, 0
      %v2159 = vsel %vm265, %v2088, 0
      %v2162 = vsel %vm265, %v2089, 0
      %v2165 = vsel %vm265, %v2090, 0
      %v2168 = vsel %vm265, %v2091, 0
      %v2171 = vsel %vm265, %v2092, 0
      %v2174 = vsel %vm265, %v2093, 0
      %v2177 = vsel %vm265, %v2094, 0
      %v2180 = vsel %vm265, %v2095, 0
      %v2183 = vsel %vm265, %v2096, 0
      %v2186 = vsel %vm265, %v2097, 0
      %v2189 = vsel %vm265, %v2098, 0
      %v2192 = vsel %vm265, %v2099, 0
      %v2195 = vsel %vm265, %v2100, 0
      %v2198 = vsel %vm265, %v2101, 0
      %2200 = vmatprep.subr.mxu0 0.0
      %2201 = vmatpush1.msra.mxu0 %v2103
      %2202 = vmatprep.subr.mxu0 0.0
      %2203 = vmatpush1.msra.mxu0 0.0
      %2204 = vmatprep.subr.mxu0 0.0
      %2205 = vmatpush1.msra.mxu0 0.0
      %2206 = vmatprep.subr.mxu0 0.0
      %2207 = vmatpush1.msra.mxu0 0.0
      %2208 = vmatprep.subr.mxu0 0.0
      %2209 = vmatpush1.msra.mxu0 0.0
      %2210 = vmatprep.subr.mxu0 0.0
      %2211 = vmatpush1.msra.mxu0 0.0
      %2212 = vmatprep.subr.mxu0 0.0
      %2213 = vmatpush1.msra.mxu0 0.0
      %2214 = vmatprep.subr.mxu0 0.0
      %2215 = vmatpush1.msra.mxu0 0.0
      %2216 = vmatprep.subr.mxu0 0.0
      %2217 = vmatpush1.msra.mxu0 0.0
      %2218 = vmatprep.subr.mxu0 0.0
      %2219 = vmatpush1.msra.mxu0 0.0
      %2220 = vmatprep.subr.mxu0 0.0
      %2221 = vmatpush1.msra.mxu0 0.0
      %2222 = vmatprep.subr.mxu0 0.0
      %2223 = vmatpush1.msra.mxu0 0.0
      %2224 = vmatprep.subr.mxu0 0.0
      %2225 = vmatpush1.msra.mxu0 0.0
      %2226 = vmatprep.subr.mxu0 0.0
      %2227 = vmatpush1.msra.mxu0 0.0
      %2228 = vmatprep.subr.mxu0 0.0
      %2229 = vmatpush1.msra.mxu0 0.0
      %2230 = vmatprep.subr.mxu0 0.0
      %2231 = vmatpush1.msra.mxu0 0.0
      %2232 = vmatprep.subr.mxu0 0.0
      %2233 = vmatpush1.msra.mxu0 0.0
      %2234 = vmatprep.subr.mxu0 0.0
      %2235 = vmatpush1.msra.mxu0 0.0
      %2236 = vmatprep.subr.mxu0 0.0
      %2237 = vmatpush1.msra.mxu0 0.0
      %2238 = vmatprep.subr.mxu0 0.0
      %2239 = vmatpush1.msra.mxu0 0.0
      %2240 = vmatprep.subr.mxu0 0.0
      %2241 = vmatpush1.msra.mxu0 0.0
      %2242 = vmatprep.subr.mxu0 0.0
      %2243 = vmatpush1.msra.mxu0 0.0
      %2244 = vmatprep.subr.mxu0 0.0
      %2245 = vmatpush1.msra.mxu0 0.0
      %2246 = vmatprep.subr.mxu0 0.0
      %2247 = vmatpush1.msra.mxu0 0.0
      %2248 = vmatprep.subr.mxu0 0.0
      %2249 = vmatpush1.msra.mxu0 0.0
      %2250 = vmatprep.subr.mxu0 0.0
      %2251 = vmatpush1.msra.mxu0 0.0
      %2252 = vmatprep.subr.mxu0 0.0
      %2253 = vmatpush1.msra.mxu0 0.0
      %2254 = vmatprep.subr.mxu0 0.0
      %2255 = vmatpush1.msra.mxu0 0.0
      %2256 = vmatprep.subr.mxu0 0.0
      %2257 = vmatpush1.msra.mxu0 0.0
      %2258 = vmatprep.subr.mxu0 0.0
      %2259 = vmatpush1.msra.mxu0 0.0
      %2260 = vmatprep.subr.mxu0 0.0
      %2261 = vmatpush1.msra.mxu0 0.0
      %2262 = vmatprep.subr.mxu0 0.0
      %2263 = vmatpush1.msra.mxu0 0.0
      %2264 = vmatprep.mubr.f32.mxu0 0.0
      %2265 = vmatmul.mubr.f32.gmra.mrb[0].mxu0 %v2105
      %v2266 = vpop.f32.mrb[0].mxu0
      %v2267 = vadd.f32 0.0, %v2266
      %v2268 = vpop.f32.mrb[0].mxu0
      %2269 = vmatprep.mubr.f32.mxu0 0.0
      %2270 = vmatmul.mubr.f32.gmra.mrb[0].mxu0 %v2108
      %v2271 = vpop.f32.mrb[0].mxu0
      %v2272 = vadd.f32 0.0, %v2271
      %v2273 = vpop.f32.mrb[0].mxu0
      %2274 = vmatprep.mubr.f32.mxu0 0.0
      %2275 = vmatmul.mubr.f32.gmra.mrb[0].mxu0 %v2111
      %v2276 = vpop.f32.mrb[0].mxu0
      %v2277 = vadd.f32 0.0, %v2276
      %v2278 = vpop.f32.mrb[0].mxu0
      %2279 = vmatprep.mubr.f32.mxu0 0.0
      %2280 = vmatmul.mubr.f32.gmra.mrb[0].mxu0 %v2114
      %v2281 = vpop.f32.mrb[0].mxu0
      %v2282 = vadd.f32 0.0, %v2281
      %v2283 = vpop.f32.mrb[0].mxu0
      %2284 = vmatprep.mubr.f32.mxu0 0.0
      %2285 = vmatmul.mubr.f32.gmra.mrb[0].mxu0 %v2117
      %v2286 = vpop.f32.mrb[0].mxu0
      %v2287 = vadd.f32 0.0, %v2286
      %v2288 = vpop.f32.mrb[0].mxu0
      %2289 = vmatprep.mubr.f32.mxu0 0.0
      %2290 = vmatmul.mubr.f32.gmra.mrb[0].mxu0 %v2120
      %v2291 = vpop.f32.mrb[0].mxu0
      %v2292 = vadd.f32 0.0, %v2291
      %v2293 = vpop.f32.mrb[0].mxu0
      %2294 = vmatprep.mubr.f32.mxu0 0.0
      %2295 = vmatmul.mubr.f32.gmra.mrb[0].mxu0 %v2123
      %v2296 = vpop.f32.mrb[0].mxu0
      %v2297 = vadd.f32 0.0, %v2296
      %v2298 = vpop.f32.mrb[0].mxu0
      %2299 = vmatprep.mubr.f32.mxu0 0.0
      %2300 = vmatmul.mubr.f32.gmra.mrb[0].mxu0 %v2126
      %v2301 = vpop.f32.mrb[0].mxu0
      %v2302 = vadd.f32 0.0, %v2301
      %v2303 = vpop.f32.mrb[0].mxu0
      %2304 = vmatprep.mubr.f32.mxu0 0.0
      %2305 = vmatmul.mubr.f32.gmra.mrb[0].mxu0 %v2129
      %v2306 = vpop.f32.mrb[0].mxu0
      %v2307 = vadd.f32 0.0, %v2306
      %v2308 = vpop.f32.mrb[0].mxu0
      %2309 = vmatprep.mubr.f32.mxu0 0.0
      %2310 = vmatmul.mubr.f32.gmra.mrb[0].mxu0 %v2132
      %v2311 = vpop.f32.mrb[0].mxu0
      %v2312 = vadd.f32 0.0, %v2311
      %v2313 = vpop.f32.mrb[0].mxu0
      %2314 = vmatprep.mubr.f32.mxu0 0.0
      %2315 = vmatmul.mubr.f32.gmra.mrb[0].mxu0 %v2135
      %v2316 = vpop.f32.mrb[0].mxu0
      %v2317 = vadd.f32 0.0, %v2316
      %v2318 = vpop.f32.mrb[0].mxu0
      %2319 = vmatprep.mubr.f32.mxu0 0.0
      %2320 = vmatmul.mubr.f32.gmra.mrb[0].mxu0 %v2138
      %v2321 = vpop.f32.mrb[0].mxu0
      %v2322 = vadd.f32 0.0, %v2321
      %v2323 = vpop.f32.mrb[0].mxu0
      %2324 = vmatprep.mubr.f32.mxu0 0.0
      %2325 = vmatmul.mubr.f32.gmra.mrb[0].mxu0 %v2141
      %v2326 = vpop.f32.mrb[0].mxu0
      %v2327 = vadd.f32 0.0, %v2326
      %v2328 = vpop.f32.mrb[0].mxu0
      %2329 = vmatprep.mubr.f32.mxu0 0.0
      %2330 = vmatmul.mubr.f32.gmra.mrb[0].mxu0 %v2144
      %v2331 = vpop.f32.mrb[0].mxu0
      %v2332 = vadd.f32 0.0, %v2331
      %v2333 = vpop.f32.mrb[0].mxu0
      %2334 = vmatprep.mubr.f32.mxu0 0.0
      %2335 = vmatmul.mubr.f32.gmra.mrb[0].mxu0 %v2147
      %v2336 = vpop.f32.mrb[0].mxu0
      %v2337 = vadd.f32 0.0, %v2336
      %v2338 = vpop.f32.mrb[0].mxu0
      %2339 = vmatprep.mubr.f32.mxu0 0.0
      %2340 = vmatmul.mubr.f32.gmra.mrb[0].mxu0 %v2150
      %v2341 = vpop.f32.mrb[0].mxu0
      %v2342 = vadd.f32 0.0, %v2341
      %v2343 = vpop.f32.mrb[0].mxu0
      %2344 = vmatprep.mubr.f32.mxu0 0.0
      %2345 = vmatmul.mubr.f32.gmra.mrb[0].mxu0 %v2153
      %v2346 = vpop.f32.mrb[0].mxu0
      %v2347 = vadd.f32 0.0, %v2346
      %v2348 = vpop.f32.mrb[0].mxu0
      %2349 = vmatprep.mubr.f32.mxu0 0.0
      %2350 = vmatmul.mubr.f32.gmra.mrb[0].mxu0 %v2156
      %v2351 = vpop.f32.mrb[0].mxu0
      %v2352 = vadd.f32 0.0, %v2351
      %v2353 = vpop.f32.mrb[0].mxu0
      %2354 = vmatprep.mubr.f32.mxu0 0.0
      %2355 = vmatmul.mubr.f32.gmra.mrb[0].mxu0 %v2159
      %v2356 = vpop.f32.mrb[0].mxu0
      %v2357 = vadd.f32 0.0, %v2356
      %v2358 = vpop.f32.mrb[0].mxu0
      %2359 = vmatprep.mubr.f32.mxu0 0.0
      %2360 = vmatmul.mubr.f32.gmra.mrb[0].mxu0 %v2162
      %v2361 = vpop.f32.mrb[0].mxu0
      %v2362 = vadd.f32 0.0, %v2361
      %v2363 = vpop.f32.mrb[0].mxu0
      %2364 = vmatprep.mubr.f32.mxu0 0.0
      %2365 = vmatmul.mubr.f32.gmra.mrb[0].mxu0 %v2165
      %v2366 = vpop.f32.mrb[0].mxu0
      %v2367 = vadd.f32 0.0, %v2366
      %v2368 = vpop.f32.mrb[0].mxu0
      %2369 = vmatprep.mubr.f32.mxu0 0.0
      %2370 = vmatmul.mubr.f32.gmra.mrb[0].mxu0 %v2168
      %v2371 = vpop.f32.mrb[0].mxu0
      %v2372 = vadd.f32 0.0, %v2371
      %v2373 = vpop.f32.mrb[0].mxu0
      %2374 = vmatprep.mubr.f32.mxu0 0.0
      %2375 = vmatmul.mubr.f32.gmra.mrb[0].mxu0 %v2171
      %v2376 = vpop.f32.mrb[0].mxu0
      %v2377 = vadd.f32 0.0, %v2376
      %v2378 = vpop.f32.mrb[0].mxu0
      %2379 = vmatprep.mubr.f32.mxu0 0.0
      %2380 = vmatmul.mubr.f32.gmra.mrb[0].mxu0 %v2174
      %v2381 = vpop.f32.mrb[0].mxu0
      %v2382 = vadd.f32 0.0, %v2381
      %v2383 = vpop.f32.mrb[0].mxu0
      %2384 = vmatprep.mubr.f32.mxu0 0.0
      %2385 = vmatmul.mubr.f32.gmra.mrb[0].mxu0 %v2177
      %v2386 = vpop.f32.mrb[0].mxu0
      %v2387 = vadd.f32 0.0, %v2386
      %v2388 = vpop.f32.mrb[0].mxu0
      %2389 = vmatprep.mubr.f32.mxu0 0.0
      %2390 = vmatmul.mubr.f32.gmra.mrb[0].mxu0 %v2180
      %v2391 = vpop.f32.mrb[0].mxu0
      %v2392 = vadd.f32 0.0, %v2391
      %v2393 = vpop.f32.mrb[0].mxu0
      %2394 = vmatprep.mubr.f32.mxu0 0.0
      %2395 = vmatmul.mubr.f32.gmra.mrb[0].mxu0 %v2183
      %v2396 = vpop.f32.mrb[0].mxu0
      %v2397 = vadd.f32 0.0, %v2396
      %v2398 = vpop.f32.mrb[0].mxu0
      %2399 = vmatprep.mubr.f32.mxu0 0.0
      %2400 = vmatmul.mubr.f32.gmra.mrb[0].mxu0 %v2186
      %v2401 = vpop.f32.mrb[0].mxu0
      %v2402 = vadd.f32 0.0, %v2401
      %v2403 = vpop.f32.mrb[0].mxu0
      %2404 = vmatprep.mubr.f32.mxu0 0.0
      %2405 = vmatmul.mubr.f32.gmra.mrb[0].mxu0 %v2189
      %v2406 = vpop.f32.mrb[0].mxu0
      %v2407 = vadd.f32 0.0, %v2406
      %v2408 = vpop.f32.mrb[0].mxu0
      %2409 = vmatprep.mubr.f32.mxu0 0.0
      %2410 = vmatmul.mubr.f32.gmra.mrb[0].mxu0 %v2192
      %v2411 = vpop.f32.mrb[0].mxu0
      %v2412 = vadd.f32 0.0, %v2411
      %v2413 = vpop.f32.mrb[0].mxu0
      %2414 = vmatprep.mubr.f32.mxu0 0.0
      %2415 = vmatmul.mubr.f32.gmra.mrb[0].mxu0 %v2195
      %v2416 = vpop.f32.mrb[0].mxu0
      %v2417 = vadd.f32 0.0, %v2416
      %v2418 = vpop.f32.mrb[0].mxu0
      %2419 = vmatprep.mubr.f32.mxu0 0.0
      %2420 = vmatmul.mubr.f32.gmra.mrb[0].mxu0 %v2198
      %v2421 = vpop.f32.mrb[0].mxu0
      %v2422 = vadd.f32 0.0, %v2421
      %v2423 = vpop.f32.mrb[0].mxu0
      %2424 = vdwg.mxu0
      %v2425 = vadd.f32 %v2038, %v2267
      %v2426 = vadd.f32 %v2039, %v2272
      %v2427 = vadd.f32 %v2040, %v2277
      %v2428 = vadd.f32 %v2041, %v2282
      %v2429 = vadd.f32 %v2042, %v2287
      %v2430 = vadd.f32 %v2043, %v2292
      %v2431 = vadd.f32 %v2044, %v2297
      %v2432 = vadd.f32 %v2045, %v2302
      %v2433 = vadd.f32 %v2046, %v2307
      %v2434 = vadd.f32 %v2047, %v2312
      %v2435 = vadd.f32 %v2048, %v2317
      %v2436 = vadd.f32 %v2049, %v2322
      %v2437 = vadd.f32 %v2050, %v2327
      %v2438 = vadd.f32 %v2051, %v2332
      %v2439 = vadd.f32 %v2052, %v2337
      %v2440 = vadd.f32 %v2053, %v2342
      %v2441 = vadd.f32 %v2054, %v2347
      %v2442 = vadd.f32 %v2055, %v2352
      %v2443 = vadd.f32 %v2056, %v2357
      %v2444 = vadd.f32 %v2057, %v2362
      %v2445 = vadd.f32 %v2058, %v2367
      %v2446 = vadd.f32 %v2059, %v2372
      %v2447 = vadd.f32 %v2060, %v2377
      %v2448 = vadd.f32 %v2061, %v2382
      %v2449 = vadd.f32 %v2062, %v2387
      %v2450 = vadd.f32 %v2063, %v2392
      %v2451 = vadd.f32 %v2064, %v2397
      %v2452 = vadd.f32 %v2065, %v2402
      %v2453 = vadd.f32 %v2066, %v2407
      %v2454 = vadd.f32 %v2067, %v2412
      %v2455 = vadd.f32 %v2068, %v2417
      %v2456 = vadd.f32 %v2069, %v2422
      %v2457 = vld [vmem:[%s1682 + $0x2] sm:$0xff]
      %v2458 = vld [vmem:[%s1682 + $0xa] sm:$0xff]
      %v2459 = vld [vmem:[%s1682 + $0x1a] sm:$0xff]
      %v2460 = vld [vmem:[%s1682 + $0x22] sm:$0xff]
      %v2461 = vld [vmem:[%s1682 + $0x32] sm:$0xff]
      %v2462 = vld [vmem:[%s1682 + $0x3a] sm:$0xff]
      %v2463 = vld [vmem:[%s1682 + $0x4a] sm:$0xff]
      %v2464 = vld [vmem:[%s1682 + $0x52] sm:$0xff]
      %v2465 = vld [vmem:[%s1682 + $0x62] sm:$0xff]
      %v2466 = vld [vmem:[%s1682 + $0x6a] sm:$0xff]
      %v2467 = vld [vmem:[%s1682 + $0x7a] sm:$0xff]
      %v2468 = vld [vmem:[%s1682 + $0x82] sm:$0xff]
      %v2469 = vld [vmem:[%s1682 + $0x92] sm:$0xff]
      %v2470 = vld [vmem:[%s1682 + $0x9a] sm:$0xff]
      %v2471 = vld [vmem:[%s1682 + $0xaa] sm:$0xff]
      %v2472 = vld [vmem:[%s1682 + $0xb2] sm:$0xff]
      %v2473 = vld [vmem:[%s1682 + $0xc2] sm:$0xff]
      %v2474 = vld [vmem:[%s1682 + $0xca] sm:$0xff]
      %v2475 = vld [vmem:[%s1682 + $0xda] sm:$0xff]
      %v2476 = vld [vmem:[%s1682 + $0xe2] sm:$0xff]
      %v2477 = vld [vmem:[%s1682 + $0xf2] sm:$0xff]
      %v2478 = vld [vmem:[%s1682 + $0xfa] sm:$0xff]
      %v2479 = vld [vmem:[%s1682 + $0x10a] sm:$0xff]
      %v2480 = vld [vmem:[%s1682 + $0x112] sm:$0xff]
      %v2481 = vld [vmem:[%s1682 + $0x122] sm:$0xff]
      %v2482 = vld [vmem:[%s1682 + $0x12a] sm:$0xff]
      %v2483 = vld [vmem:[%s1682 + $0x13a] sm:$0xff]
      %v2484 = vld [vmem:[%s1682 + $0x142] sm:$0xff]
      %v2485 = vld [vmem:[%s1682 + $0x152] sm:$0xff]
      %v2486 = vld [vmem:[%s1682 + $0x15a] sm:$0xff]
      %v2487 = vld [vmem:[%s1682 + $0x16a] sm:$0xff]
      %v2488 = vld [vmem:[%s1682 + $0x172] sm:$0xff]
      %s2489 = scalar_lea.vmem %s1, 48
      %v2490 = vld [vmem:[%s2489] sm:$0xff]
      %v2492 = vsel %vm265, %v2457, 0
      %v2495 = vsel %vm265, %v2458, 0
      %v2498 = vsel %vm265, %v2459, 0
      %v2501 = vsel %vm265, %v2460, 0
      %v2504 = vsel %vm265, %v2461, 0
      %v2507 = vsel %vm265, %v2462, 0
      %v2510 = vsel %vm265, %v2463, 0
      %v2513 = vsel %vm265, %v2464, 0
      %v2516 = vsel %vm265, %v2465, 0
      %v2519 = vsel %vm265, %v2466, 0
      %v2522 = vsel %vm265, %v2467, 0
      %v2525 = vsel %vm265, %v2468, 0
      %v2528 = vsel %vm265, %v2469, 0
      %v2531 = vsel %vm265, %v2470, 0
      %v2534 = vsel %vm265, %v2471, 0
      %v2537 = vsel %vm265, %v2472, 0
      %v2540 = vsel %vm265, %v2473, 0
      %v2543 = vsel %vm265, %v2474, 0
      %v2546 = vsel %vm265, %v2475, 0
      %v2549 = vsel %vm265, %v2476, 0
      %v2552 = vsel %vm265, %v2477, 0
      %v2555 = vsel %vm265, %v2478, 0
      %v2558 = vsel %vm265, %v2479, 0
      %v2561 = vsel %vm265, %v2480, 0
      %v2564 = vsel %vm265, %v2481, 0
      %v2567 = vsel %vm265, %v2482, 0
      %v2570 = vsel %vm265, %v2483, 0
      %v2573 = vsel %vm265, %v2484, 0
      %v2576 = vsel %vm265, %v2485, 0
      %v2579 = vsel %vm265, %v2486, 0
      %v2582 = vsel %vm265, %v2487, 0
      %v2585 = vsel %vm265, %v2488, 0
      %2587 = vmatprep.subr.mxu0 0.0
      %2588 = vmatpush1.msra.mxu0 %v2490
      %2589 = vmatprep.subr.mxu0 0.0
      %2590 = vmatpush1.msra.mxu0 0.0
      %2591 = vmatprep.subr.mxu0 0.0
      %2592 = vmatpush1.msra.mxu0 0.0
      %2593 = vmatprep.subr.mxu0 0.0
      %2594 = vmatpush1.msra.mxu0 0.0
      %2595 = vmatprep.subr.mxu0 0.0
      %2596 = vmatpush1.msra.mxu0 0.0
      %2597 = vmatprep.subr.mxu0 0.0
      %2598 = vmatpush1.msra.mxu0 0.0
      %2599 = vmatprep.subr.mxu0 0.0
      %2600 = vmatpush1.msra.mxu0 0.0
      %2601 = vmatprep.subr.mxu0 0.0
      %2602 = vmatpush1.msra.mxu0 0.0
      %2603 = vmatprep.subr.mxu0 0.0
      %2604 = vmatpush1.msra.mxu0 0.0
      %2605 = vmatprep.subr.mxu0 0.0
      %2606 = vmatpush1.msra.mxu0 0.0
      %2607 = vmatprep.subr.mxu0 0.0
      %2608 = vmatpush1.msra.mxu0 0.0
      %2609 = vmatprep.subr.mxu0 0.0
      %2610 = vmatpush1.msra.mxu0 0.0
      %2611 = vmatprep.subr.mxu0 0.0
      %2612 = vmatpush1.msra.mxu0 0.0
      %2613 = vmatprep.subr.mxu0 0.0
      %2614 = vmatpush1.msra.mxu0 0.0
      %2615 = vmatprep.subr.mxu0 0.0
      %2616 = vmatpush1.msra.mxu0 0.0
      %2617 = vmatprep.subr.mxu0 0.0
      %2618 = vmatpush1.msra.mxu0 0.0
      %2619 = vmatprep.subr.mxu0 0.0
      %2620 = vmatpush1.msra.mxu0 0.0
      %2621 = vmatprep.subr.mxu0 0.0
      %2622 = vmatpush1.msra.mxu0 0.0
      %2623 = vmatprep.subr.mxu0 0.0
      %2624 = vmatpush1.msra.mxu0 0.0
      %2625 = vmatprep.subr.mxu0 0.0
      %2626 = vmatpush1.msra.mxu0 0.0
      %2627 = vmatprep.subr.mxu0 0.0
      %2628 = vmatpush1.msra.mxu0 0.0
      %2629 = vmatprep.subr.mxu0 0.0
      %2630 = vmatpush1.msra.mxu0 0.0
      %2631 = vmatprep.subr.mxu0 0.0
      %2632 = vmatpush1.msra.mxu0 0.0
      %2633 = vmatprep.subr.mxu0 0.0
      %2634 = vmatpush1.msra.mxu0 0.0
      %2635 = vmatprep.subr.mxu0 0.0
      %2636 = vmatpush1.msra.mxu0 0.0
      %2637 = vmatprep.subr.mxu0 0.0
      %2638 = vmatpush1.msra.mxu0 0.0
      %2639 = vmatprep.subr.mxu0 0.0
      %2640 = vmatpush1.msra.mxu0 0.0
      %2641 = vmatprep.subr.mxu0 0.0
      %2642 = vmatpush1.msra.mxu0 0.0
      %2643 = vmatprep.subr.mxu0 0.0
      %2644 = vmatpush1.msra.mxu0 0.0
      %2645 = vmatprep.subr.mxu0 0.0
      %2646 = vmatpush1.msra.mxu0 0.0
      %2647 = vmatprep.subr.mxu0 0.0
      %2648 = vmatpush1.msra.mxu0 0.0
      %2649 = vmatprep.subr.mxu0 0.0
      %2650 = vmatpush1.msra.mxu0 0.0
      %2651 = vmatprep.mubr.f32.mxu0 0.0
      %2652 = vmatmul.mubr.f32.gmra.mrb[0].mxu0 %v2492
      %v2653 = vpop.f32.mrb[0].mxu0
      %v2654 = vadd.f32 0.0, %v2653
      %v2655 = vpop.f32.mrb[0].mxu0
      %2656 = vmatprep.mubr.f32.mxu0 0.0
      %2657 = vmatmul.mubr.f32.gmra.mrb[0].mxu0 %v2495
      %v2658 = vpop.f32.mrb[0].mxu0
      %v2659 = vadd.f32 0.0, %v2658
      %v2660 = vpop.f32.mrb[0].mxu0
      %2661 = vmatprep.mubr.f32.mxu0 0.0
      %2662 = vmatmul.mubr.f32.gmra.mrb[0].mxu0 %v2498
      %v2663 = vpop.f32.mrb[0].mxu0
      %v2664 = vadd.f32 0.0, %v2663
      %v2665 = vpop.f32.mrb[0].mxu0
      %2666 = vmatprep.mubr.f32.mxu0 0.0
      %2667 = vmatmul.mubr.f32.gmra.mrb[0].mxu0 %v2501
      %v2668 = vpop.f32.mrb[0].mxu0
      %v2669 = vadd.f32 0.0, %v2668
      %v2670 = vpop.f32.mrb[0].mxu0
      %2671 = vmatprep.mubr.f32.mxu0 0.0
      %2672 = vmatmul.mubr.f32.gmra.mrb[0].mxu0 %v2504
      %v2673 = vpop.f32.mrb[0].mxu0
      %v2674 = vadd.f32 0.0, %v2673
      %v2675 = vpop.f32.mrb[0].mxu0
      %2676 = vmatprep.mubr.f32.mxu0 0.0
      %2677 = vmatmul.mubr.f32.gmra.mrb[0].mxu0 %v2507
      %v2678 = vpop.f32.mrb[0].mxu0
      %v2679 = vadd.f32 0.0, %v2678
      %v2680 = vpop.f32.mrb[0].mxu0
      %2681 = vmatprep.mubr.f32.mxu0 0.0
      %2682 = vmatmul.mubr.f32.gmra.mrb[0].mxu0 %v2510
      %v2683 = vpop.f32.mrb[0].mxu0
      %v2684 = vadd.f32 0.0, %v2683
      %v2685 = vpop.f32.mrb[0].mxu0
      %2686 = vmatprep.mubr.f32.mxu0 0.0
      %2687 = vmatmul.mubr.f32.gmra.mrb[0].mxu0 %v2513
      %v2688 = vpop.f32.mrb[0].mxu0
      %v2689 = vadd.f32 0.0, %v2688
      %v2690 = vpop.f32.mrb[0].mxu0
      %2691 = vmatprep.mubr.f32.mxu0 0.0
      %2692 = vmatmul.mubr.f32.gmra.mrb[0].mxu0 %v2516
      %v2693 = vpop.f32.mrb[0].mxu0
      %v2694 = vadd.f32 0.0, %v2693
      %v2695 = vpop.f32.mrb[0].mxu0
      %2696 = vmatprep.mubr.f32.mxu0 0.0
      %2697 = vmatmul.mubr.f32.gmra.mrb[0].mxu0 %v2519
      %v2698 = vpop.f32.mrb[0].mxu0
      %v2699 = vadd.f32 0.0, %v2698
      %v2700 = vpop.f32.mrb[0].mxu0
      %2701 = vmatprep.mubr.f32.mxu0 0.0
      %2702 = vmatmul.mubr.f32.gmra.mrb[0].mxu0 %v2522
      %v2703 = vpop.f32.mrb[0].mxu0
      %v2704 = vadd.f32 0.0, %v2703
      %v2705 = vpop.f32.mrb[0].mxu0
      %2706 = vmatprep.mubr.f32.mxu0 0.0
      %2707 = vmatmul.mubr.f32.gmra.mrb[0].mxu0 %v2525
      %v2708 = vpop.f32.mrb[0].mxu0
      %v2709 = vadd.f32 0.0, %v2708
      %v2710 = vpop.f32.mrb[0].mxu0
      %2711 = vmatprep.mubr.f32.mxu0 0.0
      %2712 = vmatmul.mubr.f32.gmra.mrb[0].mxu0 %v2528
      %v2713 = vpop.f32.mrb[0].mxu0
      %v2714 = vadd.f32 0.0, %v2713
      %v2715 = vpop.f32.mrb[0].mxu0
      %2716 = vmatprep.mubr.f32.mxu0 0.0
      %2717 = vmatmul.mubr.f32.gmra.mrb[0].mxu0 %v2531
      %v2718 = vpop.f32.mrb[0].mxu0
      %v2719 = vadd.f32 0.0, %v2718
      %v2720 = vpop.f32.mrb[0].mxu0
      %2721 = vmatprep.mubr.f32.mxu0 0.0
      %2722 = vmatmul.mubr.f32.gmra.mrb[0].mxu0 %v2534
      %v2723 = vpop.f32.mrb[0].mxu0
      %v2724 = vadd.f32 0.0, %v2723
      %v2725 = vpop.f32.mrb[0].mxu0
      %2726 = vmatprep.mubr.f32.mxu0 0.0
      %2727 = vmatmul.mubr.f32.gmra.mrb[0].mxu0 %v2537
      %v2728 = vpop.f32.mrb[0].mxu0
      %v2729 = vadd.f32 0.0, %v2728
      %v2730 = vpop.f32.mrb[0].mxu0
      %2731 = vmatprep.mubr.f32.mxu0 0.0
      %2732 = vmatmul.mubr.f32.gmra.mrb[0].mxu0 %v2540
      %v2733 = vpop.f32.mrb[0].mxu0
      %v2734 = vadd.f32 0.0, %v2733
      %v2735 = vpop.f32.mrb[0].mxu0
      %2736 = vmatprep.mubr.f32.mxu0 0.0
      %2737 = vmatmul.mubr.f32.gmra.mrb[0].mxu0 %v2543
      %v2738 = vpop.f32.mrb[0].mxu0
      %v2739 = vadd.f32 0.0, %v2738
      %v2740 = vpop.f32.mrb[0].mxu0
      %2741 = vmatprep.mubr.f32.mxu0 0.0
      %2742 = vmatmul.mubr.f32.gmra.mrb[0].mxu0 %v2546
      %v2743 = vpop.f32.mrb[0].mxu0
      %v2744 = vadd.f32 0.0, %v2743
      %v2745 = vpop.f32.mrb[0].mxu0
      %2746 = vmatprep.mubr.f32.mxu0 0.0
      %2747 = vmatmul.mubr.f32.gmra.mrb[0].mxu0 %v2549
      %v2748 = vpop.f32.mrb[0].mxu0
      %v2749 = vadd.f32 0.0, %v2748
      %v2750 = vpop.f32.mrb[0].mxu0
      %2751 = vmatprep.mubr.f32.mxu0 0.0
      %2752 = vmatmul.mubr.f32.gmra.mrb[0].mxu0 %v2552
      %v2753 = vpop.f32.mrb[0].mxu0
      %v2754 = vadd.f32 0.0, %v2753
      %v2755 = vpop.f32.mrb[0].mxu0
      %2756 = vmatprep.mubr.f32.mxu0 0.0
      %2757 = vmatmul.mubr.f32.gmra.mrb[0].mxu0 %v2555
      %v2758 = vpop.f32.mrb[0].mxu0
      %v2759 = vadd.f32 0.0, %v2758
      %v2760 = vpop.f32.mrb[0].mxu0
      %2761 = vmatprep.mubr.f32.mxu0 0.0
      %2762 = vmatmul.mubr.f32.gmra.mrb[0].mxu0 %v2558
      %v2763 = vpop.f32.mrb[0].mxu0
      %v2764 = vadd.f32 0.0, %v2763
      %v2765 = vpop.f32.mrb[0].mxu0
      %2766 = vmatprep.mubr.f32.mxu0 0.0
      %2767 = vmatmul.mubr.f32.gmra.mrb[0].mxu0 %v2561
      %v2768 = vpop.f32.mrb[0].mxu0
      %v2769 = vadd.f32 0.0, %v2768
      %v2770 = vpop.f32.mrb[0].mxu0
      %2771 = vmatprep.mubr.f32.mxu0 0.0
      %2772 = vmatmul.mubr.f32.gmra.mrb[0].mxu0 %v2564
      %v2773 = vpop.f32.mrb[0].mxu0
      %v2774 = vadd.f32 0.0, %v2773
      %v2775 = vpop.f32.mrb[0].mxu0
      %2776 = vmatprep.mubr.f32.mxu0 0.0
      %2777 = vmatmul.mubr.f32.gmra.mrb[0].mxu0 %v2567
      %v2778 = vpop.f32.mrb[0].mxu0
      %v2779 = vadd.f32 0.0, %v2778
      %v2780 = vpop.f32.mrb[0].mxu0
      %2781 = vmatprep.mubr.f32.mxu0 0.0
      %2782 = vmatmul.mubr.f32.gmra.mrb[0].mxu0 %v2570
      %v2783 = vpop.f32.mrb[0].mxu0
      %v2784 = vadd.f32 0.0, %v2783
      %v2785 = vpop.f32.mrb[0].mxu0
      %2786 = vmatprep.mubr.f32.mxu0 0.0
      %2787 = vmatmul.mubr.f32.gmra.mrb[0].mxu0 %v2573
      %v2788 = vpop.f32.mrb[0].mxu0
      %v2789 = vadd.f32 0.0, %v2788
      %v2790 = vpop.f32.mrb[0].mxu0
      %2791 = vmatprep.mubr.f32.mxu0 0.0
      %2792 = vmatmul.mubr.f32.gmra.mrb[0].mxu0 %v2576
      %v2793 = vpop.f32.mrb[0].mxu0
      %v2794 = vadd.f32 0.0, %v2793
      %v2795 = vpop.f32.mrb[0].mxu0
      %2796 = vmatprep.mubr.f32.mxu0 0.0
      %2797 = vmatmul.mubr.f32.gmra.mrb[0].mxu0 %v2579
      %v2798 = vpop.f32.mrb[0].mxu0
      %v2799 = vadd.f32 0.0, %v2798
      %v2800 = vpop.f32.mrb[0].mxu0
      %2801 = vmatprep.mubr.f32.mxu0 0.0
      %2802 = vmatmul.mubr.f32.gmra.mrb[0].mxu0 %v2582
      %v2803 = vpop.f32.mrb[0].mxu0
      %v2804 = vadd.f32 0.0, %v2803
      %v2805 = vpop.f32.mrb[0].mxu0
      %2806 = vmatprep.mubr.f32.mxu0 0.0
      %2807 = vmatmul.mubr.f32.gmra.mrb[0].mxu0 %v2585
      %v2808 = vpop.f32.mrb[0].mxu0
      %v2809 = vadd.f32 0.0, %v2808
      %v2810 = vpop.f32.mrb[0].mxu0
      %2811 = vdwg.mxu0
      %v2812 = vadd.f32 %v2425, %v2654
      %v2813 = vadd.f32 %v2426, %v2659
      %v2814 = vadd.f32 %v2427, %v2664
      %v2815 = vadd.f32 %v2428, %v2669
      %v2816 = vadd.f32 %v2429, %v2674
      %v2817 = vadd.f32 %v2430, %v2679
      %v2818 = vadd.f32 %v2431, %v2684
      %v2819 = vadd.f32 %v2432, %v2689
      %v2820 = vadd.f32 %v2433, %v2694
      %v2821 = vadd.f32 %v2434, %v2699
      %v2822 = vadd.f32 %v2435, %v2704
      %v2823 = vadd.f32 %v2436, %v2709
      %v2824 = vadd.f32 %v2437, %v2714
      %v2825 = vadd.f32 %v2438, %v2719
      %v2826 = vadd.f32 %v2439, %v2724
      %v2827 = vadd.f32 %v2440, %v2729
      %v2828 = vadd.f32 %v2441, %v2734
      %v2829 = vadd.f32 %v2442, %v2739
      %v2830 = vadd.f32 %v2443, %v2744
      %v2831 = vadd.f32 %v2444, %v2749
      %v2832 = vadd.f32 %v2445, %v2754
      %v2833 = vadd.f32 %v2446, %v2759
      %v2834 = vadd.f32 %v2447, %v2764
      %v2835 = vadd.f32 %v2448, %v2769
      %v2836 = vadd.f32 %v2449, %v2774
      %v2837 = vadd.f32 %v2450, %v2779
      %v2838 = vadd.f32 %v2451, %v2784
      %v2839 = vadd.f32 %v2452, %v2789
      %v2840 = vadd.f32 %v2453, %v2794
      %v2841 = vadd.f32 %v2454, %v2799
      %v2842 = vadd.f32 %v2455, %v2804
      %v2843 = vadd.f32 %v2456, %v2809
      %v2844 = vld [vmem:[%s1682 + $0x3] sm:$0xff]
      %v2845 = vld [vmem:[%s1682 + $0xb] sm:$0xff]
      %v2846 = vld [vmem:[%s1682 + $0x1b] sm:$0xff]
      %v2847 = vld [vmem:[%s1682 + $0x23] sm:$0xff]
      %v2848 = vld [vmem:[%s1682 + $0x33] sm:$0xff]
      %v2849 = vld [vmem:[%s1682 + $0x3b] sm:$0xff]
      %v2850 = vld [vmem:[%s1682 + $0x4b] sm:$0xff]
      %v2851 = vld [vmem:[%s1682 + $0x53] sm:$0xff]
      %v2852 = vld [vmem:[%s1682 + $0x63] sm:$0xff]
      %v2853 = vld [vmem:[%s1682 + $0x6b] sm:$0xff]
      %v2854 = vld [vmem:[%s1682 + $0x7b] sm:$0xff]
      %v2855 = vld [vmem:[%s1682 + $0x83] sm:$0xff]
      %v2856 = vld [vmem:[%s1682 + $0x93] sm:$0xff]
      %v2857 = vld [vmem:[%s1682 + $0x9b] sm:$0xff]
      %v2858 = vld [vmem:[%s1682 + $0xab] sm:$0xff]
      %v2859 = vld [vmem:[%s1682 + $0xb3] sm:$0xff]
      %v2860 = vld [vmem:[%s1682 + $0xc3] sm:$0xff]
      %v2861 = vld [vmem:[%s1682 + $0xcb] sm:$0xff]
      %v2862 = vld [vmem:[%s1682 + $0xdb] sm:$0xff]
      %v2863 = vld [vmem:[%s1682 + $0xe3] sm:$0xff]
      %v2864 = vld [vmem:[%s1682 + $0xf3] sm:$0xff]
      %v2865 = vld [vmem:[%s1682 + $0xfb] sm:$0xff]
      %v2866 = vld [vmem:[%s1682 + $0x10b] sm:$0xff]
      %v2867 = vld [vmem:[%s1682 + $0x113] sm:$0xff]
      %v2868 = vld [vmem:[%s1682 + $0x123] sm:$0xff]
      %v2869 = vld [vmem:[%s1682 + $0x12b] sm:$0xff]
      %v2870 = vld [vmem:[%s1682 + $0x13b] sm:$0xff]
      %v2871 = vld [vmem:[%s1682 + $0x143] sm:$0xff]
      %v2872 = vld [vmem:[%s1682 + $0x153] sm:$0xff]
      %v2873 = vld [vmem:[%s1682 + $0x15b] sm:$0xff]
      %v2874 = vld [vmem:[%s1682 + $0x16b] sm:$0xff]
      %v2875 = vld [vmem:[%s1682 + $0x173] sm:$0xff]
      %s2876 = scalar_lea.vmem %s1, 56
      %v2877 = vld [vmem:[%s2876] sm:$0xff]
      %v2879 = vsel %vm265, %v2844, 0
      %v2882 = vsel %vm265, %v2845, 0
      %v2885 = vsel %vm265, %v2846, 0
      %v2888 = vsel %vm265, %v2847, 0
      %v2891 = vsel %vm265, %v2848, 0
      %v2894 = vsel %vm265, %v2849, 0
      %v2897 = vsel %vm265, %v2850, 0
      %v2900 = vsel %vm265, %v2851, 0
      %v2903 = vsel %vm265, %v2852, 0
      %v2906 = vsel %vm265, %v2853, 0
      %v2909 = vsel %vm265, %v2854, 0
      %v2912 = vsel %vm265, %v2855, 0
      %v2915 = vsel %vm265, %v2856, 0
      %v2918 = vsel %vm265, %v2857, 0
      %v2921 = vsel %vm265, %v2858, 0
      %v2924 = vsel %vm265, %v2859, 0
      %v2927 = vsel %vm265, %v2860, 0
      %v2930 = vsel %vm265, %v2861, 0
      %v2933 = vsel %vm265, %v2862, 0
      %v2936 = vsel %vm265, %v2863, 0
      %v2939 = vsel %vm265, %v2864, 0
      %v2942 = vsel %vm265, %v2865, 0
      %v2945 = vsel %vm265, %v2866, 0
      %v2948 = vsel %vm265, %v2867, 0
      %v2951 = vsel %vm265, %v2868, 0
      %v2954 = vsel %vm265, %v2869, 0
      %v2957 = vsel %vm265, %v2870, 0
      %v2960 = vsel %vm265, %v2871, 0
      %v2963 = vsel %vm265, %v2872, 0
      %v2966 = vsel %vm265, %v2873, 0
      %v2969 = vsel %vm265, %v2874, 0
      %v2972 = vsel %vm265, %v2875, 0
      %2974 = vmatprep.subr.mxu0 0.0
      %2975 = vmatpush1.msra.mxu0 %v2877
      %2976 = vmatprep.subr.mxu0 0.0
      %2977 = vmatpush1.msra.mxu0 0.0
      %2978 = vmatprep.subr.mxu0 0.0
      %2979 = vmatpush1.msra.mxu0 0.0
      %2980 = vmatprep.subr.mxu0 0.0
      %2981 = vmatpush1.msra.mxu0 0.0
      %2982 = vmatprep.subr.mxu0 0.0
      %2983 = vmatpush1.msra.mxu0 0.0
      %2984 = vmatprep.subr.mxu0 0.0
      %2985 = vmatpush1.msra.mxu0 0.0
      %2986 = vmatprep.subr.mxu0 0.0
      %2987 = vmatpush1.msra.mxu0 0.0
      %2988 = vmatprep.subr.mxu0 0.0
      %2989 = vmatpush1.msra.mxu0 0.0
      %2990 = vmatprep.subr.mxu0 0.0
      %2991 = vmatpush1.msra.mxu0 0.0
      %2992 = vmatprep.subr.mxu0 0.0
      %2993 = vmatpush1.msra.mxu0 0.0
      %2994 = vmatprep.subr.mxu0 0.0
      %2995 = vmatpush1.msra.mxu0 0.0
      %2996 = vmatprep.subr.mxu0 0.0
      %2997 = vmatpush1.msra.mxu0 0.0
      %2998 = vmatprep.subr.mxu0 0.0
      %2999 = vmatpush1.msra.mxu0 0.0
      %3000 = vmatprep.subr.mxu0 0.0
      %3001 = vmatpush1.msra.mxu0 0.0
      %3002 = vmatprep.subr.mxu0 0.0
      %3003 = vmatpush1.msra.mxu0 0.0
      %3004 = vmatprep.subr.mxu0 0.0
      %3005 = vmatpush1.msra.mxu0 0.0
      %3006 = vmatprep.subr.mxu0 0.0
      %3007 = vmatpush1.msra.mxu0 0.0
      %3008 = vmatprep.subr.mxu0 0.0
      %3009 = vmatpush1.msra.mxu0 0.0
      %3010 = vmatprep.subr.mxu0 0.0
      %3011 = vmatpush1.msra.mxu0 0.0
      %3012 = vmatprep.subr.mxu0 0.0
      %3013 = vmatpush1.msra.mxu0 0.0
      %3014 = vmatprep.subr.mxu0 0.0
      %3015 = vmatpush1.msra.mxu0 0.0
      %3016 = vmatprep.subr.mxu0 0.0
      %3017 = vmatpush1.msra.mxu0 0.0
      %3018 = vmatprep.subr.mxu0 0.0
      %3019 = vmatpush1.msra.mxu0 0.0
      %3020 = vmatprep.subr.mxu0 0.0
      %3021 = vmatpush1.msra.mxu0 0.0
      %3022 = vmatprep.subr.mxu0 0.0
      %3023 = vmatpush1.msra.mxu0 0.0
      %3024 = vmatprep.subr.mxu0 0.0
      %3025 = vmatpush1.msra.mxu0 0.0
      %3026 = vmatprep.subr.mxu0 0.0
      %3027 = vmatpush1.msra.mxu0 0.0
      %3028 = vmatprep.subr.mxu0 0.0
      %3029 = vmatpush1.msra.mxu0 0.0
      %3030 = vmatprep.subr.mxu0 0.0
      %3031 = vmatpush1.msra.mxu0 0.0
      %3032 = vmatprep.subr.mxu0 0.0
      %3033 = vmatpush1.msra.mxu0 0.0
      %3034 = vmatprep.subr.mxu0 0.0
      %3035 = vmatpush1.msra.mxu0 0.0
      %3036 = vmatprep.subr.mxu0 0.0
      %3037 = vmatpush1.msra.mxu0 0.0
      %3038 = vmatprep.mubr.f32.mxu0 0.0
      %3039 = vmatmul.mubr.f32.gmra.mrb[0].mxu0 %v2879
      %v3040 = vpop.f32.mrb[0].mxu0
      %v3041 = vadd.f32 0.0, %v3040
      %v3042 = vpop.f32.mrb[0].mxu0
      %3043 = vmatprep.mubr.f32.mxu0 0.0
      %3044 = vmatmul.mubr.f32.gmra.mrb[0].mxu0 %v2882
      %v3045 = vpop.f32.mrb[0].mxu0
      %v3046 = vadd.f32 0.0, %v3045
      %v3047 = vpop.f32.mrb[0].mxu0
      %3048 = vmatprep.mubr.f32.mxu0 0.0
      %3049 = vmatmul.mubr.f32.gmra.mrb[0].mxu0 %v2885
      %v3050 = vpop.f32.mrb[0].mxu0
      %v3051 = vadd.f32 0.0, %v3050
      %v3052 = vpop.f32.mrb[0].mxu0
      %3053 = vmatprep.mubr.f32.mxu0 0.0
      %3054 = vmatmul.mubr.f32.gmra.mrb[0].mxu0 %v2888
      %v3055 = vpop.f32.mrb[0].mxu0
      %v3056 = vadd.f32 0.0, %v3055
      %v3057 = vpop.f32.mrb[0].mxu0
      %3058 = vmatprep.mubr.f32.mxu0 0.0
      %3059 = vmatmul.mubr.f32.gmra.mrb[0].mxu0 %v2891
      %v3060 = vpop.f32.mrb[0].mxu0
      %v3061 = vadd.f32 0.0, %v3060
      %v3062 = vpop.f32.mrb[0].mxu0
      %3063 = vmatprep.mubr.f32.mxu0 0.0
      %3064 = vmatmul.mubr.f32.gmra.mrb[0].mxu0 %v2894
      %v3065 = vpop.f32.mrb[0].mxu0
      %v3066 = vadd.f32 0.0, %v3065
      %v3067 = vpop.f32.mrb[0].mxu0
      %3068 = vmatprep.mubr.f32.mxu0 0.0
      %3069 = vmatmul.mubr.f32.gmra.mrb[0].mxu0 %v2897
      %v3070 = vpop.f32.mrb[0].mxu0
      %v3071 = vadd.f32 0.0, %v3070
      %v3072 = vpop.f32.mrb[0].mxu0
      %3073 = vmatprep.mubr.f32.mxu0 0.0
      %3074 = vmatmul.mubr.f32.gmra.mrb[0].mxu0 %v2900
      %v3075 = vpop.f32.mrb[0].mxu0
      %v3076 = vadd.f32 0.0, %v3075
      %v3077 = vpop.f32.mrb[0].mxu0
      %3078 = vmatprep.mubr.f32.mxu0 0.0
      %3079 = vmatmul.mubr.f32.gmra.mrb[0].mxu0 %v2903
      %v3080 = vpop.f32.mrb[0].mxu0
      %v3081 = vadd.f32 0.0, %v3080
      %v3082 = vpop.f32.mrb[0].mxu0
      %3083 = vmatprep.mubr.f32.mxu0 0.0
      %3084 = vmatmul.mubr.f32.gmra.mrb[0].mxu0 %v2906
      %v3085 = vpop.f32.mrb[0].mxu0
      %v3086 = vadd.f32 0.0, %v3085
      %v3087 = vpop.f32.mrb[0].mxu0
      %3088 = vmatprep.mubr.f32.mxu0 0.0
      %3089 = vmatmul.mubr.f32.gmra.mrb[0].mxu0 %v2909
      %v3090 = vpop.f32.mrb[0].mxu0
      %v3091 = vadd.f32 0.0, %v3090
      %v3092 = vpop.f32.mrb[0].mxu0
      %3093 = vmatprep.mubr.f32.mxu0 0.0
      %3094 = vmatmul.mubr.f32.gmra.mrb[0].mxu0 %v2912
      %v3095 = vpop.f32.mrb[0].mxu0
      %v3096 = vadd.f32 0.0, %v3095
      %v3097 = vpop.f32.mrb[0].mxu0
      %3098 = vmatprep.mubr.f32.mxu0 0.0
      %3099 = vmatmul.mubr.f32.gmra.mrb[0].mxu0 %v2915
      %v3100 = vpop.f32.mrb[0].mxu0
      %v3101 = vadd.f32 0.0, %v3100
      %v3102 = vpop.f32.mrb[0].mxu0
      %3103 = vmatprep.mubr.f32.mxu0 0.0
      %3104 = vmatmul.mubr.f32.gmra.mrb[0].mxu0 %v2918
      %v3105 = vpop.f32.mrb[0].mxu0
      %v3106 = vadd.f32 0.0, %v3105
      %v3107 = vpop.f32.mrb[0].mxu0
      %3108 = vmatprep.mubr.f32.mxu0 0.0
      %3109 = vmatmul.mubr.f32.gmra.mrb[0].mxu0 %v2921
      %v3110 = vpop.f32.mrb[0].mxu0
      %v3111 = vadd.f32 0.0, %v3110
      %v3112 = vpop.f32.mrb[0].mxu0
      %3113 = vmatprep.mubr.f32.mxu0 0.0
      %3114 = vmatmul.mubr.f32.gmra.mrb[0].mxu0 %v2924
      %v3115 = vpop.f32.mrb[0].mxu0
      %v3116 = vadd.f32 0.0, %v3115
      %v3117 = vpop.f32.mrb[0].mxu0
      %3118 = vmatprep.mubr.f32.mxu0 0.0
      %3119 = vmatmul.mubr.f32.gmra.mrb[0].mxu0 %v2927
      %v3120 = vpop.f32.mrb[0].mxu0
      %v3121 = vadd.f32 0.0, %v3120
      %v3122 = vpop.f32.mrb[0].mxu0
      %3123 = vmatprep.mubr.f32.mxu0 0.0
      %3124 = vmatmul.mubr.f32.gmra.mrb[0].mxu0 %v2930
      %v3125 = vpop.f32.mrb[0].mxu0
      %v3126 = vadd.f32 0.0, %v3125
      %v3127 = vpop.f32.mrb[0].mxu0
      %3128 = vmatprep.mubr.f32.mxu0 0.0
      %3129 = vmatmul.mubr.f32.gmra.mrb[0].mxu0 %v2933
      %v3130 = vpop.f32.mrb[0].mxu0
      %v3131 = vadd.f32 0.0, %v3130
      %v3132 = vpop.f32.mrb[0].mxu0
      %3133 = vmatprep.mubr.f32.mxu0 0.0
      %3134 = vmatmul.mubr.f32.gmra.mrb[0].mxu0 %v2936
      %v3135 = vpop.f32.mrb[0].mxu0
      %v3136 = vadd.f32 0.0, %v3135
      %v3137 = vpop.f32.mrb[0].mxu0
      %3138 = vmatprep.mubr.f32.mxu0 0.0
      %3139 = vmatmul.mubr.f32.gmra.mrb[0].mxu0 %v2939
      %v3140 = vpop.f32.mrb[0].mxu0
      %v3141 = vadd.f32 0.0, %v3140
      %v3142 = vpop.f32.mrb[0].mxu0
      %3143 = vmatprep.mubr.f32.mxu0 0.0
      %3144 = vmatmul.mubr.f32.gmra.mrb[0].mxu0 %v2942
      %v3145 = vpop.f32.mrb[0].mxu0
      %v3146 = vadd.f32 0.0, %v3145
      %v3147 = vpop.f32.mrb[0].mxu0
      %3148 = vmatprep.mubr.f32.mxu0 0.0
      %3149 = vmatmul.mubr.f32.gmra.mrb[0].mxu0 %v2945
      %v3150 = vpop.f32.mrb[0].mxu0
      %v3151 = vadd.f32 0.0, %v3150
      %v3152 = vpop.f32.mrb[0].mxu0
      %3153 = vmatprep.mubr.f32.mxu0 0.0
      %3154 = vmatmul.mubr.f32.gmra.mrb[0].mxu0 %v2948
      %v3155 = vpop.f32.mrb[0].mxu0
      %v3156 = vadd.f32 0.0, %v3155
      %v3157 = vpop.f32.mrb[0].mxu0
      %3158 = vmatprep.mubr.f32.mxu0 0.0
      %3159 = vmatmul.mubr.f32.gmra.mrb[0].mxu0 %v2951
      %v3160 = vpop.f32.mrb[0].mxu0
      %v3161 = vadd.f32 0.0, %v3160
      %v3162 = vpop.f32.mrb[0].mxu0
      %3163 = vmatprep.mubr.f32.mxu0 0.0
      %3164 = vmatmul.mubr.f32.gmra.mrb[0].mxu0 %v2954
      %v3165 = vpop.f32.mrb[0].mxu0
      %v3166 = vadd.f32 0.0, %v3165
      %v3167 = vpop.f32.mrb[0].mxu0
      %3168 = vmatprep.mubr.f32.mxu0 0.0
      %3169 = vmatmul.mubr.f32.gmra.mrb[0].mxu0 %v2957
      %v3170 = vpop.f32.mrb[0].mxu0
      %v3171 = vadd.f32 0.0, %v3170
      %v3172 = vpop.f32.mrb[0].mxu0
      %3173 = vmatprep.mubr.f32.mxu0 0.0
      %3174 = vmatmul.mubr.f32.gmra.mrb[0].mxu0 %v2960
      %v3175 = vpop.f32.mrb[0].mxu0
      %v3176 = vadd.f32 0.0, %v3175
      %v3177 = vpop.f32.mrb[0].mxu0
      %3178 = vmatprep.mubr.f32.mxu0 0.0
      %3179 = vmatmul.mubr.f32.gmra.mrb[0].mxu0 %v2963
      %v3180 = vpop.f32.mrb[0].mxu0
      %v3181 = vadd.f32 0.0, %v3180
      %v3182 = vpop.f32.mrb[0].mxu0
      %3183 = vmatprep.mubr.f32.mxu0 0.0
      %3184 = vmatmul.mubr.f32.gmra.mrb[0].mxu0 %v2966
      %v3185 = vpop.f32.mrb[0].mxu0
      %v3186 = vadd.f32 0.0, %v3185
      %v3187 = vpop.f32.mrb[0].mxu0
      %3188 = vmatprep.mubr.f32.mxu0 0.0
      %3189 = vmatmul.mubr.f32.gmra.mrb[0].mxu0 %v2969
      %v3190 = vpop.f32.mrb[0].mxu0
      %v3191 = vadd.f32 0.0, %v3190
      %v3192 = vpop.f32.mrb[0].mxu0
      %3193 = vmatprep.mubr.f32.mxu0 0.0
      %3194 = vmatmul.mubr.f32.gmra.mrb[0].mxu0 %v2972
      %v3195 = vpop.f32.mrb[0].mxu0
      %v3196 = vadd.f32 0.0, %v3195
      %v3197 = vpop.f32.mrb[0].mxu0
      %3198 = vdwg.mxu0
      %v3199 = vadd.f32 %v2812, %v3041
      %v3200 = vadd.f32 %v2813, %v3046
      %v3201 = vadd.f32 %v2814, %v3051
      %v3202 = vadd.f32 %v2815, %v3056
      %v3203 = vadd.f32 %v2816, %v3061
      %v3204 = vadd.f32 %v2817, %v3066
      %v3205 = vadd.f32 %v2818, %v3071
      %v3206 = vadd.f32 %v2819, %v3076
      %v3207 = vadd.f32 %v2820, %v3081
      %v3208 = vadd.f32 %v2821, %v3086
      %v3209 = vadd.f32 %v2822, %v3091
      %v3210 = vadd.f32 %v2823, %v3096
      %v3211 = vadd.f32 %v2824, %v3101
      %v3212 = vadd.f32 %v2825, %v3106
      %v3213 = vadd.f32 %v2826, %v3111
      %v3214 = vadd.f32 %v2827, %v3116
      %v3215 = vadd.f32 %v2828, %v3121
      %v3216 = vadd.f32 %v2829, %v3126
      %v3217 = vadd.f32 %v2830, %v3131
      %v3218 = vadd.f32 %v2831, %v3136
      %v3219 = vadd.f32 %v2832, %v3141
      %v3220 = vadd.f32 %v2833, %v3146
      %v3221 = vadd.f32 %v2834, %v3151
      %v3222 = vadd.f32 %v2835, %v3156
      %v3223 = vadd.f32 %v2836, %v3161
      %v3224 = vadd.f32 %v2837, %v3166
      %v3225 = vadd.f32 %v2838, %v3171
      %v3226 = vadd.f32 %v2839, %v3176
      %v3227 = vadd.f32 %v2840, %v3181
      %v3228 = vadd.f32 %v2841, %v3186
      %v3229 = vadd.f32 %v2842, %v3191
      %v3230 = vadd.f32 %v2843, %v3196
      %s3231 = scalar_lea.vmem %s192, 48
      %v3232 = vld [vmem:[%s3231] sm:$0xff]
      %v3233 = vld [vmem:[%s3231 + $0x8] sm:$0xff]
      %v3234 = vld [vmem:[%s3231 + $0x18] sm:$0xff]
      %v3235 = vld [vmem:[%s3231 + $0x20] sm:$0xff]
      %v3236 = vld [vmem:[%s3231 + $0x30] sm:$0xff]
      %v3237 = vld [vmem:[%s3231 + $0x38] sm:$0xff]
      %v3238 = vld [vmem:[%s3231 + $0x48] sm:$0xff]
      %v3239 = vld [vmem:[%s3231 + $0x50] sm:$0xff]
      %v3240 = vld [vmem:[%s3231 + $0x60] sm:$0xff]
      %v3241 = vld [vmem:[%s3231 + $0x68] sm:$0xff]
      %v3242 = vld [vmem:[%s3231 + $0x78] sm:$0xff]
      %v3243 = vld [vmem:[%s3231 + $0x80] sm:$0xff]
      %v3244 = vld [vmem:[%s3231 + $0x90] sm:$0xff]
      %v3245 = vld [vmem:[%s3231 + $0x98] sm:$0xff]
      %v3246 = vld [vmem:[%s3231 + $0xa8] sm:$0xff]
      %v3247 = vld [vmem:[%s3231 + $0xb0] sm:$0xff]
      %v3248 = vld [vmem:[%s3231 + $0xc0] sm:$0xff]
      %v3249 = vld [vmem:[%s3231 + $0xc8] sm:$0xff]
      %v3250 = vld [vmem:[%s3231 + $0xd8] sm:$0xff]
      %v3251 = vld [vmem:[%s3231 + $0xe0] sm:$0xff]
      %v3252 = vld [vmem:[%s3231 + $0xf0] sm:$0xff]
      %v3253 = vld [vmem:[%s3231 + $0xf8] sm:$0xff]
      %v3254 = vld [vmem:[%s3231 + $0x108] sm:$0xff]
      %v3255 = vld [vmem:[%s3231 + $0x110] sm:$0xff]
      %v3256 = vld [vmem:[%s3231 + $0x120] sm:$0xff]
      %v3257 = vld [vmem:[%s3231 + $0x128] sm:$0xff]
      %v3258 = vld [vmem:[%s3231 + $0x138] sm:$0xff]
      %v3259 = vld [vmem:[%s3231 + $0x140] sm:$0xff]
      %v3260 = vld [vmem:[%s3231 + $0x150] sm:$0xff]
      %v3261 = vld [vmem:[%s3231 + $0x158] sm:$0xff]
      %v3262 = vld [vmem:[%s3231 + $0x168] sm:$0xff]
      %v3263 = vld [vmem:[%s3231 + $0x170] sm:$0xff]
      %s3264 = scalar_lea.vmem %s1, 64
      %v3265 = vld [vmem:[%s3264] sm:$0xff]
      %v3267 = vsel %vm265, %v3232, 0
      %v3270 = vsel %vm265, %v3233, 0
      %v3273 = vsel %vm265, %v3234, 0
      %v3276 = vsel %vm265, %v3235, 0
      %v3279 = vsel %vm265, %v3236, 0
      %v3282 = vsel %vm265, %v3237, 0
      %v3285 = vsel %vm265, %v3238, 0
      %v3288 = vsel %vm265, %v3239, 0
      %v3291 = vsel %vm265, %v3240, 0
      %v3294 = vsel %vm265, %v3241, 0
      %v3297 = vsel %vm265, %v3242, 0
      %v3300 = vsel %vm265, %v3243, 0
      %v3303 = vsel %vm265, %v3244, 0
      %v3306 = vsel %vm265, %v3245, 0
      %v3309 = vsel %vm265, %v3246, 0
      %v3312 = vsel %vm265, %v3247, 0
      %v3315 = vsel %vm265, %v3248, 0
      %v3318 = vsel %vm265, %v3249, 0
      %v3321 = vsel %vm265, %v3250, 0
      %v3324 = vsel %vm265, %v3251, 0
      %v3327 = vsel %vm265, %v3252, 0
      %v3330 = vsel %vm265, %v3253, 0
      %v3333 = vsel %vm265, %v3254, 0
      %v3336 = vsel %vm265, %v3255, 0
      %v3339 = vsel %vm265, %v3256, 0
      %v3342 = vsel %vm265, %v3257, 0
      %v3345 = vsel %vm265, %v3258, 0
      %v3348 = vsel %vm265, %v3259, 0
      %v3351 = vsel %vm265, %v3260, 0
      %v3354 = vsel %vm265, %v3261, 0
      %v3357 = vsel %vm265, %v3262, 0
      %v3360 = vsel %vm265, %v3263, 0
      %3362 = vmatprep.subr.mxu0 0.0
      %3363 = vmatpush1.msra.mxu0 %v3265
      %3364 = vmatprep.subr.mxu0 0.0
      %3365 = vmatpush1.msra.mxu0 0.0
      %3366 = vmatprep.subr.mxu0 0.0
      %3367 = vmatpush1.msra.mxu0 0.0
      %3368 = vmatprep.subr.mxu0 0.0
      %3369 = vmatpush1.msra.mxu0 0.0
      %3370 = vmatprep.subr.mxu0 0.0
      %3371 = vmatpush1.msra.mxu0 0.0
      %3372 = vmatprep.subr.mxu0 0.0
      %3373 = vmatpush1.msra.mxu0 0.0
      %3374 = vmatprep.subr.mxu0 0.0
      %3375 = vmatpush1.msra.mxu0 0.0
      %3376 = vmatprep.subr.mxu0 0.0
      %3377 = vmatpush1.msra.mxu0 0.0
      %3378 = vmatprep.subr.mxu0 0.0
      %3379 = vmatpush1.msra.mxu0 0.0
      %3380 = vmatprep.subr.mxu0 0.0
      %3381 = vmatpush1.msra.mxu0 0.0
      %3382 = vmatprep.subr.mxu0 0.0
      %3383 = vmatpush1.msra.mxu0 0.0
      %3384 = vmatprep.subr.mxu0 0.0
      %3385 = vmatpush1.msra.mxu0 0.0
      %3386 = vmatprep.subr.mxu0 0.0
      %3387 = vmatpush1.msra.mxu0 0.0
      %3388 = vmatprep.subr.mxu0 0.0
      %3389 = vmatpush1.msra.mxu0 0.0
      %3390 = vmatprep.subr.mxu0 0.0
      %3391 = vmatpush1.msra.mxu0 0.0
      %3392 = vmatprep.subr.mxu0 0.0
      %3393 = vmatpush1.msra.mxu0 0.0
      %3394 = vmatprep.subr.mxu0 0.0
      %3395 = vmatpush1.msra.mxu0 0.0
      %3396 = vmatprep.subr.mxu0 0.0
      %3397 = vmatpush1.msra.mxu0 0.0
      %3398 = vmatprep.subr.mxu0 0.0
      %3399 = vmatpush1.msra.mxu0 0.0
      %3400 = vmatprep.subr.mxu0 0.0
      %3401 = vmatpush1.msra.mxu0 0.0
      %3402 = vmatprep.subr.mxu0 0.0
      %3403 = vmatpush1.msra.mxu0 0.0
      %3404 = vmatprep.subr.mxu0 0.0
      %3405 = vmatpush1.msra.mxu0 0.0
      %3406 = vmatprep.subr.mxu0 0.0
      %3407 = vmatpush1.msra.mxu0 0.0
      %3408 = vmatprep.subr.mxu0 0.0
      %3409 = vmatpush1.msra.mxu0 0.0
      %3410 = vmatprep.subr.mxu0 0.0
      %3411 = vmatpush1.msra.mxu0 0.0
      %3412 = vmatprep.subr.mxu0 0.0
      %3413 = vmatpush1.msra.mxu0 0.0
      %3414 = vmatprep.subr.mxu0 0.0
      %3415 = vmatpush1.msra.mxu0 0.0
      %3416 = vmatprep.subr.mxu0 0.0
      %3417 = vmatpush1.msra.mxu0 0.0
      %3418 = vmatprep.subr.mxu0 0.0
      %3419 = vmatpush1.msra.mxu0 0.0
      %3420 = vmatprep.subr.mxu0 0.0
      %3421 = vmatpush1.msra.mxu0 0.0
      %3422 = vmatprep.subr.mxu0 0.0
      %3423 = vmatpush1.msra.mxu0 0.0
      %3424 = vmatprep.subr.mxu0 0.0
      %3425 = vmatpush1.msra.mxu0 0.0
      %3426 = vmatprep.mubr.f32.mxu0 0.0
      %3427 = vmatmul.mubr.f32.gmra.mrb[0].mxu0 %v3267
      %v3428 = vpop.f32.mrb[0].mxu0
      %v3429 = vadd.f32 0.0, %v3428
      %v3430 = vpop.f32.mrb[0].mxu0
      %3431 = vmatprep.mubr.f32.mxu0 0.0
      %3432 = vmatmul.mubr.f32.gmra.mrb[0].mxu0 %v3270
      %v3433 = vpop.f32.mrb[0].mxu0
      %v3434 = vadd.f32 0.0, %v3433
      %v3435 = vpop.f32.mrb[0].mxu0
      %3436 = vmatprep.mubr.f32.mxu0 0.0
      %3437 = vmatmul.mubr.f32.gmra.mrb[0].mxu0 %v3273
      %v3438 = vpop.f32.mrb[0].mxu0
      %v3439 = vadd.f32 0.0, %v3438
      %v3440 = vpop.f32.mrb[0].mxu0
      %3441 = vmatprep.mubr.f32.mxu0 0.0
      %3442 = vmatmul.mubr.f32.gmra.mrb[0].mxu0 %v3276
      %v3443 = vpop.f32.mrb[0].mxu0
      %v3444 = vadd.f32 0.0, %v3443
      %v3445 = vpop.f32.mrb[0].mxu0
      %3446 = vmatprep.mubr.f32.mxu0 0.0
      %3447 = vmatmul.mubr.f32.gmra.mrb[0].mxu0 %v3279
      %v3448 = vpop.f32.mrb[0].mxu0
      %v3449 = vadd.f32 0.0, %v3448
      %v3450 = vpop.f32.mrb[0].mxu0
      %3451 = vmatprep.mubr.f32.mxu0 0.0
      %3452 = vmatmul.mubr.f32.gmra.mrb[0].mxu0 %v3282
      %v3453 = vpop.f32.mrb[0].mxu0
      %v3454 = vadd.f32 0.0, %v3453
      %v3455 = vpop.f32.mrb[0].mxu0
      %3456 = vmatprep.mubr.f32.mxu0 0.0
      %3457 = vmatmul.mubr.f32.gmra.mrb[0].mxu0 %v3285
      %v3458 = vpop.f32.mrb[0].mxu0
      %v3459 = vadd.f32 0.0, %v3458
      %v3460 = vpop.f32.mrb[0].mxu0
      %3461 = vmatprep.mubr.f32.mxu0 0.0
      %3462 = vmatmul.mubr.f32.gmra.mrb[0].mxu0 %v3288
      %v3463 = vpop.f32.mrb[0].mxu0
      %v3464 = vadd.f32 0.0, %v3463
      %v3465 = vpop.f32.mrb[0].mxu0
      %3466 = vmatprep.mubr.f32.mxu0 0.0
      %3467 = vmatmul.mubr.f32.gmra.mrb[0].mxu0 %v3291
      %v3468 = vpop.f32.mrb[0].mxu0
      %v3469 = vadd.f32 0.0, %v3468
      %v3470 = vpop.f32.mrb[0].mxu0
      %3471 = vmatprep.mubr.f32.mxu0 0.0
      %3472 = vmatmul.mubr.f32.gmra.mrb[0].mxu0 %v3294
      %v3473 = vpop.f32.mrb[0].mxu0
      %v3474 = vadd.f32 0.0, %v3473
      %v3475 = vpop.f32.mrb[0].mxu0
      %3476 = vmatprep.mubr.f32.mxu0 0.0
      %3477 = vmatmul.mubr.f32.gmra.mrb[0].mxu0 %v3297
      %v3478 = vpop.f32.mrb[0].mxu0
      %v3479 = vadd.f32 0.0, %v3478
      %v3480 = vpop.f32.mrb[0].mxu0
      %3481 = vmatprep.mubr.f32.mxu0 0.0
      %3482 = vmatmul.mubr.f32.gmra.mrb[0].mxu0 %v3300
      %v3483 = vpop.f32.mrb[0].mxu0
      %v3484 = vadd.f32 0.0, %v3483
      %v3485 = vpop.f32.mrb[0].mxu0
      %3486 = vmatprep.mubr.f32.mxu0 0.0
      %3487 = vmatmul.mubr.f32.gmra.mrb[0].mxu0 %v3303
      %v3488 = vpop.f32.mrb[0].mxu0
      %v3489 = vadd.f32 0.0, %v3488
      %v3490 = vpop.f32.mrb[0].mxu0
      %3491 = vmatprep.mubr.f32.mxu0 0.0
      %3492 = vmatmul.mubr.f32.gmra.mrb[0].mxu0 %v3306
      %v3493 = vpop.f32.mrb[0].mxu0
      %v3494 = vadd.f32 0.0, %v3493
      %v3495 = vpop.f32.mrb[0].mxu0
      %3496 = vmatprep.mubr.f32.mxu0 0.0
      %3497 = vmatmul.mubr.f32.gmra.mrb[0].mxu0 %v3309
      %v3498 = vpop.f32.mrb[0].mxu0
      %v3499 = vadd.f32 0.0, %v3498
      %v3500 = vpop.f32.mrb[0].mxu0
      %3501 = vmatprep.mubr.f32.mxu0 0.0
      %3502 = vmatmul.mubr.f32.gmra.mrb[0].mxu0 %v3312
      %v3503 = vpop.f32.mrb[0].mxu0
      %v3504 = vadd.f32 0.0, %v3503
      %v3505 = vpop.f32.mrb[0].mxu0
      %3506 = vmatprep.mubr.f32.mxu0 0.0
      %3507 = vmatmul.mubr.f32.gmra.mrb[0].mxu0 %v3315
      %v3508 = vpop.f32.mrb[0].mxu0
      %v3509 = vadd.f32 0.0, %v3508
      %v3510 = vpop.f32.mrb[0].mxu0
      %3511 = vmatprep.mubr.f32.mxu0 0.0
      %3512 = vmatmul.mubr.f32.gmra.mrb[0].mxu0 %v3318
      %v3513 = vpop.f32.mrb[0].mxu0
      %v3514 = vadd.f32 0.0, %v3513
      %v3515 = vpop.f32.mrb[0].mxu0
      %3516 = vmatprep.mubr.f32.mxu0 0.0
      %3517 = vmatmul.mubr.f32.gmra.mrb[0].mxu0 %v3321
      %v3518 = vpop.f32.mrb[0].mxu0
      %v3519 = vadd.f32 0.0, %v3518
      %v3520 = vpop.f32.mrb[0].mxu0
      %3521 = vmatprep.mubr.f32.mxu0 0.0
      %3522 = vmatmul.mubr.f32.gmra.mrb[0].mxu0 %v3324
      %v3523 = vpop.f32.mrb[0].mxu0
      %v3524 = vadd.f32 0.0, %v3523
      %v3525 = vpop.f32.mrb[0].mxu0
      %3526 = vmatprep.mubr.f32.mxu0 0.0
      %3527 = vmatmul.mubr.f32.gmra.mrb[0].mxu0 %v3327
      %v3528 = vpop.f32.mrb[0].mxu0
      %v3529 = vadd.f32 0.0, %v3528
      %v3530 = vpop.f32.mrb[0].mxu0
      %3531 = vmatprep.mubr.f32.mxu0 0.0
      %3532 = vmatmul.mubr.f32.gmra.mrb[0].mxu0 %v3330
      %v3533 = vpop.f32.mrb[0].mxu0
      %v3534 = vadd.f32 0.0, %v3533
      %v3535 = vpop.f32.mrb[0].mxu0
      %3536 = vmatprep.mubr.f32.mxu0 0.0
      %3537 = vmatmul.mubr.f32.gmra.mrb[0].mxu0 %v3333
      %v3538 = vpop.f32.mrb[0].mxu0
      %v3539 = vadd.f32 0.0, %v3538
      %v3540 = vpop.f32.mrb[0].mxu0
      %3541 = vmatprep.mubr.f32.mxu0 0.0
      %3542 = vmatmul.mubr.f32.gmra.mrb[0].mxu0 %v3336
      %v3543 = vpop.f32.mrb[0].mxu0
      %v3544 = vadd.f32 0.0, %v3543
      %v3545 = vpop.f32.mrb[0].mxu0
      %3546 = vmatprep.mubr.f32.mxu0 0.0
      %3547 = vmatmul.mubr.f32.gmra.mrb[0].mxu0 %v3339
      %v3548 = vpop.f32.mrb[0].mxu0
      %v3549 = vadd.f32 0.0, %v3548
      %v3550 = vpop.f32.mrb[0].mxu0
      %3551 = vmatprep.mubr.f32.mxu0 0.0
      %3552 = vmatmul.mubr.f32.gmra.mrb[0].mxu0 %v3342
      %v3553 = vpop.f32.mrb[0].mxu0
      %v3554 = vadd.f32 0.0, %v3553
      %v3555 = vpop.f32.mrb[0].mxu0
      %3556 = vmatprep.mubr.f32.mxu0 0.0
      %3557 = vmatmul.mubr.f32.gmra.mrb[0].mxu0 %v3345
      %v3558 = vpop.f32.mrb[0].mxu0
      %v3559 = vadd.f32 0.0, %v3558
      %v3560 = vpop.f32.mrb[0].mxu0
      %3561 = vmatprep.mubr.f32.mxu0 0.0
      %3562 = vmatmul.mubr.f32.gmra.mrb[0].mxu0 %v3348
      %v3563 = vpop.f32.mrb[0].mxu0
      %v3564 = vadd.f32 0.0, %v3563
      %v3565 = vpop.f32.mrb[0].mxu0
      %3566 = vmatprep.mubr.f32.mxu0 0.0
      %3567 = vmatmul.mubr.f32.gmra.mrb[0].mxu0 %v3351
      %v3568 = vpop.f32.mrb[0].mxu0
      %v3569 = vadd.f32 0.0, %v3568
      %v3570 = vpop.f32.mrb[0].mxu0
      %3571 = vmatprep.mubr.f32.mxu0 0.0
      %3572 = vmatmul.mubr.f32.gmra.mrb[0].mxu0 %v3354
      %v3573 = vpop.f32.mrb[0].mxu0
      %v3574 = vadd.f32 0.0, %v3573
      %v3575 = vpop.f32.mrb[0].mxu0
      %3576 = vmatprep.mubr.f32.mxu0 0.0
      %3577 = vmatmul.mubr.f32.gmra.mrb[0].mxu0 %v3357
      %v3578 = vpop.f32.mrb[0].mxu0
      %v3579 = vadd.f32 0.0, %v3578
      %v3580 = vpop.f32.mrb[0].mxu0
      %3581 = vmatprep.mubr.f32.mxu0 0.0
      %3582 = vmatmul.mubr.f32.gmra.mrb[0].mxu0 %v3360
      %v3583 = vpop.f32.mrb[0].mxu0
      %v3584 = vadd.f32 0.0, %v3583
      %v3585 = vpop.f32.mrb[0].mxu0
      %3586 = vdwg.mxu0
      %v3587 = vadd.f32 %v3199, %v3429
      %v3588 = vadd.f32 %v3200, %v3434
      %v3589 = vadd.f32 %v3201, %v3439
      %v3590 = vadd.f32 %v3202, %v3444
      %v3591 = vadd.f32 %v3203, %v3449
      %v3592 = vadd.f32 %v3204, %v3454
      %v3593 = vadd.f32 %v3205, %v3459
      %v3594 = vadd.f32 %v3206, %v3464
      %v3595 = vadd.f32 %v3207, %v3469
      %v3596 = vadd.f32 %v3208, %v3474
      %v3597 = vadd.f32 %v3209, %v3479
      %v3598 = vadd.f32 %v3210, %v3484
      %v3599 = vadd.f32 %v3211, %v3489
      %v3600 = vadd.f32 %v3212, %v3494
      %v3601 = vadd.f32 %v3213, %v3499
      %v3602 = vadd.f32 %v3214, %v3504
      %v3603 = vadd.f32 %v3215, %v3509
      %v3604 = vadd.f32 %v3216, %v3514
      %v3605 = vadd.f32 %v3217, %v3519
      %v3606 = vadd.f32 %v3218, %v3524
      %v3607 = vadd.f32 %v3219, %v3529
      %v3608 = vadd.f32 %v3220, %v3534
      %v3609 = vadd.f32 %v3221, %v3539
      %v3610 = vadd.f32 %v3222, %v3544
      %v3611 = vadd.f32 %v3223, %v3549
      %v3612 = vadd.f32 %v3224, %v3554
      %v3613 = vadd.f32 %v3225, %v3559
      %v3614 = vadd.f32 %v3226, %v3564
      %v3615 = vadd.f32 %v3227, %v3569
      %v3616 = vadd.f32 %v3228, %v3574
      %v3617 = vadd.f32 %v3229, %v3579
      %v3618 = vadd.f32 %v3230, %v3584
      %v3619 = vld [vmem:[%s3231 + $0x1] sm:$0xff]
      %v3620 = vld [vmem:[%s3231 + $0x9] sm:$0xff]
      %v3621 = vld [vmem:[%s3231 + $0x19] sm:$0xff]
      %v3622 = vld [vmem:[%s3231 + $0x21] sm:$0xff]
      %v3623 = vld [vmem:[%s3231 + $0x31] sm:$0xff]
      %v3624 = vld [vmem:[%s3231 + $0x39] sm:$0xff]
      %v3625 = vld [vmem:[%s3231 + $0x49] sm:$0xff]
      %v3626 = vld [vmem:[%s3231 + $0x51] sm:$0xff]
      %v3627 = vld [vmem:[%s3231 + $0x61] sm:$0xff]
      %v3628 = vld [vmem:[%s3231 + $0x69] sm:$0xff]
      %v3629 = vld [vmem:[%s3231 + $0x79] sm:$0xff]
      %v3630 = vld [vmem:[%s3231 + $0x81] sm:$0xff]
      %v3631 = vld [vmem:[%s3231 + $0x91] sm:$0xff]
      %v3632 = vld [vmem:[%s3231 + $0x99] sm:$0xff]
      %v3633 = vld [vmem:[%s3231 + $0xa9] sm:$0xff]
      %v3634 = vld [vmem:[%s3231 + $0xb1] sm:$0xff]
      %v3635 = vld [vmem:[%s3231 + $0xc1] sm:$0xff]
      %v3636 = vld [vmem:[%s3231 + $0xc9] sm:$0xff]
      %v3637 = vld [vmem:[%s3231 + $0xd9] sm:$0xff]
      %v3638 = vld [vmem:[%s3231 + $0xe1] sm:$0xff]
      %v3639 = vld [vmem:[%s3231 + $0xf1] sm:$0xff]
      %v3640 = vld [vmem:[%s3231 + $0xf9] sm:$0xff]
      %v3641 = vld [vmem:[%s3231 + $0x109] sm:$0xff]
      %v3642 = vld [vmem:[%s3231 + $0x111] sm:$0xff]
      %v3643 = vld [vmem:[%s3231 + $0x121] sm:$0xff]
      %v3644 = vld [vmem:[%s3231 + $0x129] sm:$0xff]
      %v3645 = vld [vmem:[%s3231 + $0x139] sm:$0xff]
      %v3646 = vld [vmem:[%s3231 + $0x141] sm:$0xff]
      %v3647 = vld [vmem:[%s3231 + $0x151] sm:$0xff]
      %v3648 = vld [vmem:[%s3231 + $0x159] sm:$0xff]
      %v3649 = vld [vmem:[%s3231 + $0x169] sm:$0xff]
      %v3650 = vld [vmem:[%s3231 + $0x171] sm:$0xff]
      %s3651 = scalar_lea.vmem %s1, 72
      %v3652 = vld [vmem:[%s3651] sm:$0xff]
      %v3654 = vsel %vm265, %v3619, 0
      %v3657 = vsel %vm265, %v3620, 0
      %v3660 = vsel %vm265, %v3621, 0
      %v3663 = vsel %vm265, %v3622, 0
      %v3666 = vsel %vm265, %v3623, 0
      %v3669 = vsel %vm265, %v3624, 0
      %v3672 = vsel %vm265, %v3625, 0
      %v3675 = vsel %vm265, %v3626, 0
      %v3678 = vsel %vm265, %v3627, 0
      %v3681 = vsel %vm265, %v3628, 0
      %v3684 = vsel %vm265, %v3629, 0
      %v3687 = vsel %vm265, %v3630, 0
      %v3690 = vsel %vm265, %v3631, 0
      %v3693 = vsel %vm265, %v3632, 0
      %v3696 = vsel %vm265, %v3633, 0
      %v3699 = vsel %vm265, %v3634, 0
      %v3702 = vsel %vm265, %v3635, 0
      %v3705 = vsel %vm265, %v3636, 0
      %v3708 = vsel %vm265, %v3637, 0
      %v3711 = vsel %vm265, %v3638, 0
      %v3714 = vsel %vm265, %v3639, 0
      %v3717 = vsel %vm265, %v3640, 0
      %v3720 = vsel %vm265, %v3641, 0
      %v3723 = vsel %vm265, %v3642, 0
      %v3726 = vsel %vm265, %v3643, 0
      %v3729 = vsel %vm265, %v3644, 0
      %v3732 = vsel %vm265, %v3645, 0
      %v3735 = vsel %vm265, %v3646, 0
      %v3738 = vsel %vm265, %v3647, 0
      %v3741 = vsel %vm265, %v3648, 0
      %v3744 = vsel %vm265, %v3649, 0
      %v3747 = vsel %vm265, %v3650, 0
      %3749 = vmatprep.subr.mxu0 0.0
      %3750 = vmatpush1.msra.mxu0 %v3652
      %3751 = vmatprep.subr.mxu0 0.0
      %3752 = vmatpush1.msra.mxu0 0.0
      %3753 = vmatprep.subr.mxu0 0.0
      %3754 = vmatpush1.msra.mxu0 0.0
      %3755 = vmatprep.subr.mxu0 0.0
      %3756 = vmatpush1.msra.mxu0 0.0
      %3757 = vmatprep.subr.mxu0 0.0
      %3758 = vmatpush1.msra.mxu0 0.0
      %3759 = vmatprep.subr.mxu0 0.0
      %3760 = vmatpush1.msra.mxu0 0.0
      %3761 = vmatprep.subr.mxu0 0.0
      %3762 = vmatpush1.msra.mxu0 0.0
      %3763 = vmatprep.subr.mxu0 0.0
      %3764 = vmatpush1.msra.mxu0 0.0
      %3765 = vmatprep.subr.mxu0 0.0
      %3766 = vmatpush1.msra.mxu0 0.0
      %3767 = vmatprep.subr.mxu0 0.0
      %3768 = vmatpush1.msra.mxu0 0.0
      %3769 = vmatprep.subr.mxu0 0.0
      %3770 = vmatpush1.msra.mxu0 0.0
      %3771 = vmatprep.subr.mxu0 0.0
      %3772 = vmatpush1.msra.mxu0 0.0
      %3773 = vmatprep.subr.mxu0 0.0
      %3774 = vmatpush1.msra.mxu0 0.0
      %3775 = vmatprep.subr.mxu0 0.0
      %3776 = vmatpush1.msra.mxu0 0.0
      %3777 = vmatprep.subr.mxu0 0.0
      %3778 = vmatpush1.msra.mxu0 0.0
      %3779 = vmatprep.subr.mxu0 0.0
      %3780 = vmatpush1.msra.mxu0 0.0
      %3781 = vmatprep.subr.mxu0 0.0
      %3782 = vmatpush1.msra.mxu0 0.0
      %3783 = vmatprep.subr.mxu0 0.0
      %3784 = vmatpush1.msra.mxu0 0.0
      %3785 = vmatprep.subr.mxu0 0.0
      %3786 = vmatpush1.msra.mxu0 0.0
      %3787 = vmatprep.subr.mxu0 0.0
      %3788 = vmatpush1.msra.mxu0 0.0
      %3789 = vmatprep.subr.mxu0 0.0
      %3790 = vmatpush1.msra.mxu0 0.0
      %3791 = vmatprep.subr.mxu0 0.0
      %3792 = vmatpush1.msra.mxu0 0.0
      %3793 = vmatprep.subr.mxu0 0.0
      %3794 = vmatpush1.msra.mxu0 0.0
      %3795 = vmatprep.subr.mxu0 0.0
      %3796 = vmatpush1.msra.mxu0 0.0
      %3797 = vmatprep.subr.mxu0 0.0
      %3798 = vmatpush1.msra.mxu0 0.0
      %3799 = vmatprep.subr.mxu0 0.0
      %3800 = vmatpush1.msra.mxu0 0.0
      %3801 = vmatprep.subr.mxu0 0.0
      %3802 = vmatpush1.msra.mxu0 0.0
      %3803 = vmatprep.subr.mxu0 0.0
      %3804 = vmatpush1.msra.mxu0 0.0
      %3805 = vmatprep.subr.mxu0 0.0
      %3806 = vmatpush1.msra.mxu0 0.0
      %3807 = vmatprep.subr.mxu0 0.0
      %3808 = vmatpush1.msra.mxu0 0.0
      %3809 = vmatprep.subr.mxu0 0.0
      %3810 = vmatpush1.msra.mxu0 0.0
      %3811 = vmatprep.subr.mxu0 0.0
      %3812 = vmatpush1.msra.mxu0 0.0
      %3813 = vmatprep.mubr.f32.mxu0 0.0
      %3814 = vmatmul.mubr.f32.gmra.mrb[0].mxu0 %v3654
      %v3815 = vpop.f32.mrb[0].mxu0
      %v3816 = vadd.f32 0.0, %v3815
      %v3817 = vpop.f32.mrb[0].mxu0
      %3818 = vmatprep.mubr.f32.mxu0 0.0
      %3819 = vmatmul.mubr.f32.gmra.mrb[0].mxu0 %v3657
      %v3820 = vpop.f32.mrb[0].mxu0
      %v3821 = vadd.f32 0.0, %v3820
      %v3822 = vpop.f32.mrb[0].mxu0
      %3823 = vmatprep.mubr.f32.mxu0 0.0
      %3824 = vmatmul.mubr.f32.gmra.mrb[0].mxu0 %v3660
      %v3825 = vpop.f32.mrb[0].mxu0
      %v3826 = vadd.f32 0.0, %v3825
      %v3827 = vpop.f32.mrb[0].mxu0
      %3828 = vmatprep.mubr.f32.mxu0 0.0
      %3829 = vmatmul.mubr.f32.gmra.mrb[0].mxu0 %v3663
      %v3830 = vpop.f32.mrb[0].mxu0
      %v3831 = vadd.f32 0.0, %v3830
      %v3832 = vpop.f32.mrb[0].mxu0
      %3833 = vmatprep.mubr.f32.mxu0 0.0
      %3834 = vmatmul.mubr.f32.gmra.mrb[0].mxu0 %v3666
      %v3835 = vpop.f32.mrb[0].mxu0
      %v3836 = vadd.f32 0.0, %v3835
      %v3837 = vpop.f32.mrb[0].mxu0
      %3838 = vmatprep.mubr.f32.mxu0 0.0
      %3839 = vmatmul.mubr.f32.gmra.mrb[0].mxu0 %v3669
      %v3840 = vpop.f32.mrb[0].mxu0
      %v3841 = vadd.f32 0.0, %v3840
      %v3842 = vpop.f32.mrb[0].mxu0
      %3843 = vmatprep.mubr.f32.mxu0 0.0
      %3844 = vmatmul.mubr.f32.gmra.mrb[0].mxu0 %v3672
      %v3845 = vpop.f32.mrb[0].mxu0
      %v3846 = vadd.f32 0.0, %v3845
      %v3847 = vpop.f32.mrb[0].mxu0
      %3848 = vmatprep.mubr.f32.mxu0 0.0
      %3849 = vmatmul.mubr.f32.gmra.mrb[0].mxu0 %v3675
      %v3850 = vpop.f32.mrb[0].mxu0
      %v3851 = vadd.f32 0.0, %v3850
      %v3852 = vpop.f32.mrb[0].mxu0
      %3853 = vmatprep.mubr.f32.mxu0 0.0
      %3854 = vmatmul.mubr.f32.gmra.mrb[0].mxu0 %v3678
      %v3855 = vpop.f32.mrb[0].mxu0
      %v3856 = vadd.f32 0.0, %v3855
      %v3857 = vpop.f32.mrb[0].mxu0
      %3858 = vmatprep.mubr.f32.mxu0 0.0
      %3859 = vmatmul.mubr.f32.gmra.mrb[0].mxu0 %v3681
      %v3860 = vpop.f32.mrb[0].mxu0
      %v3861 = vadd.f32 0.0, %v3860
      %v3862 = vpop.f32.mrb[0].mxu0
      %3863 = vmatprep.mubr.f32.mxu0 0.0
      %3864 = vmatmul.mubr.f32.gmra.mrb[0].mxu0 %v3684
      %v3865 = vpop.f32.mrb[0].mxu0
      %v3866 = vadd.f32 0.0, %v3865
      %v3867 = vpop.f32.mrb[0].mxu0
      %3868 = vmatprep.mubr.f32.mxu0 0.0
      %3869 = vmatmul.mubr.f32.gmra.mrb[0].mxu0 %v3687
      %v3870 = vpop.f32.mrb[0].mxu0
      %v3871 = vadd.f32 0.0, %v3870
      %v3872 = vpop.f32.mrb[0].mxu0
      %3873 = vmatprep.mubr.f32.mxu0 0.0
      %3874 = vmatmul.mubr.f32.gmra.mrb[0].mxu0 %v3690
      %v3875 = vpop.f32.mrb[0].mxu0
      %v3876 = vadd.f32 0.0, %v3875
      %v3877 = vpop.f32.mrb[0].mxu0
      %3878 = vmatprep.mubr.f32.mxu0 0.0
      %3879 = vmatmul.mubr.f32.gmra.mrb[0].mxu0 %v3693
      %v3880 = vpop.f32.mrb[0].mxu0
      %v3881 = vadd.f32 0.0, %v3880
      %v3882 = vpop.f32.mrb[0].mxu0
      %3883 = vmatprep.mubr.f32.mxu0 0.0
      %3884 = vmatmul.mubr.f32.gmra.mrb[0].mxu0 %v3696
      %v3885 = vpop.f32.mrb[0].mxu0
      %v3886 = vadd.f32 0.0, %v3885
      %v3887 = vpop.f32.mrb[0].mxu0
      %3888 = vmatprep.mubr.f32.mxu0 0.0
      %3889 = vmatmul.mubr.f32.gmra.mrb[0].mxu0 %v3699
      %v3890 = vpop.f32.mrb[0].mxu0
      %v3891 = vadd.f32 0.0, %v3890
      %v3892 = vpop.f32.mrb[0].mxu0
      %3893 = vmatprep.mubr.f32.mxu0 0.0
      %3894 = vmatmul.mubr.f32.gmra.mrb[0].mxu0 %v3702
      %v3895 = vpop.f32.mrb[0].mxu0
      %v3896 = vadd.f32 0.0, %v3895
      %v3897 = vpop.f32.mrb[0].mxu0
      %3898 = vmatprep.mubr.f32.mxu0 0.0
      %3899 = vmatmul.mubr.f32.gmra.mrb[0].mxu0 %v3705
      %v3900 = vpop.f32.mrb[0].mxu0
      %v3901 = vadd.f32 0.0, %v3900
      %v3902 = vpop.f32.mrb[0].mxu0
      %3903 = vmatprep.mubr.f32.mxu0 0.0
      %3904 = vmatmul.mubr.f32.gmra.mrb[0].mxu0 %v3708
      %v3905 = vpop.f32.mrb[0].mxu0
      %v3906 = vadd.f32 0.0, %v3905
      %v3907 = vpop.f32.mrb[0].mxu0
      %3908 = vmatprep.mubr.f32.mxu0 0.0
      %3909 = vmatmul.mubr.f32.gmra.mrb[0].mxu0 %v3711
      %v3910 = vpop.f32.mrb[0].mxu0
      %v3911 = vadd.f32 0.0, %v3910
      %v3912 = vpop.f32.mrb[0].mxu0
      %3913 = vmatprep.mubr.f32.mxu0 0.0
      %3914 = vmatmul.mubr.f32.gmra.mrb[0].mxu0 %v3714
      %v3915 = vpop.f32.mrb[0].mxu0
      %v3916 = vadd.f32 0.0, %v3915
      %v3917 = vpop.f32.mrb[0].mxu0
      %3918 = vmatprep.mubr.f32.mxu0 0.0
      %3919 = vmatmul.mubr.f32.gmra.mrb[0].mxu0 %v3717
      %v3920 = vpop.f32.mrb[0].mxu0
      %v3921 = vadd.f32 0.0, %v3920
      %v3922 = vpop.f32.mrb[0].mxu0
      %3923 = vmatprep.mubr.f32.mxu0 0.0
      %3924 = vmatmul.mubr.f32.gmra.mrb[0].mxu0 %v3720
      %v3925 = vpop.f32.mrb[0].mxu0
      %v3926 = vadd.f32 0.0, %v3925
      %v3927 = vpop.f32.mrb[0].mxu0
      %3928 = vmatprep.mubr.f32.mxu0 0.0
      %3929 = vmatmul.mubr.f32.gmra.mrb[0].mxu0 %v3723
      %v3930 = vpop.f32.mrb[0].mxu0
      %v3931 = vadd.f32 0.0, %v3930
      %v3932 = vpop.f32.mrb[0].mxu0
      %3933 = vmatprep.mubr.f32.mxu0 0.0
      %3934 = vmatmul.mubr.f32.gmra.mrb[0].mxu0 %v3726
      %v3935 = vpop.f32.mrb[0].mxu0
      %v3936 = vadd.f32 0.0, %v3935
      %v3937 = vpop.f32.mrb[0].mxu0
      %3938 = vmatprep.mubr.f32.mxu0 0.0
      %3939 = vmatmul.mubr.f32.gmra.mrb[0].mxu0 %v3729
      %v3940 = vpop.f32.mrb[0].mxu0
      %v3941 = vadd.f32 0.0, %v3940
      %v3942 = vpop.f32.mrb[0].mxu0
      %3943 = vmatprep.mubr.f32.mxu0 0.0
      %3944 = vmatmul.mubr.f32.gmra.mrb[0].mxu0 %v3732
      %v3945 = vpop.f32.mrb[0].mxu0
      %v3946 = vadd.f32 0.0, %v3945
      %v3947 = vpop.f32.mrb[0].mxu0
      %3948 = vmatprep.mubr.f32.mxu0 0.0
      %3949 = vmatmul.mubr.f32.gmra.mrb[0].mxu0 %v3735
      %v3950 = vpop.f32.mrb[0].mxu0
      %v3951 = vadd.f32 0.0, %v3950
      %v3952 = vpop.f32.mrb[0].mxu0
      %3953 = vmatprep.mubr.f32.mxu0 0.0
      %3954 = vmatmul.mubr.f32.gmra.mrb[0].mxu0 %v3738
      %v3955 = vpop.f32.mrb[0].mxu0
      %v3956 = vadd.f32 0.0, %v3955
      %v3957 = vpop.f32.mrb[0].mxu0
      %3958 = vmatprep.mubr.f32.mxu0 0.0
      %3959 = vmatmul.mubr.f32.gmra.mrb[0].mxu0 %v3741
      %v3960 = vpop.f32.mrb[0].mxu0
      %v3961 = vadd.f32 0.0, %v3960
      %v3962 = vpop.f32.mrb[0].mxu0
      %3963 = vmatprep.mubr.f32.mxu0 0.0
      %3964 = vmatmul.mubr.f32.gmra.mrb[0].mxu0 %v3744
      %v3965 = vpop.f32.mrb[0].mxu0
      %v3966 = vadd.f32 0.0, %v3965
      %v3967 = vpop.f32.mrb[0].mxu0
      %3968 = vmatprep.mubr.f32.mxu0 0.0
      %3969 = vmatmul.mubr.f32.gmra.mrb[0].mxu0 %v3747
      %v3970 = vpop.f32.mrb[0].mxu0
      %v3971 = vadd.f32 0.0, %v3970
      %v3972 = vpop.f32.mrb[0].mxu0
      %3973 = vdwg.mxu0
      %v3974 = vadd.f32 %v3587, %v3816
      %v3975 = vadd.f32 %v3588, %v3821
      %v3976 = vadd.f32 %v3589, %v3826
      %v3977 = vadd.f32 %v3590, %v3831
      %v3978 = vadd.f32 %v3591, %v3836
      %v3979 = vadd.f32 %v3592, %v3841
      %v3980 = vadd.f32 %v3593, %v3846
      %v3981 = vadd.f32 %v3594, %v3851
      %v3982 = vadd.f32 %v3595, %v3856
      %v3983 = vadd.f32 %v3596, %v3861
      %v3984 = vadd.f32 %v3597, %v3866
      %v3985 = vadd.f32 %v3598, %v3871
      %v3986 = vadd.f32 %v3599, %v3876
      %v3987 = vadd.f32 %v3600, %v3881
      %v3988 = vadd.f32 %v3601, %v3886
      %v3989 = vadd.f32 %v3602, %v3891
      %v3990 = vadd.f32 %v3603, %v3896
      %v3991 = vadd.f32 %v3604, %v3901
      %v3992 = vadd.f32 %v3605, %v3906
      %v3993 = vadd.f32 %v3606, %v3911
      %v3994 = vadd.f32 %v3607, %v3916
      %v3995 = vadd.f32 %v3608, %v3921
      %v3996 = vadd.f32 %v3609, %v3926
      %v3997 = vadd.f32 %v3610, %v3931
      %v3998 = vadd.f32 %v3611, %v3936
      %v3999 = vadd.f32 %v3612, %v3941
      %v4000 = vadd.f32 %v3613, %v3946
      %v4001 = vadd.f32 %v3614, %v3951
      %v4002 = vadd.f32 %v3615, %v3956
      %v4003 = vadd.f32 %v3616, %v3961
      %v4004 = vadd.f32 %v3617, %v3966
      %v4005 = vadd.f32 %v3618, %v3971
      %v4006 = vld [vmem:[%s3231 + $0x2] sm:$0xff]
      %v4007 = vld [vmem:[%s3231 + $0xa] sm:$0xff]
      %v4008 = vld [vmem:[%s3231 + $0x1a] sm:$0xff]
      %v4009 = vld [vmem:[%s3231 + $0x22] sm:$0xff]
      %v4010 = vld [vmem:[%s3231 + $0x32] sm:$0xff]
      %v4011 = vld [vmem:[%s3231 + $0x3a] sm:$0xff]
      %v4012 = vld [vmem:[%s3231 + $0x4a] sm:$0xff]
      %v4013 = vld [vmem:[%s3231 + $0x52] sm:$0xff]
      %v4014 = vld [vmem:[%s3231 + $0x62] sm:$0xff]
      %v4015 = vld [vmem:[%s3231 + $0x6a] sm:$0xff]
      %v4016 = vld [vmem:[%s3231 + $0x7a] sm:$0xff]
      %v4017 = vld [vmem:[%s3231 + $0x82] sm:$0xff]
      %v4018 = vld [vmem:[%s3231 + $0x92] sm:$0xff]
      %v4019 = vld [vmem:[%s3231 + $0x9a] sm:$0xff]
      %v4020 = vld [vmem:[%s3231 + $0xaa] sm:$0xff]
      %v4021 = vld [vmem:[%s3231 + $0xb2] sm:$0xff]
      %v4022 = vld [vmem:[%s3231 + $0xc2] sm:$0xff]
      %v4023 = vld [vmem:[%s3231 + $0xca] sm:$0xff]
      %v4024 = vld [vmem:[%s3231 + $0xda] sm:$0xff]
      %v4025 = vld [vmem:[%s3231 + $0xe2] sm:$0xff]
      %v4026 = vld [vmem:[%s3231 + $0xf2] sm:$0xff]
      %v4027 = vld [vmem:[%s3231 + $0xfa] sm:$0xff]
      %v4028 = vld [vmem:[%s3231 + $0x10a] sm:$0xff]
      %v4029 = vld [vmem:[%s3231 + $0x112] sm:$0xff]
      %v4030 = vld [vmem:[%s3231 + $0x122] sm:$0xff]
      %v4031 = vld [vmem:[%s3231 + $0x12a] sm:$0xff]
      %v4032 = vld [vmem:[%s3231 + $0x13a] sm:$0xff]
      %v4033 = vld [vmem:[%s3231 + $0x142] sm:$0xff]
      %v4034 = vld [vmem:[%s3231 + $0x152] sm:$0xff]
      %v4035 = vld [vmem:[%s3231 + $0x15a] sm:$0xff]
      %v4036 = vld [vmem:[%s3231 + $0x16a] sm:$0xff]
      %v4037 = vld [vmem:[%s3231 + $0x172] sm:$0xff]
      %s4038 = scalar_lea.vmem %s1, 80
      %v4039 = vld [vmem:[%s4038] sm:$0xff]
      %v4041 = vsel %vm265, %v4006, 0
      %v4044 = vsel %vm265, %v4007, 0
      %v4047 = vsel %vm265, %v4008, 0
      %v4050 = vsel %vm265, %v4009, 0
      %v4053 = vsel %vm265, %v4010, 0
      %v4056 = vsel %vm265, %v4011, 0
      %v4059 = vsel %vm265, %v4012, 0
      %v4062 = vsel %vm265, %v4013, 0
      %v4065 = vsel %vm265, %v4014, 0
      %v4068 = vsel %vm265, %v4015, 0
      %v4071 = vsel %vm265, %v4016, 0
      %v4074 = vsel %vm265, %v4017, 0
      %v4077 = vsel %vm265, %v4018, 0
      %v4080 = vsel %vm265, %v4019, 0
      %v4083 = vsel %vm265, %v4020, 0
      %v4086 = vsel %vm265, %v4021, 0
      %v4089 = vsel %vm265, %v4022, 0
      %v4092 = vsel %vm265, %v4023, 0
      %v4095 = vsel %vm265, %v4024, 0
      %v4098 = vsel %vm265, %v4025, 0
      %v4101 = vsel %vm265, %v4026, 0
      %v4104 = vsel %vm265, %v4027, 0
      %v4107 = vsel %vm265, %v4028, 0
      %v4110 = vsel %vm265, %v4029, 0
      %v4113 = vsel %vm265, %v4030, 0
      %v4116 = vsel %vm265, %v4031, 0
      %v4119 = vsel %vm265, %v4032, 0
      %v4122 = vsel %vm265, %v4033, 0
      %v4125 = vsel %vm265, %v4034, 0
      %v4128 = vsel %vm265, %v4035, 0
      %v4131 = vsel %vm265, %v4036, 0
      %v4134 = vsel %vm265, %v4037, 0
      %4136 = vmatprep.subr.mxu0 0.0
      %4137 = vmatpush1.msra.mxu0 %v4039
      %4138 = vmatprep.subr.mxu0 0.0
      %4139 = vmatpush1.msra.mxu0 0.0
      %4140 = vmatprep.subr.mxu0 0.0
      %4141 = vmatpush1.msra.mxu0 0.0
      %4142 = vmatprep.subr.mxu0 0.0
      %4143 = vmatpush1.msra.mxu0 0.0
      %4144 = vmatprep.subr.mxu0 0.0
      %4145 = vmatpush1.msra.mxu0 0.0
      %4146 = vmatprep.subr.mxu0 0.0
      %4147 = vmatpush1.msra.mxu0 0.0
      %4148 = vmatprep.subr.mxu0 0.0
      %4149 = vmatpush1.msra.mxu0 0.0
      %4150 = vmatprep.subr.mxu0 0.0
      %4151 = vmatpush1.msra.mxu0 0.0
      %4152 = vmatprep.subr.mxu0 0.0
      %4153 = vmatpush1.msra.mxu0 0.0
      %4154 = vmatprep.subr.mxu0 0.0
      %4155 = vmatpush1.msra.mxu0 0.0
      %4156 = vmatprep.subr.mxu0 0.0
      %4157 = vmatpush1.msra.mxu0 0.0
      %4158 = vmatprep.subr.mxu0 0.0
      %4159 = vmatpush1.msra.mxu0 0.0
      %4160 = vmatprep.subr.mxu0 0.0
      %4161 = vmatpush1.msra.mxu0 0.0
      %4162 = vmatprep.subr.mxu0 0.0
      %4163 = vmatpush1.msra.mxu0 0.0
      %4164 = vmatprep.subr.mxu0 0.0
      %4165 = vmatpush1.msra.mxu0 0.0
      %4166 = vmatprep.subr.mxu0 0.0
      %4167 = vmatpush1.msra.mxu0 0.0
      %4168 = vmatprep.subr.mxu0 0.0
      %4169 = vmatpush1.msra.mxu0 0.0
      %4170 = vmatprep.subr.mxu0 0.0
      %4171 = vmatpush1.msra.mxu0 0.0
      %4172 = vmatprep.subr.mxu0 0.0
      %4173 = vmatpush1.msra.mxu0 0.0
      %4174 = vmatprep.subr.mxu0 0.0
      %4175 = vmatpush1.msra.mxu0 0.0
      %4176 = vmatprep.subr.mxu0 0.0
      %4177 = vmatpush1.msra.mxu0 0.0
      %4178 = vmatprep.subr.mxu0 0.0
      %4179 = vmatpush1.msra.mxu0 0.0
      %4180 = vmatprep.subr.mxu0 0.0
      %4181 = vmatpush1.msra.mxu0 0.0
      %4182 = vmatprep.subr.mxu0 0.0
      %4183 = vmatpush1.msra.mxu0 0.0
      %4184 = vmatprep.subr.mxu0 0.0
      %4185 = vmatpush1.msra.mxu0 0.0
      %4186 = vmatprep.subr.mxu0 0.0
      %4187 = vmatpush1.msra.mxu0 0.0
      %4188 = vmatprep.subr.mxu0 0.0
      %4189 = vmatpush1.msra.mxu0 0.0
      %4190 = vmatprep.subr.mxu0 0.0
      %4191 = vmatpush1.msra.mxu0 0.0
      %4192 = vmatprep.subr.mxu0 0.0
      %4193 = vmatpush1.msra.mxu0 0.0
      %4194 = vmatprep.subr.mxu0 0.0
      %4195 = vmatpush1.msra.mxu0 0.0
      %4196 = vmatprep.subr.mxu0 0.0
      %4197 = vmatpush1.msra.mxu0 0.0
      %4198 = vmatprep.subr.mxu0 0.0
      %4199 = vmatpush1.msra.mxu0 0.0
      %4200 = vmatprep.mubr.f32.mxu0 0.0
      %4201 = vmatmul.mubr.f32.gmra.mrb[0].mxu0 %v4041
      %v4202 = vpop.f32.mrb[0].mxu0
      %v4203 = vadd.f32 0.0, %v4202
      %v4204 = vpop.f32.mrb[0].mxu0
      %4205 = vmatprep.mubr.f32.mxu0 0.0
      %4206 = vmatmul.mubr.f32.gmra.mrb[0].mxu0 %v4044
      %v4207 = vpop.f32.mrb[0].mxu0
      %v4208 = vadd.f32 0.0, %v4207
      %v4209 = vpop.f32.mrb[0].mxu0
      %4210 = vmatprep.mubr.f32.mxu0 0.0
      %4211 = vmatmul.mubr.f32.gmra.mrb[0].mxu0 %v4047
      %v4212 = vpop.f32.mrb[0].mxu0
      %v4213 = vadd.f32 0.0, %v4212
      %v4214 = vpop.f32.mrb[0].mxu0
      %4215 = vmatprep.mubr.f32.mxu0 0.0
      %4216 = vmatmul.mubr.f32.gmra.mrb[0].mxu0 %v4050
      %v4217 = vpop.f32.mrb[0].mxu0
      %v4218 = vadd.f32 0.0, %v4217
      %v4219 = vpop.f32.mrb[0].mxu0
      %4220 = vmatprep.mubr.f32.mxu0 0.0
      %4221 = vmatmul.mubr.f32.gmra.mrb[0].mxu0 %v4053
      %v4222 = vpop.f32.mrb[0].mxu0
      %v4223 = vadd.f32 0.0, %v4222
      %v4224 = vpop.f32.mrb[0].mxu0
      %4225 = vmatprep.mubr.f32.mxu0 0.0
      %4226 = vmatmul.mubr.f32.gmra.mrb[0].mxu0 %v4056
      %v4227 = vpop.f32.mrb[0].mxu0
      %v4228 = vadd.f32 0.0, %v4227
      %v4229 = vpop.f32.mrb[0].mxu0
      %4230 = vmatprep.mubr.f32.mxu0 0.0
      %4231 = vmatmul.mubr.f32.gmra.mrb[0].mxu0 %v4059
      %v4232 = vpop.f32.mrb[0].mxu0
      %v4233 = vadd.f32 0.0, %v4232
      %v4234 = vpop.f32.mrb[0].mxu0
      %4235 = vmatprep.mubr.f32.mxu0 0.0
      %4236 = vmatmul.mubr.f32.gmra.mrb[0].mxu0 %v4062
      %v4237 = vpop.f32.mrb[0].mxu0
      %v4238 = vadd.f32 0.0, %v4237
      %v4239 = vpop.f32.mrb[0].mxu0
      %4240 = vmatprep.mubr.f32.mxu0 0.0
      %4241 = vmatmul.mubr.f32.gmra.mrb[0].mxu0 %v4065
      %v4242 = vpop.f32.mrb[0].mxu0
      %v4243 = vadd.f32 0.0, %v4242
      %v4244 = vpop.f32.mrb[0].mxu0
      %4245 = vmatprep.mubr.f32.mxu0 0.0
      %4246 = vmatmul.mubr.f32.gmra.mrb[0].mxu0 %v4068
      %v4247 = vpop.f32.mrb[0].mxu0
      %v4248 = vadd.f32 0.0, %v4247
      %v4249 = vpop.f32.mrb[0].mxu0
      %4250 = vmatprep.mubr.f32.mxu0 0.0
      %4251 = vmatmul.mubr.f32.gmra.mrb[0].mxu0 %v4071
      %v4252 = vpop.f32.mrb[0].mxu0
      %v4253 = vadd.f32 0.0, %v4252
      %v4254 = vpop.f32.mrb[0].mxu0
      %4255 = vmatprep.mubr.f32.mxu0 0.0
      %4256 = vmatmul.mubr.f32.gmra.mrb[0].mxu0 %v4074
      %v4257 = vpop.f32.mrb[0].mxu0
      %v4258 = vadd.f32 0.0, %v4257
      %v4259 = vpop.f32.mrb[0].mxu0
      %4260 = vmatprep.mubr.f32.mxu0 0.0
      %4261 = vmatmul.mubr.f32.gmra.mrb[0].mxu0 %v4077
      %v4262 = vpop.f32.mrb[0].mxu0
      %v4263 = vadd.f32 0.0, %v4262
      %v4264 = vpop.f32.mrb[0].mxu0
      %4265 = vmatprep.mubr.f32.mxu0 0.0
      %4266 = vmatmul.mubr.f32.gmra.mrb[0].mxu0 %v4080
      %v4267 = vpop.f32.mrb[0].mxu0
      %v4268 = vadd.f32 0.0, %v4267
      %v4269 = vpop.f32.mrb[0].mxu0
      %4270 = vmatprep.mubr.f32.mxu0 0.0
      %4271 = vmatmul.mubr.f32.gmra.mrb[0].mxu0 %v4083
      %v4272 = vpop.f32.mrb[0].mxu0
      %v4273 = vadd.f32 0.0, %v4272
      %v4274 = vpop.f32.mrb[0].mxu0
      %4275 = vmatprep.mubr.f32.mxu0 0.0
      %4276 = vmatmul.mubr.f32.gmra.mrb[0].mxu0 %v4086
      %v4277 = vpop.f32.mrb[0].mxu0
      %v4278 = vadd.f32 0.0, %v4277
      %v4279 = vpop.f32.mrb[0].mxu0
      %4280 = vmatprep.mubr.f32.mxu0 0.0
      %4281 = vmatmul.mubr.f32.gmra.mrb[0].mxu0 %v4089
      %v4282 = vpop.f32.mrb[0].mxu0
      %v4283 = vadd.f32 0.0, %v4282
      %v4284 = vpop.f32.mrb[0].mxu0
      %4285 = vmatprep.mubr.f32.mxu0 0.0
      %4286 = vmatmul.mubr.f32.gmra.mrb[0].mxu0 %v4092
      %v4287 = vpop.f32.mrb[0].mxu0
      %v4288 = vadd.f32 0.0, %v4287
      %v4289 = vpop.f32.mrb[0].mxu0
      %4290 = vmatprep.mubr.f32.mxu0 0.0
      %4291 = vmatmul.mubr.f32.gmra.mrb[0].mxu0 %v4095
      %v4292 = vpop.f32.mrb[0].mxu0
      %v4293 = vadd.f32 0.0, %v4292
      %v4294 = vpop.f32.mrb[0].mxu0
      %4295 = vmatprep.mubr.f32.mxu0 0.0
      %4296 = vmatmul.mubr.f32.gmra.mrb[0].mxu0 %v4098
      %v4297 = vpop.f32.mrb[0].mxu0
      %v4298 = vadd.f32 0.0, %v4297
      %v4299 = vpop.f32.mrb[0].mxu0
      %4300 = vmatprep.mubr.f32.mxu0 0.0
      %4301 = vmatmul.mubr.f32.gmra.mrb[0].mxu0 %v4101
      %v4302 = vpop.f32.mrb[0].mxu0
      %v4303 = vadd.f32 0.0, %v4302
      %v4304 = vpop.f32.mrb[0].mxu0
      %4305 = vmatprep.mubr.f32.mxu0 0.0
      %4306 = vmatmul.mubr.f32.gmra.mrb[0].mxu0 %v4104
      %v4307 = vpop.f32.mrb[0].mxu0
      %v4308 = vadd.f32 0.0, %v4307
      %v4309 = vpop.f32.mrb[0].mxu0
      %4310 = vmatprep.mubr.f32.mxu0 0.0
      %4311 = vmatmul.mubr.f32.gmra.mrb[0].mxu0 %v4107
      %v4312 = vpop.f32.mrb[0].mxu0
      %v4313 = vadd.f32 0.0, %v4312
      %v4314 = vpop.f32.mrb[0].mxu0
      %4315 = vmatprep.mubr.f32.mxu0 0.0
      %4316 = vmatmul.mubr.f32.gmra.mrb[0].mxu0 %v4110
      %v4317 = vpop.f32.mrb[0].mxu0
      %v4318 = vadd.f32 0.0, %v4317
      %v4319 = vpop.f32.mrb[0].mxu0
      %4320 = vmatprep.mubr.f32.mxu0 0.0
      %4321 = vmatmul.mubr.f32.gmra.mrb[0].mxu0 %v4113
      %v4322 = vpop.f32.mrb[0].mxu0
      %v4323 = vadd.f32 0.0, %v4322
      %v4324 = vpop.f32.mrb[0].mxu0
      %4325 = vmatprep.mubr.f32.mxu0 0.0
      %4326 = vmatmul.mubr.f32.gmra.mrb[0].mxu0 %v4116
      %v4327 = vpop.f32.mrb[0].mxu0
      %v4328 = vadd.f32 0.0, %v4327
      %v4329 = vpop.f32.mrb[0].mxu0
      %4330 = vmatprep.mubr.f32.mxu0 0.0
      %4331 = vmatmul.mubr.f32.gmra.mrb[0].mxu0 %v4119
      %v4332 = vpop.f32.mrb[0].mxu0
      %v4333 = vadd.f32 0.0, %v4332
      %v4334 = vpop.f32.mrb[0].mxu0
      %4335 = vmatprep.mubr.f32.mxu0 0.0
      %4336 = vmatmul.mubr.f32.gmra.mrb[0].mxu0 %v4122
      %v4337 = vpop.f32.mrb[0].mxu0
      %v4338 = vadd.f32 0.0, %v4337
      %v4339 = vpop.f32.mrb[0].mxu0
      %4340 = vmatprep.mubr.f32.mxu0 0.0
      %4341 = vmatmul.mubr.f32.gmra.mrb[0].mxu0 %v4125
      %v4342 = vpop.f32.mrb[0].mxu0
      %v4343 = vadd.f32 0.0, %v4342
      %v4344 = vpop.f32.mrb[0].mxu0
      %4345 = vmatprep.mubr.f32.mxu0 0.0
      %4346 = vmatmul.mubr.f32.gmra.mrb[0].mxu0 %v4128
      %v4347 = vpop.f32.mrb[0].mxu0
      %v4348 = vadd.f32 0.0, %v4347
      %v4349 = vpop.f32.mrb[0].mxu0
      %4350 = vmatprep.mubr.f32.mxu0 0.0
      %4351 = vmatmul.mubr.f32.gmra.mrb[0].mxu0 %v4131
      %v4352 = vpop.f32.mrb[0].mxu0
      %v4353 = vadd.f32 0.0, %v4352
      %v4354 = vpop.f32.mrb[0].mxu0
      %4355 = vmatprep.mubr.f32.mxu0 0.0
      %4356 = vmatmul.mubr.f32.gmra.mrb[0].mxu0 %v4134
      %v4357 = vpop.f32.mrb[0].mxu0
      %v4358 = vadd.f32 0.0, %v4357
      %v4359 = vpop.f32.mrb[0].mxu0
      %4360 = vdwg.mxu0
      %v4361 = vadd.f32 %v3974, %v4203
      %v4362 = vadd.f32 %v3975, %v4208
      %v4363 = vadd.f32 %v3976, %v4213
      %v4364 = vadd.f32 %v3977, %v4218
      %v4365 = vadd.f32 %v3978, %v4223
      %v4366 = vadd.f32 %v3979, %v4228
      %v4367 = vadd.f32 %v3980, %v4233
      %v4368 = vadd.f32 %v3981, %v4238
      %v4369 = vadd.f32 %v3982, %v4243
      %v4370 = vadd.f32 %v3983, %v4248
      %v4371 = vadd.f32 %v3984, %v4253
      %v4372 = vadd.f32 %v3985, %v4258
      %v4373 = vadd.f32 %v3986, %v4263
      %v4374 = vadd.f32 %v3987, %v4268
      %v4375 = vadd.f32 %v3988, %v4273
      %v4376 = vadd.f32 %v3989, %v4278
      %v4377 = vadd.f32 %v3990, %v4283
      %v4378 = vadd.f32 %v3991, %v4288
      %v4379 = vadd.f32 %v3992, %v4293
      %v4380 = vadd.f32 %v3993, %v4298
      %v4381 = vadd.f32 %v3994, %v4303
      %v4382 = vadd.f32 %v3995, %v4308
      %v4383 = vadd.f32 %v3996, %v4313
      %v4384 = vadd.f32 %v3997, %v4318
      %v4385 = vadd.f32 %v3998, %v4323
      %v4386 = vadd.f32 %v3999, %v4328
      %v4387 = vadd.f32 %v4000, %v4333
      %v4388 = vadd.f32 %v4001, %v4338
      %v4389 = vadd.f32 %v4002, %v4343
      %v4390 = vadd.f32 %v4003, %v4348
      %v4391 = vadd.f32 %v4004, %v4353
      %v4392 = vadd.f32 %v4005, %v4358
      %v4393 = vld [vmem:[%s3231 + $0x3] sm:$0xff]
      %v4394 = vld [vmem:[%s3231 + $0xb] sm:$0xff]
      %v4395 = vld [vmem:[%s3231 + $0x1b] sm:$0xff]
      %v4396 = vld [vmem:[%s3231 + $0x23] sm:$0xff]
      %v4397 = vld [vmem:[%s3231 + $0x33] sm:$0xff]
      %v4398 = vld [vmem:[%s3231 + $0x3b] sm:$0xff]
      %v4399 = vld [vmem:[%s3231 + $0x4b] sm:$0xff]
      %v4400 = vld [vmem:[%s3231 + $0x53] sm:$0xff]
      %v4401 = vld [vmem:[%s3231 + $0x63] sm:$0xff]
      %v4402 = vld [vmem:[%s3231 + $0x6b] sm:$0xff]
      %v4403 = vld [vmem:[%s3231 + $0x7b] sm:$0xff]
      %v4404 = vld [vmem:[%s3231 + $0x83] sm:$0xff]
      %v4405 = vld [vmem:[%s3231 + $0x93] sm:$0xff]
      %v4406 = vld [vmem:[%s3231 + $0x9b] sm:$0xff]
      %v4407 = vld [vmem:[%s3231 + $0xab] sm:$0xff]
      %v4408 = vld [vmem:[%s3231 + $0xb3] sm:$0xff]
      %v4409 = vld [vmem:[%s3231 + $0xc3] sm:$0xff]
      %v4410 = vld [vmem:[%s3231 + $0xcb] sm:$0xff]
      %v4411 = vld [vmem:[%s3231 + $0xdb] sm:$0xff]
      %v4412 = vld [vmem:[%s3231 + $0xe3] sm:$0xff]
      %v4413 = vld [vmem:[%s3231 + $0xf3] sm:$0xff]
      %v4414 = vld [vmem:[%s3231 + $0xfb] sm:$0xff]
      %v4415 = vld [vmem:[%s3231 + $0x10b] sm:$0xff]
      %v4416 = vld [vmem:[%s3231 + $0x113] sm:$0xff]
      %v4417 = vld [vmem:[%s3231 + $0x123] sm:$0xff]
      %v4418 = vld [vmem:[%s3231 + $0x12b] sm:$0xff]
      %v4419 = vld [vmem:[%s3231 + $0x13b] sm:$0xff]
      %v4420 = vld [vmem:[%s3231 + $0x143] sm:$0xff]
      %v4421 = vld [vmem:[%s3231 + $0x153] sm:$0xff]
      %v4422 = vld [vmem:[%s3231 + $0x15b] sm:$0xff]
      %v4423 = vld [vmem:[%s3231 + $0x16b] sm:$0xff]
      %v4424 = vld [vmem:[%s3231 + $0x173] sm:$0xff]
      %s4425 = scalar_lea.vmem %s1, 88
      %v4426 = vld [vmem:[%s4425] sm:$0xff]
      %v4428 = vsel %vm265, %v4393, 0
      %v4431 = vsel %vm265, %v4394, 0
      %v4434 = vsel %vm265, %v4395, 0
      %v4437 = vsel %vm265, %v4396, 0
      %v4440 = vsel %vm265, %v4397, 0
      %v4443 = vsel %vm265, %v4398, 0
      %v4446 = vsel %vm265, %v4399, 0
      %v4449 = vsel %vm265, %v4400, 0
      %v4452 = vsel %vm265, %v4401, 0
      %v4455 = vsel %vm265, %v4402, 0
      %v4458 = vsel %vm265, %v4403, 0
      %v4461 = vsel %vm265, %v4404, 0
      %v4464 = vsel %vm265, %v4405, 0
      %v4467 = vsel %vm265, %v4406, 0
      %v4470 = vsel %vm265, %v4407, 0
      %v4473 = vsel %vm265, %v4408, 0
      %v4476 = vsel %vm265, %v4409, 0
      %v4479 = vsel %vm265, %v4410, 0
      %v4482 = vsel %vm265, %v4411, 0
      %v4485 = vsel %vm265, %v4412, 0
      %v4488 = vsel %vm265, %v4413, 0
      %v4491 = vsel %vm265, %v4414, 0
      %v4494 = vsel %vm265, %v4415, 0
      %v4497 = vsel %vm265, %v4416, 0
      %v4500 = vsel %vm265, %v4417, 0
      %v4503 = vsel %vm265, %v4418, 0
      %v4506 = vsel %vm265, %v4419, 0
      %v4509 = vsel %vm265, %v4420, 0
      %v4512 = vsel %vm265, %v4421, 0
      %v4515 = vsel %vm265, %v4422, 0
      %v4518 = vsel %vm265, %v4423, 0
      %v4521 = vsel %vm265, %v4424, 0
      %4523 = vmatprep.subr.mxu0 0.0
      %4524 = vmatpush1.msra.mxu0 %v4426
      %4525 = vmatprep.subr.mxu0 0.0
      %4526 = vmatpush1.msra.mxu0 0.0
      %4527 = vmatprep.subr.mxu0 0.0
      %4528 = vmatpush1.msra.mxu0 0.0
      %4529 = vmatprep.subr.mxu0 0.0
      %4530 = vmatpush1.msra.mxu0 0.0
      %4531 = vmatprep.subr.mxu0 0.0
      %4532 = vmatpush1.msra.mxu0 0.0
      %4533 = vmatprep.subr.mxu0 0.0
      %4534 = vmatpush1.msra.mxu0 0.0
      %4535 = vmatprep.subr.mxu0 0.0
      %4536 = vmatpush1.msra.mxu0 0.0
      %4537 = vmatprep.subr.mxu0 0.0
      %4538 = vmatpush1.msra.mxu0 0.0
      %4539 = vmatprep.subr.mxu0 0.0
      %4540 = vmatpush1.msra.mxu0 0.0
      %4541 = vmatprep.subr.mxu0 0.0
      %4542 = vmatpush1.msra.mxu0 0.0
      %4543 = vmatprep.subr.mxu0 0.0
      %4544 = vmatpush1.msra.mxu0 0.0
      %4545 = vmatprep.subr.mxu0 0.0
      %4546 = vmatpush1.msra.mxu0 0.0
      %4547 = vmatprep.subr.mxu0 0.0
      %4548 = vmatpush1.msra.mxu0 0.0
      %4549 = vmatprep.subr.mxu0 0.0
      %4550 = vmatpush1.msra.mxu0 0.0
      %4551 = vmatprep.subr.mxu0 0.0
      %4552 = vmatpush1.msra.mxu0 0.0
      %4553 = vmatprep.subr.mxu0 0.0
      %4554 = vmatpush1.msra.mxu0 0.0
      %4555 = vmatprep.subr.mxu0 0.0
      %4556 = vmatpush1.msra.mxu0 0.0
      %4557 = vmatprep.subr.mxu0 0.0
      %4558 = vmatpush1.msra.mxu0 0.0
      %4559 = vmatprep.subr.mxu0 0.0
      %4560 = vmatpush1.msra.mxu0 0.0
      %4561 = vmatprep.subr.mxu0 0.0
      %4562 = vmatpush1.msra.mxu0 0.0
      %4563 = vmatprep.subr.mxu0 0.0
      %4564 = vmatpush1.msra.mxu0 0.0
      %4565 = vmatprep.subr.mxu0 0.0
      %4566 = vmatpush1.msra.mxu0 0.0
      %4567 = vmatprep.subr.mxu0 0.0
      %4568 = vmatpush1.msra.mxu0 0.0
      %4569 = vmatprep.subr.mxu0 0.0
      %4570 = vmatpush1.msra.mxu0 0.0
      %4571 = vmatprep.subr.mxu0 0.0
      %4572 = vmatpush1.msra.mxu0 0.0
      %4573 = vmatprep.subr.mxu0 0.0
      %4574 = vmatpush1.msra.mxu0 0.0
      %4575 = vmatprep.subr.mxu0 0.0
      %4576 = vmatpush1.msra.mxu0 0.0
      %4577 = vmatprep.subr.mxu0 0.0
      %4578 = vmatpush1.msra.mxu0 0.0
      %4579 = vmatprep.subr.mxu0 0.0
      %4580 = vmatpush1.msra.mxu0 0.0
      %4581 = vmatprep.subr.mxu0 0.0
      %4582 = vmatpush1.msra.mxu0 0.0
      %4583 = vmatprep.subr.mxu0 0.0
      %4584 = vmatpush1.msra.mxu0 0.0
      %4585 = vmatprep.subr.mxu0 0.0
      %4586 = vmatpush1.msra.mxu0 0.0
      %4587 = vmatprep.mubr.f32.mxu0 0.0
      %4588 = vmatmul.mubr.f32.gmra.mrb[0].mxu0 %v4428
      %v4589 = vpop.f32.mrb[0].mxu0
      %v4590 = vadd.f32 0.0, %v4589
      %v4591 = vpop.f32.mrb[0].mxu0
      %4592 = vmatprep.mubr.f32.mxu0 0.0
      %4593 = vmatmul.mubr.f32.gmra.mrb[0].mxu0 %v4431
      %v4594 = vpop.f32.mrb[0].mxu0
      %v4595 = vadd.f32 0.0, %v4594
      %v4596 = vpop.f32.mrb[0].mxu0
      %4597 = vmatprep.mubr.f32.mxu0 0.0
      %4598 = vmatmul.mubr.f32.gmra.mrb[0].mxu0 %v4434
      %v4599 = vpop.f32.mrb[0].mxu0
      %v4600 = vadd.f32 0.0, %v4599
      %v4601 = vpop.f32.mrb[0].mxu0
      %4602 = vmatprep.mubr.f32.mxu0 0.0
      %4603 = vmatmul.mubr.f32.gmra.mrb[0].mxu0 %v4437
      %v4604 = vpop.f32.mrb[0].mxu0
      %v4605 = vadd.f32 0.0, %v4604
      %v4606 = vpop.f32.mrb[0].mxu0
      %4607 = vmatprep.mubr.f32.mxu0 0.0
      %4608 = vmatmul.mubr.f32.gmra.mrb[0].mxu0 %v4440
      %v4609 = vpop.f32.mrb[0].mxu0
      %v4610 = vadd.f32 0.0, %v4609
      %v4611 = vpop.f32.mrb[0].mxu0
      %4612 = vmatprep.mubr.f32.mxu0 0.0
      %4613 = vmatmul.mubr.f32.gmra.mrb[0].mxu0 %v4443
      %v4614 = vpop.f32.mrb[0].mxu0
      %v4615 = vadd.f32 0.0, %v4614
      %v4616 = vpop.f32.mrb[0].mxu0
      %4617 = vmatprep.mubr.f32.mxu0 0.0
      %4618 = vmatmul.mubr.f32.gmra.mrb[0].mxu0 %v4446
      %v4619 = vpop.f32.mrb[0].mxu0
      %v4620 = vadd.f32 0.0, %v4619
      %v4621 = vpop.f32.mrb[0].mxu0
      %4622 = vmatprep.mubr.f32.mxu0 0.0
      %4623 = vmatmul.mubr.f32.gmra.mrb[0].mxu0 %v4449
      %v4624 = vpop.f32.mrb[0].mxu0
      %v4625 = vadd.f32 0.0, %v4624
      %v4626 = vpop.f32.mrb[0].mxu0
      %4627 = vmatprep.mubr.f32.mxu0 0.0
      %4628 = vmatmul.mubr.f32.gmra.mrb[0].mxu0 %v4452
      %v4629 = vpop.f32.mrb[0].mxu0
      %v4630 = vadd.f32 0.0, %v4629
      %v4631 = vpop.f32.mrb[0].mxu0
      %4632 = vmatprep.mubr.f32.mxu0 0.0
      %4633 = vmatmul.mubr.f32.gmra.mrb[0].mxu0 %v4455
      %v4634 = vpop.f32.mrb[0].mxu0
      %v4635 = vadd.f32 0.0, %v4634
      %v4636 = vpop.f32.mrb[0].mxu0
      %4637 = vmatprep.mubr.f32.mxu0 0.0
      %4638 = vmatmul.mubr.f32.gmra.mrb[0].mxu0 %v4458
      %v4639 = vpop.f32.mrb[0].mxu0
      %v4640 = vadd.f32 0.0, %v4639
      %v4641 = vpop.f32.mrb[0].mxu0
      %4642 = vmatprep.mubr.f32.mxu0 0.0
      %4643 = vmatmul.mubr.f32.gmra.mrb[0].mxu0 %v4461
      %v4644 = vpop.f32.mrb[0].mxu0
      %v4645 = vadd.f32 0.0, %v4644
      %v4646 = vpop.f32.mrb[0].mxu0
      %4647 = vmatprep.mubr.f32.mxu0 0.0
      %4648 = vmatmul.mubr.f32.gmra.mrb[0].mxu0 %v4464
      %v4649 = vpop.f32.mrb[0].mxu0
      %v4650 = vadd.f32 0.0, %v4649
      %v4651 = vpop.f32.mrb[0].mxu0
      %4652 = vmatprep.mubr.f32.mxu0 0.0
      %4653 = vmatmul.mubr.f32.gmra.mrb[0].mxu0 %v4467
      %v4654 = vpop.f32.mrb[0].mxu0
      %v4655 = vadd.f32 0.0, %v4654
      %v4656 = vpop.f32.mrb[0].mxu0
      %4657 = vmatprep.mubr.f32.mxu0 0.0
      %4658 = vmatmul.mubr.f32.gmra.mrb[0].mxu0 %v4470
      %v4659 = vpop.f32.mrb[0].mxu0
      %v4660 = vadd.f32 0.0, %v4659
      %v4661 = vpop.f32.mrb[0].mxu0
      %4662 = vmatprep.mubr.f32.mxu0 0.0
      %4663 = vmatmul.mubr.f32.gmra.mrb[0].mxu0 %v4473
      %v4664 = vpop.f32.mrb[0].mxu0
      %v4665 = vadd.f32 0.0, %v4664
      %v4666 = vpop.f32.mrb[0].mxu0
      %4667 = vmatprep.mubr.f32.mxu0 0.0
      %4668 = vmatmul.mubr.f32.gmra.mrb[0].mxu0 %v4476
      %v4669 = vpop.f32.mrb[0].mxu0
      %v4670 = vadd.f32 0.0, %v4669
      %v4671 = vpop.f32.mrb[0].mxu0
      %4672 = vmatprep.mubr.f32.mxu0 0.0
      %4673 = vmatmul.mubr.f32.gmra.mrb[0].mxu0 %v4479
      %v4674 = vpop.f32.mrb[0].mxu0
      %v4675 = vadd.f32 0.0, %v4674
      %v4676 = vpop.f32.mrb[0].mxu0
      %4677 = vmatprep.mubr.f32.mxu0 0.0
      %4678 = vmatmul.mubr.f32.gmra.mrb[0].mxu0 %v4482
      %v4679 = vpop.f32.mrb[0].mxu0
      %v4680 = vadd.f32 0.0, %v4679
      %v4681 = vpop.f32.mrb[0].mxu0
      %4682 = vmatprep.mubr.f32.mxu0 0.0
      %4683 = vmatmul.mubr.f32.gmra.mrb[0].mxu0 %v4485
      %v4684 = vpop.f32.mrb[0].mxu0
      %v4685 = vadd.f32 0.0, %v4684
      %v4686 = vpop.f32.mrb[0].mxu0
      %4687 = vmatprep.mubr.f32.mxu0 0.0
      %4688 = vmatmul.mubr.f32.gmra.mrb[0].mxu0 %v4488
      %v4689 = vpop.f32.mrb[0].mxu0
      %v4690 = vadd.f32 0.0, %v4689
      %v4691 = vpop.f32.mrb[0].mxu0
      %4692 = vmatprep.mubr.f32.mxu0 0.0
      %4693 = vmatmul.mubr.f32.gmra.mrb[0].mxu0 %v4491
      %v4694 = vpop.f32.mrb[0].mxu0
      %v4695 = vadd.f32 0.0, %v4694
      %v4696 = vpop.f32.mrb[0].mxu0
      %4697 = vmatprep.mubr.f32.mxu0 0.0
      %4698 = vmatmul.mubr.f32.gmra.mrb[0].mxu0 %v4494
      %v4699 = vpop.f32.mrb[0].mxu0
      %v4700 = vadd.f32 0.0, %v4699
      %v4701 = vpop.f32.mrb[0].mxu0
      %4702 = vmatprep.mubr.f32.mxu0 0.0
      %4703 = vmatmul.mubr.f32.gmra.mrb[0].mxu0 %v4497
      %v4704 = vpop.f32.mrb[0].mxu0
      %v4705 = vadd.f32 0.0, %v4704
      %v4706 = vpop.f32.mrb[0].mxu0
      %4707 = vmatprep.mubr.f32.mxu0 0.0
      %4708 = vmatmul.mubr.f32.gmra.mrb[0].mxu0 %v4500
      %v4709 = vpop.f32.mrb[0].mxu0
      %v4710 = vadd.f32 0.0, %v4709
      %v4711 = vpop.f32.mrb[0].mxu0
      %4712 = vmatprep.mubr.f32.mxu0 0.0
      %4713 = vmatmul.mubr.f32.gmra.mrb[0].mxu0 %v4503
      %v4714 = vpop.f32.mrb[0].mxu0
      %v4715 = vadd.f32 0.0, %v4714
      %v4716 = vpop.f32.mrb[0].mxu0
      %4717 = vmatprep.mubr.f32.mxu0 0.0
      %4718 = vmatmul.mubr.f32.gmra.mrb[0].mxu0 %v4506
      %v4719 = vpop.f32.mrb[0].mxu0
      %v4720 = vadd.f32 0.0, %v4719
      %v4721 = vpop.f32.mrb[0].mxu0
      %4722 = vmatprep.mubr.f32.mxu0 0.0
      %4723 = vmatmul.mubr.f32.gmra.mrb[0].mxu0 %v4509
      %v4724 = vpop.f32.mrb[0].mxu0
      %v4725 = vadd.f32 0.0, %v4724
      %v4726 = vpop.f32.mrb[0].mxu0
      %4727 = vmatprep.mubr.f32.mxu0 0.0
      %4728 = vmatmul.mubr.f32.gmra.mrb[0].mxu0 %v4512
      %v4729 = vpop.f32.mrb[0].mxu0
      %v4730 = vadd.f32 0.0, %v4729
      %v4731 = vpop.f32.mrb[0].mxu0
      %4732 = vmatprep.mubr.f32.mxu0 0.0
      %4733 = vmatmul.mubr.f32.gmra.mrb[0].mxu0 %v4515
      %v4734 = vpop.f32.mrb[0].mxu0
      %v4735 = vadd.f32 0.0, %v4734
      %v4736 = vpop.f32.mrb[0].mxu0
      %4737 = vmatprep.mubr.f32.mxu0 0.0
      %4738 = vmatmul.mubr.f32.gmra.mrb[0].mxu0 %v4518
      %v4739 = vpop.f32.mrb[0].mxu0
      %v4740 = vadd.f32 0.0, %v4739
      %v4741 = vpop.f32.mrb[0].mxu0
      %4742 = vmatprep.mubr.f32.mxu0 0.0
      %4743 = vmatmul.mubr.f32.gmra.mrb[0].mxu0 %v4521
      %v4744 = vpop.f32.mrb[0].mxu0
      %v4745 = vadd.f32 0.0, %v4744
      %v4746 = vpop.f32.mrb[0].mxu0
      %4747 = vdwg.mxu0
      %v4748 = vadd.f32 %v4361, %v4590
      %v4749 = vadd.f32 %v4362, %v4595
      %v4750 = vadd.f32 %v4363, %v4600
      %v4751 = vadd.f32 %v4364, %v4605
      %v4752 = vadd.f32 %v4365, %v4610
      %v4753 = vadd.f32 %v4366, %v4615
      %v4754 = vadd.f32 %v4367, %v4620
      %v4755 = vadd.f32 %v4368, %v4625
      %v4756 = vadd.f32 %v4369, %v4630
      %v4757 = vadd.f32 %v4370, %v4635
      %v4758 = vadd.f32 %v4371, %v4640
      %v4759 = vadd.f32 %v4372, %v4645
      %v4760 = vadd.f32 %v4373, %v4650
      %v4761 = vadd.f32 %v4374, %v4655
      %v4762 = vadd.f32 %v4375, %v4660
      %v4763 = vadd.f32 %v4376, %v4665
      %v4764 = vadd.f32 %v4377, %v4670
      %v4765 = vadd.f32 %v4378, %v4675
      %v4766 = vadd.f32 %v4379, %v4680
      %v4767 = vadd.f32 %v4380, %v4685
      %v4768 = vadd.f32 %v4381, %v4690
      %v4769 = vadd.f32 %v4382, %v4695
      %v4770 = vadd.f32 %v4383, %v4700
      %v4771 = vadd.f32 %v4384, %v4705
      %v4772 = vadd.f32 %v4385, %v4710
      %v4773 = vadd.f32 %v4386, %v4715
      %v4774 = vadd.f32 %v4387, %v4720
      %v4775 = vadd.f32 %v4388, %v4725
      %v4776 = vadd.f32 %v4389, %v4730
      %v4777 = vadd.f32 %v4390, %v4735
      %v4778 = vadd.f32 %v4391, %v4740
      %v4779 = vadd.f32 %v4392, %v4745
      %s4780 = scalar_lea.vmem %s192, 72
      %v4781 = vld [vmem:[%s4780] sm:$0xff]
      %v4782 = vld [vmem:[%s4780 + $0x8] sm:$0xff]
      %v4783 = vld [vmem:[%s4780 + $0x18] sm:$0xff]
      %v4784 = vld [vmem:[%s4780 + $0x20] sm:$0xff]
      %v4785 = vld [vmem:[%s4780 + $0x30] sm:$0xff]
      %v4786 = vld [vmem:[%s4780 + $0x38] sm:$0xff]
      %v4787 = vld [vmem:[%s4780 + $0x48] sm:$0xff]
      %v4788 = vld [vmem:[%s4780 + $0x50] sm:$0xff]
      %v4789 = vld [vmem:[%s4780 + $0x60] sm:$0xff]
      %v4790 = vld [vmem:[%s4780 + $0x68] sm:$0xff]
      %v4791 = vld [vmem:[%s4780 + $0x78] sm:$0xff]
      %v4792 = vld [vmem:[%s4780 + $0x80] sm:$0xff]
      %v4793 = vld [vmem:[%s4780 + $0x90] sm:$0xff]
      %v4794 = vld [vmem:[%s4780 + $0x98] sm:$0xff]
      %v4795 = vld [vmem:[%s4780 + $0xa8] sm:$0xff]
      %v4796 = vld [vmem:[%s4780 + $0xb0] sm:$0xff]
      %v4797 = vld [vmem:[%s4780 + $0xc0] sm:$0xff]
      %v4798 = vld [vmem:[%s4780 + $0xc8] sm:$0xff]
      %v4799 = vld [vmem:[%s4780 + $0xd8] sm:$0xff]
      %v4800 = vld [vmem:[%s4780 + $0xe0] sm:$0xff]
      %v4801 = vld [vmem:[%s4780 + $0xf0] sm:$0xff]
      %v4802 = vld [vmem:[%s4780 + $0xf8] sm:$0xff]
      %v4803 = vld [vmem:[%s4780 + $0x108] sm:$0xff]
      %v4804 = vld [vmem:[%s4780 + $0x110] sm:$0xff]
      %v4805 = vld [vmem:[%s4780 + $0x120] sm:$0xff]
      %v4806 = vld [vmem:[%s4780 + $0x128] sm:$0xff]
      %v4807 = vld [vmem:[%s4780 + $0x138] sm:$0xff]
      %v4808 = vld [vmem:[%s4780 + $0x140] sm:$0xff]
      %v4809 = vld [vmem:[%s4780 + $0x150] sm:$0xff]
      %v4810 = vld [vmem:[%s4780 + $0x158] sm:$0xff]
      %v4811 = vld [vmem:[%s4780 + $0x168] sm:$0xff]
      %v4812 = vld [vmem:[%s4780 + $0x170] sm:$0xff]
      %s4813 = scalar_lea.vmem %s1, 96
      %v4814 = vld [vmem:[%s4813] sm:$0xff]
      %v4816 = vsel %vm265, %v4781, 0
      %v4819 = vsel %vm265, %v4782, 0
      %v4822 = vsel %vm265, %v4783, 0
      %v4825 = vsel %vm265, %v4784, 0
      %v4828 = vsel %vm265, %v4785, 0
      %v4831 = vsel %vm265, %v4786, 0
      %v4834 = vsel %vm265, %v4787, 0
      %v4837 = vsel %vm265, %v4788, 0
      %v4840 = vsel %vm265, %v4789, 0
      %v4843 = vsel %vm265, %v4790, 0
      %v4846 = vsel %vm265, %v4791, 0
      %v4849 = vsel %vm265, %v4792, 0
      %v4852 = vsel %vm265, %v4793, 0
      %v4855 = vsel %vm265, %v4794, 0
      %v4858 = vsel %vm265, %v4795, 0
      %v4861 = vsel %vm265, %v4796, 0
      %v4864 = vsel %vm265, %v4797, 0
      %v4867 = vsel %vm265, %v4798, 0
      %v4870 = vsel %vm265, %v4799, 0
      %v4873 = vsel %vm265, %v4800, 0
      %v4876 = vsel %vm265, %v4801, 0
      %v4879 = vsel %vm265, %v4802, 0
      %v4882 = vsel %vm265, %v4803, 0
      %v4885 = vsel %vm265, %v4804, 0
      %v4888 = vsel %vm265, %v4805, 0
      %v4891 = vsel %vm265, %v4806, 0
      %v4894 = vsel %vm265, %v4807, 0
      %v4897 = vsel %vm265, %v4808, 0
      %v4900 = vsel %vm265, %v4809, 0
      %v4903 = vsel %vm265, %v4810, 0
      %v4906 = vsel %vm265, %v4811, 0
      %v4909 = vsel %vm265, %v4812, 0
      %4911 = vmatprep.subr.mxu0 0.0
      %4912 = vmatpush1.msra.mxu0 %v4814
      %4913 = vmatprep.subr.mxu0 0.0
      %4914 = vmatpush1.msra.mxu0 0.0
      %4915 = vmatprep.subr.mxu0 0.0
      %4916 = vmatpush1.msra.mxu0 0.0
      %4917 = vmatprep.subr.mxu0 0.0
      %4918 = vmatpush1.msra.mxu0 0.0
      %4919 = vmatprep.subr.mxu0 0.0
      %4920 = vmatpush1.msra.mxu0 0.0
      %4921 = vmatprep.subr.mxu0 0.0
      %4922 = vmatpush1.msra.mxu0 0.0
      %4923 = vmatprep.subr.mxu0 0.0
      %4924 = vmatpush1.msra.mxu0 0.0
      %4925 = vmatprep.subr.mxu0 0.0
      %4926 = vmatpush1.msra.mxu0 0.0
      %4927 = vmatprep.subr.mxu0 0.0
      %4928 = vmatpush1.msra.mxu0 0.0
      %4929 = vmatprep.subr.mxu0 0.0
      %4930 = vmatpush1.msra.mxu0 0.0
      %4931 = vmatprep.subr.mxu0 0.0
      %4932 = vmatpush1.msra.mxu0 0.0
      %4933 = vmatprep.subr.mxu0 0.0
      %4934 = vmatpush1.msra.mxu0 0.0
      %4935 = vmatprep.subr.mxu0 0.0
      %4936 = vmatpush1.msra.mxu0 0.0
      %4937 = vmatprep.subr.mxu0 0.0
      %4938 = vmatpush1.msra.mxu0 0.0
      %4939 = vmatprep.subr.mxu0 0.0
      %4940 = vmatpush1.msra.mxu0 0.0
      %4941 = vmatprep.subr.mxu0 0.0
      %4942 = vmatpush1.msra.mxu0 0.0
      %4943 = vmatprep.subr.mxu0 0.0
      %4944 = vmatpush1.msra.mxu0 0.0
      %4945 = vmatprep.subr.mxu0 0.0
      %4946 = vmatpush1.msra.mxu0 0.0
      %4947 = vmatprep.subr.mxu0 0.0
      %4948 = vmatpush1.msra.mxu0 0.0
      %4949 = vmatprep.subr.mxu0 0.0
      %4950 = vmatpush1.msra.mxu0 0.0
      %4951 = vmatprep.subr.mxu0 0.0
      %4952 = vmatpush1.msra.mxu0 0.0
      %4953 = vmatprep.subr.mxu0 0.0
      %4954 = vmatpush1.msra.mxu0 0.0
      %4955 = vmatprep.subr.mxu0 0.0
      %4956 = vmatpush1.msra.mxu0 0.0
      %4957 = vmatprep.subr.mxu0 0.0
      %4958 = vmatpush1.msra.mxu0 0.0
      %4959 = vmatprep.subr.mxu0 0.0
      %4960 = vmatpush1.msra.mxu0 0.0
      %4961 = vmatprep.subr.mxu0 0.0
      %4962 = vmatpush1.msra.mxu0 0.0
      %4963 = vmatprep.subr.mxu0 0.0
      %4964 = vmatpush1.msra.mxu0 0.0
      %4965 = vmatprep.subr.mxu0 0.0
      %4966 = vmatpush1.msra.mxu0 0.0
      %4967 = vmatprep.subr.mxu0 0.0
      %4968 = vmatpush1.msra.mxu0 0.0
      %4969 = vmatprep.subr.mxu0 0.0
      %4970 = vmatpush1.msra.mxu0 0.0
      %4971 = vmatprep.subr.mxu0 0.0
      %4972 = vmatpush1.msra.mxu0 0.0
      %4973 = vmatprep.subr.mxu0 0.0
      %4974 = vmatpush1.msra.mxu0 0.0
      %4975 = vmatprep.mubr.f32.mxu0 0.0
      %4976 = vmatmul.mubr.f32.gmra.mrb[0].mxu0 %v4816
      %v4977 = vpop.f32.mrb[0].mxu0
      %v4978 = vadd.f32 0.0, %v4977
      %v4979 = vpop.f32.mrb[0].mxu0
      %4980 = vmatprep.mubr.f32.mxu0 0.0
      %4981 = vmatmul.mubr.f32.gmra.mrb[0].mxu0 %v4819
      %v4982 = vpop.f32.mrb[0].mxu0
      %v4983 = vadd.f32 0.0, %v4982
      %v4984 = vpop.f32.mrb[0].mxu0
      %4985 = vmatprep.mubr.f32.mxu0 0.0
      %4986 = vmatmul.mubr.f32.gmra.mrb[0].mxu0 %v4822
      %v4987 = vpop.f32.mrb[0].mxu0
      %v4988 = vadd.f32 0.0, %v4987
      %v4989 = vpop.f32.mrb[0].mxu0
      %4990 = vmatprep.mubr.f32.mxu0 0.0
      %4991 = vmatmul.mubr.f32.gmra.mrb[0].mxu0 %v4825
      %v4992 = vpop.f32.mrb[0].mxu0
      %v4993 = vadd.f32 0.0, %v4992
      %v4994 = vpop.f32.mrb[0].mxu0
      %4995 = vmatprep.mubr.f32.mxu0 0.0
      %4996 = vmatmul.mubr.f32.gmra.mrb[0].mxu0 %v4828
      %v4997 = vpop.f32.mrb[0].mxu0
      %v4998 = vadd.f32 0.0, %v4997
      %v4999 = vpop.f32.mrb[0].mxu0
      %5000 = vmatprep.mubr.f32.mxu0 0.0
      %5001 = vmatmul.mubr.f32.gmra.mrb[0].mxu0 %v4831
      %v5002 = vpop.f32.mrb[0].mxu0
      %v5003 = vadd.f32 0.0, %v5002
      %v5004 = vpop.f32.mrb[0].mxu0
      %5005 = vmatprep.mubr.f32.mxu0 0.0
      %5006 = vmatmul.mubr.f32.gmra.mrb[0].mxu0 %v4834
      %v5007 = vpop.f32.mrb[0].mxu0
      %v5008 = vadd.f32 0.0, %v5007
      %v5009 = vpop.f32.mrb[0].mxu0
      %5010 = vmatprep.mubr.f32.mxu0 0.0
      %5011 = vmatmul.mubr.f32.gmra.mrb[0].mxu0 %v4837
      %v5012 = vpop.f32.mrb[0].mxu0
      %v5013 = vadd.f32 0.0, %v5012
      %v5014 = vpop.f32.mrb[0].mxu0
      %5015 = vmatprep.mubr.f32.mxu0 0.0
      %5016 = vmatmul.mubr.f32.gmra.mrb[0].mxu0 %v4840
      %v5017 = vpop.f32.mrb[0].mxu0
      %v5018 = vadd.f32 0.0, %v5017
      %v5019 = vpop.f32.mrb[0].mxu0
      %5020 = vmatprep.mubr.f32.mxu0 0.0
      %5021 = vmatmul.mubr.f32.gmra.mrb[0].mxu0 %v4843
      %v5022 = vpop.f32.mrb[0].mxu0
      %v5023 = vadd.f32 0.0, %v5022
      %v5024 = vpop.f32.mrb[0].mxu0
      %5025 = vmatprep.mubr.f32.mxu0 0.0
      %5026 = vmatmul.mubr.f32.gmra.mrb[0].mxu0 %v4846
      %v5027 = vpop.f32.mrb[0].mxu0
      %v5028 = vadd.f32 0.0, %v5027
      %v5029 = vpop.f32.mrb[0].mxu0
      %5030 = vmatprep.mubr.f32.mxu0 0.0
      %5031 = vmatmul.mubr.f32.gmra.mrb[0].mxu0 %v4849
      %v5032 = vpop.f32.mrb[0].mxu0
      %v5033 = vadd.f32 0.0, %v5032
      %v5034 = vpop.f32.mrb[0].mxu0
      %5035 = vmatprep.mubr.f32.mxu0 0.0
      %5036 = vmatmul.mubr.f32.gmra.mrb[0].mxu0 %v4852
      %v5037 = vpop.f32.mrb[0].mxu0
      %v5038 = vadd.f32 0.0, %v5037
      %v5039 = vpop.f32.mrb[0].mxu0
      %5040 = vmatprep.mubr.f32.mxu0 0.0
      %5041 = vmatmul.mubr.f32.gmra.mrb[0].mxu0 %v4855
      %v5042 = vpop.f32.mrb[0].mxu0
      %v5043 = vadd.f32 0.0, %v5042
      %v5044 = vpop.f32.mrb[0].mxu0
      %5045 = vmatprep.mubr.f32.mxu0 0.0
      %5046 = vmatmul.mubr.f32.gmra.mrb[0].mxu0 %v4858
      %v5047 = vpop.f32.mrb[0].mxu0
      %v5048 = vadd.f32 0.0, %v5047
      %v5049 = vpop.f32.mrb[0].mxu0
      %5050 = vmatprep.mubr.f32.mxu0 0.0
      %5051 = vmatmul.mubr.f32.gmra.mrb[0].mxu0 %v4861
      %v5052 = vpop.f32.mrb[0].mxu0
      %v5053 = vadd.f32 0.0, %v5052
      %v5054 = vpop.f32.mrb[0].mxu0
      %5055 = vmatprep.mubr.f32.mxu0 0.0
      %5056 = vmatmul.mubr.f32.gmra.mrb[0].mxu0 %v4864
      %v5057 = vpop.f32.mrb[0].mxu0
      %v5058 = vadd.f32 0.0, %v5057
      %v5059 = vpop.f32.mrb[0].mxu0
      %5060 = vmatprep.mubr.f32.mxu0 0.0
      %5061 = vmatmul.mubr.f32.gmra.mrb[0].mxu0 %v4867
      %v5062 = vpop.f32.mrb[0].mxu0
      %v5063 = vadd.f32 0.0, %v5062
      %v5064 = vpop.f32.mrb[0].mxu0
      %5065 = vmatprep.mubr.f32.mxu0 0.0
      %5066 = vmatmul.mubr.f32.gmra.mrb[0].mxu0 %v4870
      %v5067 = vpop.f32.mrb[0].mxu0
      %v5068 = vadd.f32 0.0, %v5067
      %v5069 = vpop.f32.mrb[0].mxu0
      %5070 = vmatprep.mubr.f32.mxu0 0.0
      %5071 = vmatmul.mubr.f32.gmra.mrb[0].mxu0 %v4873
      %v5072 = vpop.f32.mrb[0].mxu0
      %v5073 = vadd.f32 0.0, %v5072
      %v5074 = vpop.f32.mrb[0].mxu0
      %5075 = vmatprep.mubr.f32.mxu0 0.0
      %5076 = vmatmul.mubr.f32.gmra.mrb[0].mxu0 %v4876
      %v5077 = vpop.f32.mrb[0].mxu0
      %v5078 = vadd.f32 0.0, %v5077
      %v5079 = vpop.f32.mrb[0].mxu0
      %5080 = vmatprep.mubr.f32.mxu0 0.0
      %5081 = vmatmul.mubr.f32.gmra.mrb[0].mxu0 %v4879
      %v5082 = vpop.f32.mrb[0].mxu0
      %v5083 = vadd.f32 0.0, %v5082
      %v5084 = vpop.f32.mrb[0].mxu0
      %5085 = vmatprep.mubr.f32.mxu0 0.0
      %5086 = vmatmul.mubr.f32.gmra.mrb[0].mxu0 %v4882
      %v5087 = vpop.f32.mrb[0].mxu0
      %v5088 = vadd.f32 0.0, %v5087
      %v5089 = vpop.f32.mrb[0].mxu0
      %5090 = vmatprep.mubr.f32.mxu0 0.0
      %5091 = vmatmul.mubr.f32.gmra.mrb[0].mxu0 %v4885
      %v5092 = vpop.f32.mrb[0].mxu0
      %v5093 = vadd.f32 0.0, %v5092
      %v5094 = vpop.f32.mrb[0].mxu0
      %5095 = vmatprep.mubr.f32.mxu0 0.0
      %5096 = vmatmul.mubr.f32.gmra.mrb[0].mxu0 %v4888
      %v5097 = vpop.f32.mrb[0].mxu0
      %v5098 = vadd.f32 0.0, %v5097
      %v5099 = vpop.f32.mrb[0].mxu0
      %5100 = vmatprep.mubr.f32.mxu0 0.0
      %5101 = vmatmul.mubr.f32.gmra.mrb[0].mxu0 %v4891
      %v5102 = vpop.f32.mrb[0].mxu0
      %v5103 = vadd.f32 0.0, %v5102
      %v5104 = vpop.f32.mrb[0].mxu0
      %5105 = vmatprep.mubr.f32.mxu0 0.0
      %5106 = vmatmul.mubr.f32.gmra.mrb[0].mxu0 %v4894
      %v5107 = vpop.f32.mrb[0].mxu0
      %v5108 = vadd.f32 0.0, %v5107
      %v5109 = vpop.f32.mrb[0].mxu0
      %5110 = vmatprep.mubr.f32.mxu0 0.0
      %5111 = vmatmul.mubr.f32.gmra.mrb[0].mxu0 %v4897
      %v5112 = vpop.f32.mrb[0].mxu0
      %v5113 = vadd.f32 0.0, %v5112
      %v5114 = vpop.f32.mrb[0].mxu0
      %5115 = vmatprep.mubr.f32.mxu0 0.0
      %5116 = vmatmul.mubr.f32.gmra.mrb[0].mxu0 %v4900
      %v5117 = vpop.f32.mrb[0].mxu0
      %v5118 = vadd.f32 0.0, %v5117
      %v5119 = vpop.f32.mrb[0].mxu0
      %5120 = vmatprep.mubr.f32.mxu0 0.0
      %5121 = vmatmul.mubr.f32.gmra.mrb[0].mxu0 %v4903
      %v5122 = vpop.f32.mrb[0].mxu0
      %v5123 = vadd.f32 0.0, %v5122
      %v5124 = vpop.f32.mrb[0].mxu0
      %5125 = vmatprep.mubr.f32.mxu0 0.0
      %5126 = vmatmul.mubr.f32.gmra.mrb[0].mxu0 %v4906
      %v5127 = vpop.f32.mrb[0].mxu0
      %v5128 = vadd.f32 0.0, %v5127
      %v5129 = vpop.f32.mrb[0].mxu0
      %5130 = vmatprep.mubr.f32.mxu0 0.0
      %5131 = vmatmul.mubr.f32.gmra.mrb[0].mxu0 %v4909
      %v5132 = vpop.f32.mrb[0].mxu0
      %v5133 = vadd.f32 0.0, %v5132
      %v5134 = vpop.f32.mrb[0].mxu0
      %5135 = vdwg.mxu0
      %v5136 = vadd.f32 %v4748, %v4978
      %v5137 = vadd.f32 %v4749, %v4983
      %v5138 = vadd.f32 %v4750, %v4988
      %v5139 = vadd.f32 %v4751, %v4993
      %v5140 = vadd.f32 %v4752, %v4998
      %v5141 = vadd.f32 %v4753, %v5003
      %v5142 = vadd.f32 %v4754, %v5008
      %v5143 = vadd.f32 %v4755, %v5013
      %v5144 = vadd.f32 %v4756, %v5018
      %v5145 = vadd.f32 %v4757, %v5023
      %v5146 = vadd.f32 %v4758, %v5028
      %v5147 = vadd.f32 %v4759, %v5033
      %v5148 = vadd.f32 %v4760, %v5038
      %v5149 = vadd.f32 %v4761, %v5043
      %v5150 = vadd.f32 %v4762, %v5048
      %v5151 = vadd.f32 %v4763, %v5053
      %v5152 = vadd.f32 %v4764, %v5058
      %v5153 = vadd.f32 %v4765, %v5063
      %v5154 = vadd.f32 %v4766, %v5068
      %v5155 = vadd.f32 %v4767, %v5073
      %v5156 = vadd.f32 %v4768, %v5078
      %v5157 = vadd.f32 %v4769, %v5083
      %v5158 = vadd.f32 %v4770, %v5088
      %v5159 = vadd.f32 %v4771, %v5093
      %v5160 = vadd.f32 %v4772, %v5098
      %v5161 = vadd.f32 %v4773, %v5103
      %v5162 = vadd.f32 %v4774, %v5108
      %v5163 = vadd.f32 %v4775, %v5113
      %v5164 = vadd.f32 %v4776, %v5118
      %v5165 = vadd.f32 %v4777, %v5123
      %v5166 = vadd.f32 %v4778, %v5128
      %v5167 = vadd.f32 %v4779, %v5133
      %v5168 = vld [vmem:[%s4780 + $0x1] sm:$0xff]
      %v5169 = vld [vmem:[%s4780 + $0x9] sm:$0xff]
      %v5170 = vld [vmem:[%s4780 + $0x19] sm:$0xff]
      %v5171 = vld [vmem:[%s4780 + $0x21] sm:$0xff]
      %v5172 = vld [vmem:[%s4780 + $0x31] sm:$0xff]
      %v5173 = vld [vmem:[%s4780 + $0x39] sm:$0xff]
      %v5174 = vld [vmem:[%s4780 + $0x49] sm:$0xff]
      %v5175 = vld [vmem:[%s4780 + $0x51] sm:$0xff]
      %v5176 = vld [vmem:[%s4780 + $0x61] sm:$0xff]
      %v5177 = vld [vmem:[%s4780 + $0x69] sm:$0xff]
      %v5178 = vld [vmem:[%s4780 + $0x79] sm:$0xff]
      %v5179 = vld [vmem:[%s4780 + $0x81] sm:$0xff]
      %v5180 = vld [vmem:[%s4780 + $0x91] sm:$0xff]
      %v5181 = vld [vmem:[%s4780 + $0x99] sm:$0xff]
      %v5182 = vld [vmem:[%s4780 + $0xa9] sm:$0xff]
      %v5183 = vld [vmem:[%s4780 + $0xb1] sm:$0xff]
      %v5184 = vld [vmem:[%s4780 + $0xc1] sm:$0xff]
      %v5185 = vld [vmem:[%s4780 + $0xc9] sm:$0xff]
      %v5186 = vld [vmem:[%s4780 + $0xd9] sm:$0xff]
      %v5187 = vld [vmem:[%s4780 + $0xe1] sm:$0xff]
      %v5188 = vld [vmem:[%s4780 + $0xf1] sm:$0xff]
      %v5189 = vld [vmem:[%s4780 + $0xf9] sm:$0xff]
      %v5190 = vld [vmem:[%s4780 + $0x109] sm:$0xff]
      %v5191 = vld [vmem:[%s4780 + $0x111] sm:$0xff]
      %v5192 = vld [vmem:[%s4780 + $0x121] sm:$0xff]
      %v5193 = vld [vmem:[%s4780 + $0x129] sm:$0xff]
      %v5194 = vld [vmem:[%s4780 + $0x139] sm:$0xff]
      %v5195 = vld [vmem:[%s4780 + $0x141] sm:$0xff]
      %v5196 = vld [vmem:[%s4780 + $0x151] sm:$0xff]
      %v5197 = vld [vmem:[%s4780 + $0x159] sm:$0xff]
      %v5198 = vld [vmem:[%s4780 + $0x169] sm:$0xff]
      %v5199 = vld [vmem:[%s4780 + $0x171] sm:$0xff]
      %s5200 = scalar_lea.vmem %s1, 104
      %v5201 = vld [vmem:[%s5200] sm:$0xff]
      %v5203 = vsel %vm265, %v5168, 0
      %v5206 = vsel %vm265, %v5169, 0
      %v5209 = vsel %vm265, %v5170, 0
      %v5212 = vsel %vm265, %v5171, 0
      %v5215 = vsel %vm265, %v5172, 0
      %v5218 = vsel %vm265, %v5173, 0
      %v5221 = vsel %vm265, %v5174, 0
      %v5224 = vsel %vm265, %v5175, 0
      %v5227 = vsel %vm265, %v5176, 0
      %v5230 = vsel %vm265, %v5177, 0
      %v5233 = vsel %vm265, %v5178, 0
      %v5236 = vsel %vm265, %v5179, 0
      %v5239 = vsel %vm265, %v5180, 0
      %v5242 = vsel %vm265, %v5181, 0
      %v5245 = vsel %vm265, %v5182, 0
      %v5248 = vsel %vm265, %v5183, 0
      %v5251 = vsel %vm265, %v5184, 0
      %v5254 = vsel %vm265, %v5185, 0
      %v5257 = vsel %vm265, %v5186, 0
      %v5260 = vsel %vm265, %v5187, 0
      %v5263 = vsel %vm265, %v5188, 0
      %v5266 = vsel %vm265, %v5189, 0
      %v5269 = vsel %vm265, %v5190, 0
      %v5272 = vsel %vm265, %v5191, 0
      %v5275 = vsel %vm265, %v5192, 0
      %v5278 = vsel %vm265, %v5193, 0
      %v5281 = vsel %vm265, %v5194, 0
      %v5284 = vsel %vm265, %v5195, 0
      %v5287 = vsel %vm265, %v5196, 0
      %v5290 = vsel %vm265, %v5197, 0
      %v5293 = vsel %vm265, %v5198, 0
      %v5296 = vsel %vm265, %v5199, 0
      %5298 = vmatprep.subr.mxu0 0.0
      %5299 = vmatpush1.msra.mxu0 %v5201
      %5300 = vmatprep.subr.mxu0 0.0
      %5301 = vmatpush1.msra.mxu0 0.0
      %5302 = vmatprep.subr.mxu0 0.0
      %5303 = vmatpush1.msra.mxu0 0.0
      %5304 = vmatprep.subr.mxu0 0.0
      %5305 = vmatpush1.msra.mxu0 0.0
      %5306 = vmatprep.subr.mxu0 0.0
      %5307 = vmatpush1.msra.mxu0 0.0
      %5308 = vmatprep.subr.mxu0 0.0
      %5309 = vmatpush1.msra.mxu0 0.0
      %5310 = vmatprep.subr.mxu0 0.0
      %5311 = vmatpush1.msra.mxu0 0.0
      %5312 = vmatprep.subr.mxu0 0.0
      %5313 = vmatpush1.msra.mxu0 0.0
      %5314 = vmatprep.subr.mxu0 0.0
      %5315 = vmatpush1.msra.mxu0 0.0
      %5316 = vmatprep.subr.mxu0 0.0
      %5317 = vmatpush1.msra.mxu0 0.0
      %5318 = vmatprep.subr.mxu0 0.0
      %5319 = vmatpush1.msra.mxu0 0.0
      %5320 = vmatprep.subr.mxu0 0.0
      %5321 = vmatpush1.msra.mxu0 0.0
      %5322 = vmatprep.subr.mxu0 0.0
      %5323 = vmatpush1.msra.mxu0 0.0
      %5324 = vmatprep.subr.mxu0 0.0
      %5325 = vmatpush1.msra.mxu0 0.0
      %5326 = vmatprep.subr.mxu0 0.0
      %5327 = vmatpush1.msra.mxu0 0.0
      %5328 = vmatprep.subr.mxu0 0.0
      %5329 = vmatpush1.msra.mxu0 0.0
      %5330 = vmatprep.subr.mxu0 0.0
      %5331 = vmatpush1.msra.mxu0 0.0
      %5332 = vmatprep.subr.mxu0 0.0
      %5333 = vmatpush1.msra.mxu0 0.0
      %5334 = vmatprep.subr.mxu0 0.0
      %5335 = vmatpush1.msra.mxu0 0.0
      %5336 = vmatprep.subr.mxu0 0.0
      %5337 = vmatpush1.msra.mxu0 0.0
      %5338 = vmatprep.subr.mxu0 0.0
      %5339 = vmatpush1.msra.mxu0 0.0
      %5340 = vmatprep.subr.mxu0 0.0
      %5341 = vmatpush1.msra.mxu0 0.0
      %5342 = vmatprep.subr.mxu0 0.0
      %5343 = vmatpush1.msra.mxu0 0.0
      %5344 = vmatprep.subr.mxu0 0.0
      %5345 = vmatpush1.msra.mxu0 0.0
      %5346 = vmatprep.subr.mxu0 0.0
      %5347 = vmatpush1.msra.mxu0 0.0
      %5348 = vmatprep.subr.mxu0 0.0
      %5349 = vmatpush1.msra.mxu0 0.0
      %5350 = vmatprep.subr.mxu0 0.0
      %5351 = vmatpush1.msra.mxu0 0.0
      %5352 = vmatprep.subr.mxu0 0.0
      %5353 = vmatpush1.msra.mxu0 0.0
      %5354 = vmatprep.subr.mxu0 0.0
      %5355 = vmatpush1.msra.mxu0 0.0
      %5356 = vmatprep.subr.mxu0 0.0
      %5357 = vmatpush1.msra.mxu0 0.0
      %5358 = vmatprep.subr.mxu0 0.0
      %5359 = vmatpush1.msra.mxu0 0.0
      %5360 = vmatprep.subr.mxu0 0.0
      %5361 = vmatpush1.msra.mxu0 0.0
      %5362 = vmatprep.mubr.f32.mxu0 0.0
      %5363 = vmatmul.mubr.f32.gmra.mrb[0].mxu0 %v5203
      %v5364 = vpop.f32.mrb[0].mxu0
      %v5365 = vadd.f32 0.0, %v5364
      %v5366 = vpop.f32.mrb[0].mxu0
      %5367 = vmatprep.mubr.f32.mxu0 0.0
      %5368 = vmatmul.mubr.f32.gmra.mrb[0].mxu0 %v5206
      %v5369 = vpop.f32.mrb[0].mxu0
      %v5370 = vadd.f32 0.0, %v5369
      %v5371 = vpop.f32.mrb[0].mxu0
      %5372 = vmatprep.mubr.f32.mxu0 0.0
      %5373 = vmatmul.mubr.f32.gmra.mrb[0].mxu0 %v5209
      %v5374 = vpop.f32.mrb[0].mxu0
      %v5375 = vadd.f32 0.0, %v5374
      %v5376 = vpop.f32.mrb[0].mxu0
      %5377 = vmatprep.mubr.f32.mxu0 0.0
      %5378 = vmatmul.mubr.f32.gmra.mrb[0].mxu0 %v5212
      %v5379 = vpop.f32.mrb[0].mxu0
      %v5380 = vadd.f32 0.0, %v5379
      %v5381 = vpop.f32.mrb[0].mxu0
      %5382 = vmatprep.mubr.f32.mxu0 0.0
      %5383 = vmatmul.mubr.f32.gmra.mrb[0].mxu0 %v5215
      %v5384 = vpop.f32.mrb[0].mxu0
      %v5385 = vadd.f32 0.0, %v5384
      %v5386 = vpop.f32.mrb[0].mxu0
      %5387 = vmatprep.mubr.f32.mxu0 0.0
      %5388 = vmatmul.mubr.f32.gmra.mrb[0].mxu0 %v5218
      %v5389 = vpop.f32.mrb[0].mxu0
      %v5390 = vadd.f32 0.0, %v5389
      %v5391 = vpop.f32.mrb[0].mxu0
      %5392 = vmatprep.mubr.f32.mxu0 0.0
      %5393 = vmatmul.mubr.f32.gmra.mrb[0].mxu0 %v5221
      %v5394 = vpop.f32.mrb[0].mxu0
      %v5395 = vadd.f32 0.0, %v5394
      %v5396 = vpop.f32.mrb[0].mxu0
      %5397 = vmatprep.mubr.f32.mxu0 0.0
      %5398 = vmatmul.mubr.f32.gmra.mrb[0].mxu0 %v5224
      %v5399 = vpop.f32.mrb[0].mxu0
      %v5400 = vadd.f32 0.0, %v5399
      %v5401 = vpop.f32.mrb[0].mxu0
      %5402 = vmatprep.mubr.f32.mxu0 0.0
      %5403 = vmatmul.mubr.f32.gmra.mrb[0].mxu0 %v5227
      %v5404 = vpop.f32.mrb[0].mxu0
      %v5405 = vadd.f32 0.0, %v5404
      %v5406 = vpop.f32.mrb[0].mxu0
      %5407 = vmatprep.mubr.f32.mxu0 0.0
      %5408 = vmatmul.mubr.f32.gmra.mrb[0].mxu0 %v5230
      %v5409 = vpop.f32.mrb[0].mxu0
      %v5410 = vadd.f32 0.0, %v5409
      %v5411 = vpop.f32.mrb[0].mxu0
      %5412 = vmatprep.mubr.f32.mxu0 0.0
      %5413 = vmatmul.mubr.f32.gmra.mrb[0].mxu0 %v5233
      %v5414 = vpop.f32.mrb[0].mxu0
      %v5415 = vadd.f32 0.0, %v5414
      %v5416 = vpop.f32.mrb[0].mxu0
      %5417 = vmatprep.mubr.f32.mxu0 0.0
      %5418 = vmatmul.mubr.f32.gmra.mrb[0].mxu0 %v5236
      %v5419 = vpop.f32.mrb[0].mxu0
      %v5420 = vadd.f32 0.0, %v5419
      %v5421 = vpop.f32.mrb[0].mxu0
      %5422 = vmatprep.mubr.f32.mxu0 0.0
      %5423 = vmatmul.mubr.f32.gmra.mrb[0].mxu0 %v5239
      %v5424 = vpop.f32.mrb[0].mxu0
      %v5425 = vadd.f32 0.0, %v5424
      %v5426 = vpop.f32.mrb[0].mxu0
      %5427 = vmatprep.mubr.f32.mxu0 0.0
      %5428 = vmatmul.mubr.f32.gmra.mrb[0].mxu0 %v5242
      %v5429 = vpop.f32.mrb[0].mxu0
      %v5430 = vadd.f32 0.0, %v5429
      %v5431 = vpop.f32.mrb[0].mxu0
      %5432 = vmatprep.mubr.f32.mxu0 0.0
      %5433 = vmatmul.mubr.f32.gmra.mrb[0].mxu0 %v5245
      %v5434 = vpop.f32.mrb[0].mxu0
      %v5435 = vadd.f32 0.0, %v5434
      %v5436 = vpop.f32.mrb[0].mxu0
      %5437 = vmatprep.mubr.f32.mxu0 0.0
      %5438 = vmatmul.mubr.f32.gmra.mrb[0].mxu0 %v5248
      %v5439 = vpop.f32.mrb[0].mxu0
      %v5440 = vadd.f32 0.0, %v5439
      %v5441 = vpop.f32.mrb[0].mxu0
      %5442 = vmatprep.mubr.f32.mxu0 0.0
      %5443 = vmatmul.mubr.f32.gmra.mrb[0].mxu0 %v5251
      %v5444 = vpop.f32.mrb[0].mxu0
      %v5445 = vadd.f32 0.0, %v5444
      %v5446 = vpop.f32.mrb[0].mxu0
      %5447 = vmatprep.mubr.f32.mxu0 0.0
      %5448 = vmatmul.mubr.f32.gmra.mrb[0].mxu0 %v5254
      %v5449 = vpop.f32.mrb[0].mxu0
      %v5450 = vadd.f32 0.0, %v5449
      %v5451 = vpop.f32.mrb[0].mxu0
      %5452 = vmatprep.mubr.f32.mxu0 0.0
      %5453 = vmatmul.mubr.f32.gmra.mrb[0].mxu0 %v5257
      %v5454 = vpop.f32.mrb[0].mxu0
      %v5455 = vadd.f32 0.0, %v5454
      %v5456 = vpop.f32.mrb[0].mxu0
      %5457 = vmatprep.mubr.f32.mxu0 0.0
      %5458 = vmatmul.mubr.f32.gmra.mrb[0].mxu0 %v5260
      %v5459 = vpop.f32.mrb[0].mxu0
      %v5460 = vadd.f32 0.0, %v5459
      %v5461 = vpop.f32.mrb[0].mxu0
      %5462 = vmatprep.mubr.f32.mxu0 0.0
      %5463 = vmatmul.mubr.f32.gmra.mrb[0].mxu0 %v5263
      %v5464 = vpop.f32.mrb[0].mxu0
      %v5465 = vadd.f32 0.0, %v5464
      %v5466 = vpop.f32.mrb[0].mxu0
      %5467 = vmatprep.mubr.f32.mxu0 0.0
      %5468 = vmatmul.mubr.f32.gmra.mrb[0].mxu0 %v5266
      %v5469 = vpop.f32.mrb[0].mxu0
      %v5470 = vadd.f32 0.0, %v5469
      %v5471 = vpop.f32.mrb[0].mxu0
      %5472 = vmatprep.mubr.f32.mxu0 0.0
      %5473 = vmatmul.mubr.f32.gmra.mrb[0].mxu0 %v5269
      %v5474 = vpop.f32.mrb[0].mxu0
      %v5475 = vadd.f32 0.0, %v5474
      %v5476 = vpop.f32.mrb[0].mxu0
      %5477 = vmatprep.mubr.f32.mxu0 0.0
      %5478 = vmatmul.mubr.f32.gmra.mrb[0].mxu0 %v5272
      %v5479 = vpop.f32.mrb[0].mxu0
      %v5480 = vadd.f32 0.0, %v5479
      %v5481 = vpop.f32.mrb[0].mxu0
      %5482 = vmatprep.mubr.f32.mxu0 0.0
      %5483 = vmatmul.mubr.f32.gmra.mrb[0].mxu0 %v5275
      %v5484 = vpop.f32.mrb[0].mxu0
      %v5485 = vadd.f32 0.0, %v5484
      %v5486 = vpop.f32.mrb[0].mxu0
      %5487 = vmatprep.mubr.f32.mxu0 0.0
      %5488 = vmatmul.mubr.f32.gmra.mrb[0].mxu0 %v5278
      %v5489 = vpop.f32.mrb[0].mxu0
      %v5490 = vadd.f32 0.0, %v5489
      %v5491 = vpop.f32.mrb[0].mxu0
      %5492 = vmatprep.mubr.f32.mxu0 0.0
      %5493 = vmatmul.mubr.f32.gmra.mrb[0].mxu0 %v5281
      %v5494 = vpop.f32.mrb[0].mxu0
      %v5495 = vadd.f32 0.0, %v5494
      %v5496 = vpop.f32.mrb[0].mxu0
      %5497 = vmatprep.mubr.f32.mxu0 0.0
      %5498 = vmatmul.mubr.f32.gmra.mrb[0].mxu0 %v5284
      %v5499 = vpop.f32.mrb[0].mxu0
      %v5500 = vadd.f32 0.0, %v5499
      %v5501 = vpop.f32.mrb[0].mxu0
      %5502 = vmatprep.mubr.f32.mxu0 0.0
      %5503 = vmatmul.mubr.f32.gmra.mrb[0].mxu0 %v5287
      %v5504 = vpop.f32.mrb[0].mxu0
      %v5505 = vadd.f32 0.0, %v5504
      %v5506 = vpop.f32.mrb[0].mxu0
      %5507 = vmatprep.mubr.f32.mxu0 0.0
      %5508 = vmatmul.mubr.f32.gmra.mrb[0].mxu0 %v5290
      %v5509 = vpop.f32.mrb[0].mxu0
      %v5510 = vadd.f32 0.0, %v5509
      %v5511 = vpop.f32.mrb[0].mxu0
      %5512 = vmatprep.mubr.f32.mxu0 0.0
      %5513 = vmatmul.mubr.f32.gmra.mrb[0].mxu0 %v5293
      %v5514 = vpop.f32.mrb[0].mxu0
      %v5515 = vadd.f32 0.0, %v5514
      %v5516 = vpop.f32.mrb[0].mxu0
      %5517 = vmatprep.mubr.f32.mxu0 0.0
      %5518 = vmatmul.mubr.f32.gmra.mrb[0].mxu0 %v5296
      %v5519 = vpop.f32.mrb[0].mxu0
      %v5520 = vadd.f32 0.0, %v5519
      %v5521 = vpop.f32.mrb[0].mxu0
      %5522 = vdwg.mxu0
      %v5523 = vadd.f32 %v5136, %v5365
      %v5524 = vadd.f32 %v5137, %v5370
      %v5525 = vadd.f32 %v5138, %v5375
      %v5526 = vadd.f32 %v5139, %v5380
      %v5527 = vadd.f32 %v5140, %v5385
      %v5528 = vadd.f32 %v5141, %v5390
      %v5529 = vadd.f32 %v5142, %v5395
      %v5530 = vadd.f32 %v5143, %v5400
      %v5531 = vadd.f32 %v5144, %v5405
      %v5532 = vadd.f32 %v5145, %v5410
      %v5533 = vadd.f32 %v5146, %v5415
      %v5534 = vadd.f32 %v5147, %v5420
      %v5535 = vadd.f32 %v5148, %v5425
      %v5536 = vadd.f32 %v5149, %v5430
      %v5537 = vadd.f32 %v5150, %v5435
      %v5538 = vadd.f32 %v5151, %v5440
      %v5539 = vadd.f32 %v5152, %v5445
      %v5540 = vadd.f32 %v5153, %v5450
      %v5541 = vadd.f32 %v5154, %v5455
      %v5542 = vadd.f32 %v5155, %v5460
      %v5543 = vadd.f32 %v5156, %v5465
      %v5544 = vadd.f32 %v5157, %v5470
      %v5545 = vadd.f32 %v5158, %v5475
      %v5546 = vadd.f32 %v5159, %v5480
      %v5547 = vadd.f32 %v5160, %v5485
      %v5548 = vadd.f32 %v5161, %v5490
      %v5549 = vadd.f32 %v5162, %v5495
      %v5550 = vadd.f32 %v5163, %v5500
      %v5551 = vadd.f32 %v5164, %v5505
      %v5552 = vadd.f32 %v5165, %v5510
      %v5553 = vadd.f32 %v5166, %v5515
      %v5554 = vadd.f32 %v5167, %v5520
      %v5555 = vld [vmem:[%s4780 + $0x2] sm:$0xff]
      %v5556 = vld [vmem:[%s4780 + $0xa] sm:$0xff]
      %v5557 = vld [vmem:[%s4780 + $0x1a] sm:$0xff]
      %v5558 = vld [vmem:[%s4780 + $0x22] sm:$0xff]
      %v5559 = vld [vmem:[%s4780 + $0x32] sm:$0xff]
      %v5560 = vld [vmem:[%s4780 + $0x3a] sm:$0xff]
      %v5561 = vld [vmem:[%s4780 + $0x4a] sm:$0xff]
      %v5562 = vld [vmem:[%s4780 + $0x52] sm:$0xff]
      %v5563 = vld [vmem:[%s4780 + $0x62] sm:$0xff]
      %v5564 = vld [vmem:[%s4780 + $0x6a] sm:$0xff]
      %v5565 = vld [vmem:[%s4780 + $0x7a] sm:$0xff]
      %v5566 = vld [vmem:[%s4780 + $0x82] sm:$0xff]
      %v5567 = vld [vmem:[%s4780 + $0x92] sm:$0xff]
      %v5568 = vld [vmem:[%s4780 + $0x9a] sm:$0xff]
      %v5569 = vld [vmem:[%s4780 + $0xaa] sm:$0xff]
      %v5570 = vld [vmem:[%s4780 + $0xb2] sm:$0xff]
      %v5571 = vld [vmem:[%s4780 + $0xc2] sm:$0xff]
      %v5572 = vld [vmem:[%s4780 + $0xca] sm:$0xff]
      %v5573 = vld [vmem:[%s4780 + $0xda] sm:$0xff]
      %v5574 = vld [vmem:[%s4780 + $0xe2] sm:$0xff]
      %v5575 = vld [vmem:[%s4780 + $0xf2] sm:$0xff]
      %v5576 = vld [vmem:[%s4780 + $0xfa] sm:$0xff]
      %v5577 = vld [vmem:[%s4780 + $0x10a] sm:$0xff]
      %v5578 = vld [vmem:[%s4780 + $0x112] sm:$0xff]
      %v5579 = vld [vmem:[%s4780 + $0x122] sm:$0xff]
      %v5580 = vld [vmem:[%s4780 + $0x12a] sm:$0xff]
      %v5581 = vld [vmem:[%s4780 + $0x13a] sm:$0xff]
      %v5582 = vld [vmem:[%s4780 + $0x142] sm:$0xff]
      %v5583 = vld [vmem:[%s4780 + $0x152] sm:$0xff]
      %v5584 = vld [vmem:[%s4780 + $0x15a] sm:$0xff]
      %v5585 = vld [vmem:[%s4780 + $0x16a] sm:$0xff]
      %v5586 = vld [vmem:[%s4780 + $0x172] sm:$0xff]
      %s5587 = scalar_lea.vmem %s1, 112
      %v5588 = vld [vmem:[%s5587] sm:$0xff]
      %v5590 = vsel %vm265, %v5555, 0
      %v5593 = vsel %vm265, %v5556, 0
      %v5596 = vsel %vm265, %v5557, 0
      %v5599 = vsel %vm265, %v5558, 0
      %v5602 = vsel %vm265, %v5559, 0
      %v5605 = vsel %vm265, %v5560, 0
      %v5608 = vsel %vm265, %v5561, 0
      %v5611 = vsel %vm265, %v5562, 0
      %v5614 = vsel %vm265, %v5563, 0
      %v5617 = vsel %vm265, %v5564, 0
      %v5620 = vsel %vm265, %v5565, 0
      %v5623 = vsel %vm265, %v5566, 0
      %v5626 = vsel %vm265, %v5567, 0
      %v5629 = vsel %vm265, %v5568, 0
      %v5632 = vsel %vm265, %v5569, 0
      %v5635 = vsel %vm265, %v5570, 0
      %v5638 = vsel %vm265, %v5571, 0
      %v5641 = vsel %vm265, %v5572, 0
      %v5644 = vsel %vm265, %v5573, 0
      %v5647 = vsel %vm265, %v5574, 0
      %v5650 = vsel %vm265, %v5575, 0
      %v5653 = vsel %vm265, %v5576, 0
      %v5656 = vsel %vm265, %v5577, 0
      %v5659 = vsel %vm265, %v5578, 0
      %v5662 = vsel %vm265, %v5579, 0
      %v5665 = vsel %vm265, %v5580, 0
      %v5668 = vsel %vm265, %v5581, 0
      %v5671 = vsel %vm265, %v5582, 0
      %v5674 = vsel %vm265, %v5583, 0
      %v5677 = vsel %vm265, %v5584, 0
      %v5680 = vsel %vm265, %v5585, 0
      %v5683 = vsel %vm265, %v5586, 0
      %5685 = vmatprep.subr.mxu0 0.0
      %5686 = vmatpush1.msra.mxu0 %v5588
      %5687 = vmatprep.subr.mxu0 0.0
      %5688 = vmatpush1.msra.mxu0 0.0
      %5689 = vmatprep.subr.mxu0 0.0
      %5690 = vmatpush1.msra.mxu0 0.0
      %5691 = vmatprep.subr.mxu0 0.0
      %5692 = vmatpush1.msra.mxu0 0.0
      %5693 = vmatprep.subr.mxu0 0.0
      %5694 = vmatpush1.msra.mxu0 0.0
      %5695 = vmatprep.subr.mxu0 0.0
      %5696 = vmatpush1.msra.mxu0 0.0
      %5697 = vmatprep.subr.mxu0 0.0
      %5698 = vmatpush1.msra.mxu0 0.0
      %5699 = vmatprep.subr.mxu0 0.0
      %5700 = vmatpush1.msra.mxu0 0.0
      %5701 = vmatprep.subr.mxu0 0.0
      %5702 = vmatpush1.msra.mxu0 0.0
      %5703 = vmatprep.subr.mxu0 0.0
      %5704 = vmatpush1.msra.mxu0 0.0
      %5705 = vmatprep.subr.mxu0 0.0
      %5706 = vmatpush1.msra.mxu0 0.0
      %5707 = vmatprep.subr.mxu0 0.0
      %5708 = vmatpush1.msra.mxu0 0.0
      %5709 = vmatprep.subr.mxu0 0.0
      %5710 = vmatpush1.msra.mxu0 0.0
      %5711 = vmatprep.subr.mxu0 0.0
      %5712 = vmatpush1.msra.mxu0 0.0
      %5713 = vmatprep.subr.mxu0 0.0
      %5714 = vmatpush1.msra.mxu0 0.0
      %5715 = vmatprep.subr.mxu0 0.0
      %5716 = vmatpush1.msra.mxu0 0.0
      %5717 = vmatprep.subr.mxu0 0.0
      %5718 = vmatpush1.msra.mxu0 0.0
      %5719 = vmatprep.subr.mxu0 0.0
      %5720 = vmatpush1.msra.mxu0 0.0
      %5721 = vmatprep.subr.mxu0 0.0
      %5722 = vmatpush1.msra.mxu0 0.0
      %5723 = vmatprep.subr.mxu0 0.0
      %5724 = vmatpush1.msra.mxu0 0.0
      %5725 = vmatprep.subr.mxu0 0.0
      %5726 = vmatpush1.msra.mxu0 0.0
      %5727 = vmatprep.subr.mxu0 0.0
      %5728 = vmatpush1.msra.mxu0 0.0
      %5729 = vmatprep.subr.mxu0 0.0
      %5730 = vmatpush1.msra.mxu0 0.0
      %5731 = vmatprep.subr.mxu0 0.0
      %5732 = vmatpush1.msra.mxu0 0.0
      %5733 = vmatprep.subr.mxu0 0.0
      %5734 = vmatpush1.msra.mxu0 0.0
      %5735 = vmatprep.subr.mxu0 0.0
      %5736 = vmatpush1.msra.mxu0 0.0
      %5737 = vmatprep.subr.mxu0 0.0
      %5738 = vmatpush1.msra.mxu0 0.0
      %5739 = vmatprep.subr.mxu0 0.0
      %5740 = vmatpush1.msra.mxu0 0.0
      %5741 = vmatprep.subr.mxu0 0.0
      %5742 = vmatpush1.msra.mxu0 0.0
      %5743 = vmatprep.subr.mxu0 0.0
      %5744 = vmatpush1.msra.mxu0 0.0
      %5745 = vmatprep.subr.mxu0 0.0
      %5746 = vmatpush1.msra.mxu0 0.0
      %5747 = vmatprep.subr.mxu0 0.0
      %5748 = vmatpush1.msra.mxu0 0.0
      %5749 = vmatprep.mubr.f32.mxu0 0.0
      %5750 = vmatmul.mubr.f32.gmra.mrb[0].mxu0 %v5590
      %v5751 = vpop.f32.mrb[0].mxu0
      %v5752 = vadd.f32 0.0, %v5751
      %v5753 = vpop.f32.mrb[0].mxu0
      %5754 = vmatprep.mubr.f32.mxu0 0.0
      %5755 = vmatmul.mubr.f32.gmra.mrb[0].mxu0 %v5593
      %v5756 = vpop.f32.mrb[0].mxu0
      %v5757 = vadd.f32 0.0, %v5756
      %v5758 = vpop.f32.mrb[0].mxu0
      %5759 = vmatprep.mubr.f32.mxu0 0.0
      %5760 = vmatmul.mubr.f32.gmra.mrb[0].mxu0 %v5596
      %v5761 = vpop.f32.mrb[0].mxu0
      %v5762 = vadd.f32 0.0, %v5761
      %v5763 = vpop.f32.mrb[0].mxu0
      %5764 = vmatprep.mubr.f32.mxu0 0.0
      %5765 = vmatmul.mubr.f32.gmra.mrb[0].mxu0 %v5599
      %v5766 = vpop.f32.mrb[0].mxu0
      %v5767 = vadd.f32 0.0, %v5766
      %v5768 = vpop.f32.mrb[0].mxu0
      %5769 = vmatprep.mubr.f32.mxu0 0.0
      %5770 = vmatmul.mubr.f32.gmra.mrb[0].mxu0 %v5602
      %v5771 = vpop.f32.mrb[0].mxu0
      %v5772 = vadd.f32 0.0, %v5771
      %v5773 = vpop.f32.mrb[0].mxu0
      %5774 = vmatprep.mubr.f32.mxu0 0.0
      %5775 = vmatmul.mubr.f32.gmra.mrb[0].mxu0 %v5605
      %v5776 = vpop.f32.mrb[0].mxu0
      %v5777 = vadd.f32 0.0, %v5776
      %v5778 = vpop.f32.mrb[0].mxu0
      %5779 = vmatprep.mubr.f32.mxu0 0.0
      %5780 = vmatmul.mubr.f32.gmra.mrb[0].mxu0 %v5608
      %v5781 = vpop.f32.mrb[0].mxu0
      %v5782 = vadd.f32 0.0, %v5781
      %v5783 = vpop.f32.mrb[0].mxu0
      %5784 = vmatprep.mubr.f32.mxu0 0.0
      %5785 = vmatmul.mubr.f32.gmra.mrb[0].mxu0 %v5611
      %v5786 = vpop.f32.mrb[0].mxu0
      %v5787 = vadd.f32 0.0, %v5786
      %v5788 = vpop.f32.mrb[0].mxu0
      %5789 = vmatprep.mubr.f32.mxu0 0.0
      %5790 = vmatmul.mubr.f32.gmra.mrb[0].mxu0 %v5614
      %v5791 = vpop.f32.mrb[0].mxu0
      %v5792 = vadd.f32 0.0, %v5791
      %v5793 = vpop.f32.mrb[0].mxu0
      %5794 = vmatprep.mubr.f32.mxu0 0.0
      %5795 = vmatmul.mubr.f32.gmra.mrb[0].mxu0 %v5617
      %v5796 = vpop.f32.mrb[0].mxu0
      %v5797 = vadd.f32 0.0, %v5796
      %v5798 = vpop.f32.mrb[0].mxu0
      %5799 = vmatprep.mubr.f32.mxu0 0.0
      %5800 = vmatmul.mubr.f32.gmra.mrb[0].mxu0 %v5620
      %v5801 = vpop.f32.mrb[0].mxu0
      %v5802 = vadd.f32 0.0, %v5801
      %v5803 = vpop.f32.mrb[0].mxu0
      %5804 = vmatprep.mubr.f32.mxu0 0.0
      %5805 = vmatmul.mubr.f32.gmra.mrb[0].mxu0 %v5623
      %v5806 = vpop.f32.mrb[0].mxu0
      %v5807 = vadd.f32 0.0, %v5806
      %v5808 = vpop.f32.mrb[0].mxu0
      %5809 = vmatprep.mubr.f32.mxu0 0.0
      %5810 = vmatmul.mubr.f32.gmra.mrb[0].mxu0 %v5626
      %v5811 = vpop.f32.mrb[0].mxu0
      %v5812 = vadd.f32 0.0, %v5811
      %v5813 = vpop.f32.mrb[0].mxu0
      %5814 = vmatprep.mubr.f32.mxu0 0.0
      %5815 = vmatmul.mubr.f32.gmra.mrb[0].mxu0 %v5629
      %v5816 = vpop.f32.mrb[0].mxu0
      %v5817 = vadd.f32 0.0, %v5816
      %v5818 = vpop.f32.mrb[0].mxu0
      %5819 = vmatprep.mubr.f32.mxu0 0.0
      %5820 = vmatmul.mubr.f32.gmra.mrb[0].mxu0 %v5632
      %v5821 = vpop.f32.mrb[0].mxu0
      %v5822 = vadd.f32 0.0, %v5821
      %v5823 = vpop.f32.mrb[0].mxu0
      %5824 = vmatprep.mubr.f32.mxu0 0.0
      %5825 = vmatmul.mubr.f32.gmra.mrb[0].mxu0 %v5635
      %v5826 = vpop.f32.mrb[0].mxu0
      %v5827 = vadd.f32 0.0, %v5826
      %v5828 = vpop.f32.mrb[0].mxu0
      %5829 = vmatprep.mubr.f32.mxu0 0.0
      %5830 = vmatmul.mubr.f32.gmra.mrb[0].mxu0 %v5638
      %v5831 = vpop.f32.mrb[0].mxu0
      %v5832 = vadd.f32 0.0, %v5831
      %v5833 = vpop.f32.mrb[0].mxu0
      %5834 = vmatprep.mubr.f32.mxu0 0.0
      %5835 = vmatmul.mubr.f32.gmra.mrb[0].mxu0 %v5641
      %v5836 = vpop.f32.mrb[0].mxu0
      %v5837 = vadd.f32 0.0, %v5836
      %v5838 = vpop.f32.mrb[0].mxu0
      %5839 = vmatprep.mubr.f32.mxu0 0.0
      %5840 = vmatmul.mubr.f32.gmra.mrb[0].mxu0 %v5644
      %v5841 = vpop.f32.mrb[0].mxu0
      %v5842 = vadd.f32 0.0, %v5841
      %v5843 = vpop.f32.mrb[0].mxu0
      %5844 = vmatprep.mubr.f32.mxu0 0.0
      %5845 = vmatmul.mubr.f32.gmra.mrb[0].mxu0 %v5647
      %v5846 = vpop.f32.mrb[0].mxu0
      %v5847 = vadd.f32 0.0, %v5846
      %v5848 = vpop.f32.mrb[0].mxu0
      %5849 = vmatprep.mubr.f32.mxu0 0.0
      %5850 = vmatmul.mubr.f32.gmra.mrb[0].mxu0 %v5650
      %v5851 = vpop.f32.mrb[0].mxu0
      %v5852 = vadd.f32 0.0, %v5851
      %v5853 = vpop.f32.mrb[0].mxu0
      %5854 = vmatprep.mubr.f32.mxu0 0.0
      %5855 = vmatmul.mubr.f32.gmra.mrb[0].mxu0 %v5653
      %v5856 = vpop.f32.mrb[0].mxu0
      %v5857 = vadd.f32 0.0, %v5856
      %v5858 = vpop.f32.mrb[0].mxu0
      %5859 = vmatprep.mubr.f32.mxu0 0.0
      %5860 = vmatmul.mubr.f32.gmra.mrb[0].mxu0 %v5656
      %v5861 = vpop.f32.mrb[0].mxu0
      %v5862 = vadd.f32 0.0, %v5861
      %v5863 = vpop.f32.mrb[0].mxu0
      %5864 = vmatprep.mubr.f32.mxu0 0.0
      %5865 = vmatmul.mubr.f32.gmra.mrb[0].mxu0 %v5659
      %v5866 = vpop.f32.mrb[0].mxu0
      %v5867 = vadd.f32 0.0, %v5866
      %v5868 = vpop.f32.mrb[0].mxu0
      %5869 = vmatprep.mubr.f32.mxu0 0.0
      %5870 = vmatmul.mubr.f32.gmra.mrb[0].mxu0 %v5662
      %v5871 = vpop.f32.mrb[0].mxu0
      %v5872 = vadd.f32 0.0, %v5871
      %v5873 = vpop.f32.mrb[0].mxu0
      %5874 = vmatprep.mubr.f32.mxu0 0.0
      %5875 = vmatmul.mubr.f32.gmra.mrb[0].mxu0 %v5665
      %v5876 = vpop.f32.mrb[0].mxu0
      %v5877 = vadd.f32 0.0, %v5876
      %v5878 = vpop.f32.mrb[0].mxu0
      %5879 = vmatprep.mubr.f32.mxu0 0.0
      %5880 = vmatmul.mubr.f32.gmra.mrb[0].mxu0 %v5668
      %v5881 = vpop.f32.mrb[0].mxu0
      %v5882 = vadd.f32 0.0, %v5881
      %v5883 = vpop.f32.mrb[0].mxu0
      %5884 = vmatprep.mubr.f32.mxu0 0.0
      %5885 = vmatmul.mubr.f32.gmra.mrb[0].mxu0 %v5671
      %v5886 = vpop.f32.mrb[0].mxu0
      %v5887 = vadd.f32 0.0, %v5886
      %v5888 = vpop.f32.mrb[0].mxu0
      %5889 = vmatprep.mubr.f32.mxu0 0.0
      %5890 = vmatmul.mubr.f32.gmra.mrb[0].mxu0 %v5674
      %v5891 = vpop.f32.mrb[0].mxu0
      %v5892 = vadd.f32 0.0, %v5891
      %v5893 = vpop.f32.mrb[0].mxu0
      %5894 = vmatprep.mubr.f32.mxu0 0.0
      %5895 = vmatmul.mubr.f32.gmra.mrb[0].mxu0 %v5677
      %v5896 = vpop.f32.mrb[0].mxu0
      %v5897 = vadd.f32 0.0, %v5896
      %v5898 = vpop.f32.mrb[0].mxu0
      %5899 = vmatprep.mubr.f32.mxu0 0.0
      %5900 = vmatmul.mubr.f32.gmra.mrb[0].mxu0 %v5680
      %v5901 = vpop.f32.mrb[0].mxu0
      %v5902 = vadd.f32 0.0, %v5901
      %v5903 = vpop.f32.mrb[0].mxu0
      %5904 = vmatprep.mubr.f32.mxu0 0.0
      %5905 = vmatmul.mubr.f32.gmra.mrb[0].mxu0 %v5683
      %v5906 = vpop.f32.mrb[0].mxu0
      %v5907 = vadd.f32 0.0, %v5906
      %v5908 = vpop.f32.mrb[0].mxu0
      %5909 = vdwg.mxu0
      %v5910 = vadd.f32 %v5523, %v5752
      %v5911 = vadd.f32 %v5524, %v5757
      %v5912 = vadd.f32 %v5525, %v5762
      %v5913 = vadd.f32 %v5526, %v5767
      %v5914 = vadd.f32 %v5527, %v5772
      %v5915 = vadd.f32 %v5528, %v5777
      %v5916 = vadd.f32 %v5529, %v5782
      %v5917 = vadd.f32 %v5530, %v5787
      %v5918 = vadd.f32 %v5531, %v5792
      %v5919 = vadd.f32 %v5532, %v5797
      %v5920 = vadd.f32 %v5533, %v5802
      %v5921 = vadd.f32 %v5534, %v5807
      %v5922 = vadd.f32 %v5535, %v5812
      %v5923 = vadd.f32 %v5536, %v5817
      %v5924 = vadd.f32 %v5537, %v5822
      %v5925 = vadd.f32 %v5538, %v5827
      %v5926 = vadd.f32 %v5539, %v5832
      %v5927 = vadd.f32 %v5540, %v5837
      %v5928 = vadd.f32 %v5541, %v5842
      %v5929 = vadd.f32 %v5542, %v5847
      %v5930 = vadd.f32 %v5543, %v5852
      %v5931 = vadd.f32 %v5544, %v5857
      %v5932 = vadd.f32 %v5545, %v5862
      %v5933 = vadd.f32 %v5546, %v5867
      %v5934 = vadd.f32 %v5547, %v5872
      %v5935 = vadd.f32 %v5548, %v5877
      %v5936 = vadd.f32 %v5549, %v5882
      %v5937 = vadd.f32 %v5550, %v5887
      %v5938 = vadd.f32 %v5551, %v5892
      %v5939 = vadd.f32 %v5552, %v5897
      %v5940 = vadd.f32 %v5553, %v5902
      %v5941 = vadd.f32 %v5554, %v5907
      %v5942 = vld [vmem:[%s4780 + $0x3] sm:$0xff]
      %v5943 = vld [vmem:[%s4780 + $0xb] sm:$0xff]
      %v5944 = vld [vmem:[%s4780 + $0x1b] sm:$0xff]
      %v5945 = vld [vmem:[%s4780 + $0x23] sm:$0xff]
      %v5946 = vld [vmem:[%s4780 + $0x33] sm:$0xff]
      %v5947 = vld [vmem:[%s4780 + $0x3b] sm:$0xff]
      %v5948 = vld [vmem:[%s4780 + $0x4b] sm:$0xff]
      %v5949 = vld [vmem:[%s4780 + $0x53] sm:$0xff]
      %v5950 = vld [vmem:[%s4780 + $0x63] sm:$0xff]
      %v5951 = vld [vmem:[%s4780 + $0x6b] sm:$0xff]
      %v5952 = vld [vmem:[%s4780 + $0x7b] sm:$0xff]
      %v5953 = vld [vmem:[%s4780 + $0x83] sm:$0xff]
      %v5954 = vld [vmem:[%s4780 + $0x93] sm:$0xff]
      %v5955 = vld [vmem:[%s4780 + $0x9b] sm:$0xff]
      %v5956 = vld [vmem:[%s4780 + $0xab] sm:$0xff]
      %v5957 = vld [vmem:[%s4780 + $0xb3] sm:$0xff]
      %v5958 = vld [vmem:[%s4780 + $0xc3] sm:$0xff]
      %v5959 = vld [vmem:[%s4780 + $0xcb] sm:$0xff]
      %v5960 = vld [vmem:[%s4780 + $0xdb] sm:$0xff]
      %v5961 = vld [vmem:[%s4780 + $0xe3] sm:$0xff]
      %v5962 = vld [vmem:[%s4780 + $0xf3] sm:$0xff]
      %v5963 = vld [vmem:[%s4780 + $0xfb] sm:$0xff]
      %v5964 = vld [vmem:[%s4780 + $0x10b] sm:$0xff]
      %v5965 = vld [vmem:[%s4780 + $0x113] sm:$0xff]
      %v5966 = vld [vmem:[%s4780 + $0x123] sm:$0xff]
      %v5967 = vld [vmem:[%s4780 + $0x12b] sm:$0xff]
      %v5968 = vld [vmem:[%s4780 + $0x13b] sm:$0xff]
      %v5969 = vld [vmem:[%s4780 + $0x143] sm:$0xff]
      %v5970 = vld [vmem:[%s4780 + $0x153] sm:$0xff]
      %v5971 = vld [vmem:[%s4780 + $0x15b] sm:$0xff]
      %v5972 = vld [vmem:[%s4780 + $0x16b] sm:$0xff]
      %v5973 = vld [vmem:[%s4780 + $0x173] sm:$0xff]
      %s5974 = scalar_lea.vmem %s1, 120
      %v5975 = vld [vmem:[%s5974] sm:$0xff]
      %v5977 = vsel %vm265, %v5942, 0
      %v5980 = vsel %vm265, %v5943, 0
      %v5983 = vsel %vm265, %v5944, 0
      %v5986 = vsel %vm265, %v5945, 0
      %v5989 = vsel %vm265, %v5946, 0
      %v5992 = vsel %vm265, %v5947, 0
      %v5995 = vsel %vm265, %v5948, 0
      %v5998 = vsel %vm265, %v5949, 0
      %v6001 = vsel %vm265, %v5950, 0
      %v6004 = vsel %vm265, %v5951, 0
      %v6007 = vsel %vm265, %v5952, 0
      %v6010 = vsel %vm265, %v5953, 0
      %v6013 = vsel %vm265, %v5954, 0
      %v6016 = vsel %vm265, %v5955, 0
      %v6019 = vsel %vm265, %v5956, 0
      %v6022 = vsel %vm265, %v5957, 0
      %v6025 = vsel %vm265, %v5958, 0
      %v6028 = vsel %vm265, %v5959, 0
      %v6031 = vsel %vm265, %v5960, 0
      %v6034 = vsel %vm265, %v5961, 0
      %v6037 = vsel %vm265, %v5962, 0
      %v6040 = vsel %vm265, %v5963, 0
      %v6043 = vsel %vm265, %v5964, 0
      %v6046 = vsel %vm265, %v5965, 0
      %v6049 = vsel %vm265, %v5966, 0
      %v6052 = vsel %vm265, %v5967, 0
      %v6055 = vsel %vm265, %v5968, 0
      %v6058 = vsel %vm265, %v5969, 0
      %v6061 = vsel %vm265, %v5970, 0
      %v6064 = vsel %vm265, %v5971, 0
      %v6067 = vsel %vm265, %v5972, 0
      %v6070 = vsel %vm265, %v5973, 0
      %6072 = vmatprep.subr.mxu0 0.0
      %6073 = vmatpush1.msra.mxu0 %v5975
      %6074 = vmatprep.subr.mxu0 0.0
      %6075 = vmatpush1.msra.mxu0 0.0
      %6076 = vmatprep.subr.mxu0 0.0
      %6077 = vmatpush1.msra.mxu0 0.0
      %6078 = vmatprep.subr.mxu0 0.0
      %6079 = vmatpush1.msra.mxu0 0.0
      %6080 = vmatprep.subr.mxu0 0.0
      %6081 = vmatpush1.msra.mxu0 0.0
      %6082 = vmatprep.subr.mxu0 0.0
      %6083 = vmatpush1.msra.mxu0 0.0
      %6084 = vmatprep.subr.mxu0 0.0
      %6085 = vmatpush1.msra.mxu0 0.0
      %6086 = vmatprep.subr.mxu0 0.0
      %6087 = vmatpush1.msra.mxu0 0.0
      %6088 = vmatprep.subr.mxu0 0.0
      %6089 = vmatpush1.msra.mxu0 0.0
      %6090 = vmatprep.subr.mxu0 0.0
      %6091 = vmatpush1.msra.mxu0 0.0
      %6092 = vmatprep.subr.mxu0 0.0
      %6093 = vmatpush1.msra.mxu0 0.0
      %6094 = vmatprep.subr.mxu0 0.0
      %6095 = vmatpush1.msra.mxu0 0.0
      %6096 = vmatprep.subr.mxu0 0.0
      %6097 = vmatpush1.msra.mxu0 0.0
      %6098 = vmatprep.subr.mxu0 0.0
      %6099 = vmatpush1.msra.mxu0 0.0
      %6100 = vmatprep.subr.mxu0 0.0
      %6101 = vmatpush1.msra.mxu0 0.0
      %6102 = vmatprep.subr.mxu0 0.0
      %6103 = vmatpush1.msra.mxu0 0.0
      %6104 = vmatprep.subr.mxu0 0.0
      %6105 = vmatpush1.msra.mxu0 0.0
      %6106 = vmatprep.subr.mxu0 0.0
      %6107 = vmatpush1.msra.mxu0 0.0
      %6108 = vmatprep.subr.mxu0 0.0
      %6109 = vmatpush1.msra.mxu0 0.0
      %6110 = vmatprep.subr.mxu0 0.0
      %6111 = vmatpush1.msra.mxu0 0.0
      %6112 = vmatprep.subr.mxu0 0.0
      %6113 = vmatpush1.msra.mxu0 0.0
      %6114 = vmatprep.subr.mxu0 0.0
      %6115 = vmatpush1.msra.mxu0 0.0
      %6116 = vmatprep.subr.mxu0 0.0
      %6117 = vmatpush1.msra.mxu0 0.0
      %6118 = vmatprep.subr.mxu0 0.0
      %6119 = vmatpush1.msra.mxu0 0.0
      %6120 = vmatprep.subr.mxu0 0.0
      %6121 = vmatpush1.msra.mxu0 0.0
      %6122 = vmatprep.subr.mxu0 0.0
      %6123 = vmatpush1.msra.mxu0 0.0
      %6124 = vmatprep.subr.mxu0 0.0
      %6125 = vmatpush1.msra.mxu0 0.0
      %6126 = vmatprep.subr.mxu0 0.0
      %6127 = vmatpush1.msra.mxu0 0.0
      %6128 = vmatprep.subr.mxu0 0.0
      %6129 = vmatpush1.msra.mxu0 0.0
      %6130 = vmatprep.subr.mxu0 0.0
      %6131 = vmatpush1.msra.mxu0 0.0
      %6132 = vmatprep.subr.mxu0 0.0
      %6133 = vmatpush1.msra.mxu0 0.0
      %6134 = vmatprep.subr.mxu0 0.0
      %6135 = vmatpush1.msra.mxu0 0.0
      %6136 = vmatprep.mubr.f32.mxu0 0.0
      %6137 = vmatmul.mubr.f32.gmra.mrb[0].mxu0 %v5977
      %v6138 = vpop.f32.mrb[0].mxu0
      %v6139 = vadd.f32 0.0, %v6138
      %v6140 = vpop.f32.mrb[0].mxu0
      %6141 = vmatprep.mubr.f32.mxu0 0.0
      %6142 = vmatmul.mubr.f32.gmra.mrb[0].mxu0 %v5980
      %v6143 = vpop.f32.mrb[0].mxu0
      %v6144 = vadd.f32 0.0, %v6143
      %v6145 = vpop.f32.mrb[0].mxu0
      %6146 = vmatprep.mubr.f32.mxu0 0.0
      %6147 = vmatmul.mubr.f32.gmra.mrb[0].mxu0 %v5983
      %v6148 = vpop.f32.mrb[0].mxu0
      %v6149 = vadd.f32 0.0, %v6148
      %v6150 = vpop.f32.mrb[0].mxu0
      %6151 = vmatprep.mubr.f32.mxu0 0.0
      %6152 = vmatmul.mubr.f32.gmra.mrb[0].mxu0 %v5986
      %v6153 = vpop.f32.mrb[0].mxu0
      %v6154 = vadd.f32 0.0, %v6153
      %v6155 = vpop.f32.mrb[0].mxu0
      %6156 = vmatprep.mubr.f32.mxu0 0.0
      %6157 = vmatmul.mubr.f32.gmra.mrb[0].mxu0 %v5989
      %v6158 = vpop.f32.mrb[0].mxu0
      %v6159 = vadd.f32 0.0, %v6158
      %v6160 = vpop.f32.mrb[0].mxu0
      %6161 = vmatprep.mubr.f32.mxu0 0.0
      %6162 = vmatmul.mubr.f32.gmra.mrb[0].mxu0 %v5992
      %v6163 = vpop.f32.mrb[0].mxu0
      %v6164 = vadd.f32 0.0, %v6163
      %v6165 = vpop.f32.mrb[0].mxu0
      %6166 = vmatprep.mubr.f32.mxu0 0.0
      %6167 = vmatmul.mubr.f32.gmra.mrb[0].mxu0 %v5995
      %v6168 = vpop.f32.mrb[0].mxu0
      %v6169 = vadd.f32 0.0, %v6168
      %v6170 = vpop.f32.mrb[0].mxu0
      %6171 = vmatprep.mubr.f32.mxu0 0.0
      %6172 = vmatmul.mubr.f32.gmra.mrb[0].mxu0 %v5998
      %v6173 = vpop.f32.mrb[0].mxu0
      %v6174 = vadd.f32 0.0, %v6173
      %v6175 = vpop.f32.mrb[0].mxu0
      %6176 = vmatprep.mubr.f32.mxu0 0.0
      %6177 = vmatmul.mubr.f32.gmra.mrb[0].mxu0 %v6001
      %v6178 = vpop.f32.mrb[0].mxu0
      %v6179 = vadd.f32 0.0, %v6178
      %v6180 = vpop.f32.mrb[0].mxu0
      %6181 = vmatprep.mubr.f32.mxu0 0.0
      %6182 = vmatmul.mubr.f32.gmra.mrb[0].mxu0 %v6004
      %v6183 = vpop.f32.mrb[0].mxu0
      %v6184 = vadd.f32 0.0, %v6183
      %v6185 = vpop.f32.mrb[0].mxu0
      %6186 = vmatprep.mubr.f32.mxu0 0.0
      %6187 = vmatmul.mubr.f32.gmra.mrb[0].mxu0 %v6007
      %v6188 = vpop.f32.mrb[0].mxu0
      %v6189 = vadd.f32 0.0, %v6188
      %v6190 = vpop.f32.mrb[0].mxu0
      %6191 = vmatprep.mubr.f32.mxu0 0.0
      %6192 = vmatmul.mubr.f32.gmra.mrb[0].mxu0 %v6010
      %v6193 = vpop.f32.mrb[0].mxu0
      %v6194 = vadd.f32 0.0, %v6193
      %v6195 = vpop.f32.mrb[0].mxu0
      %6196 = vmatprep.mubr.f32.mxu0 0.0
      %6197 = vmatmul.mubr.f32.gmra.mrb[0].mxu0 %v6013
      %v6198 = vpop.f32.mrb[0].mxu0
      %v6199 = vadd.f32 0.0, %v6198
      %v6200 = vpop.f32.mrb[0].mxu0
      %6201 = vmatprep.mubr.f32.mxu0 0.0
      %6202 = vmatmul.mubr.f32.gmra.mrb[0].mxu0 %v6016
      %v6203 = vpop.f32.mrb[0].mxu0
      %v6204 = vadd.f32 0.0, %v6203
      %v6205 = vpop.f32.mrb[0].mxu0
      %6206 = vmatprep.mubr.f32.mxu0 0.0
      %6207 = vmatmul.mubr.f32.gmra.mrb[0].mxu0 %v6019
      %v6208 = vpop.f32.mrb[0].mxu0
      %v6209 = vadd.f32 0.0, %v6208
      %v6210 = vpop.f32.mrb[0].mxu0
      %6211 = vmatprep.mubr.f32.mxu0 0.0
      %6212 = vmatmul.mubr.f32.gmra.mrb[0].mxu0 %v6022
      %v6213 = vpop.f32.mrb[0].mxu0
      %v6214 = vadd.f32 0.0, %v6213
      %v6215 = vpop.f32.mrb[0].mxu0
      %6216 = vmatprep.mubr.f32.mxu0 0.0
      %6217 = vmatmul.mubr.f32.gmra.mrb[0].mxu0 %v6025
      %v6218 = vpop.f32.mrb[0].mxu0
      %v6219 = vadd.f32 0.0, %v6218
      %v6220 = vpop.f32.mrb[0].mxu0
      %6221 = vmatprep.mubr.f32.mxu0 0.0
      %6222 = vmatmul.mubr.f32.gmra.mrb[0].mxu0 %v6028
      %v6223 = vpop.f32.mrb[0].mxu0
      %v6224 = vadd.f32 0.0, %v6223
      %v6225 = vpop.f32.mrb[0].mxu0
      %6226 = vmatprep.mubr.f32.mxu0 0.0
      %6227 = vmatmul.mubr.f32.gmra.mrb[0].mxu0 %v6031
      %v6228 = vpop.f32.mrb[0].mxu0
      %v6229 = vadd.f32 0.0, %v6228
      %v6230 = vpop.f32.mrb[0].mxu0
      %6231 = vmatprep.mubr.f32.mxu0 0.0
      %6232 = vmatmul.mubr.f32.gmra.mrb[0].mxu0 %v6034
      %v6233 = vpop.f32.mrb[0].mxu0
      %v6234 = vadd.f32 0.0, %v6233
      %v6235 = vpop.f32.mrb[0].mxu0
      %6236 = vmatprep.mubr.f32.mxu0 0.0
      %6237 = vmatmul.mubr.f32.gmra.mrb[0].mxu0 %v6037
      %v6238 = vpop.f32.mrb[0].mxu0
      %v6239 = vadd.f32 0.0, %v6238
      %v6240 = vpop.f32.mrb[0].mxu0
      %6241 = vmatprep.mubr.f32.mxu0 0.0
      %6242 = vmatmul.mubr.f32.gmra.mrb[0].mxu0 %v6040
      %v6243 = vpop.f32.mrb[0].mxu0
      %v6244 = vadd.f32 0.0, %v6243
      %v6245 = vpop.f32.mrb[0].mxu0
      %6246 = vmatprep.mubr.f32.mxu0 0.0
      %6247 = vmatmul.mubr.f32.gmra.mrb[0].mxu0 %v6043
      %v6248 = vpop.f32.mrb[0].mxu0
      %v6249 = vadd.f32 0.0, %v6248
      %v6250 = vpop.f32.mrb[0].mxu0
      %6251 = vmatprep.mubr.f32.mxu0 0.0
      %6252 = vmatmul.mubr.f32.gmra.mrb[0].mxu0 %v6046
      %v6253 = vpop.f32.mrb[0].mxu0
      %v6254 = vadd.f32 0.0, %v6253
      %v6255 = vpop.f32.mrb[0].mxu0
      %6256 = vmatprep.mubr.f32.mxu0 0.0
      %6257 = vmatmul.mubr.f32.gmra.mrb[0].mxu0 %v6049
      %v6258 = vpop.f32.mrb[0].mxu0
      %v6259 = vadd.f32 0.0, %v6258
      %v6260 = vpop.f32.mrb[0].mxu0
      %6261 = vmatprep.mubr.f32.mxu0 0.0
      %6262 = vmatmul.mubr.f32.gmra.mrb[0].mxu0 %v6052
      %v6263 = vpop.f32.mrb[0].mxu0
      %v6264 = vadd.f32 0.0, %v6263
      %v6265 = vpop.f32.mrb[0].mxu0
      %6266 = vmatprep.mubr.f32.mxu0 0.0
      %6267 = vmatmul.mubr.f32.gmra.mrb[0].mxu0 %v6055
      %v6268 = vpop.f32.mrb[0].mxu0
      %v6269 = vadd.f32 0.0, %v6268
      %v6270 = vpop.f32.mrb[0].mxu0
      %6271 = vmatprep.mubr.f32.mxu0 0.0
      %6272 = vmatmul.mubr.f32.gmra.mrb[0].mxu0 %v6058
      %v6273 = vpop.f32.mrb[0].mxu0
      %v6274 = vadd.f32 0.0, %v6273
      %v6275 = vpop.f32.mrb[0].mxu0
      %6276 = vmatprep.mubr.f32.mxu0 0.0
      %6277 = vmatmul.mubr.f32.gmra.mrb[0].mxu0 %v6061
      %v6278 = vpop.f32.mrb[0].mxu0
      %v6279 = vadd.f32 0.0, %v6278
      %v6280 = vpop.f32.mrb[0].mxu0
      %6281 = vmatprep.mubr.f32.mxu0 0.0
      %6282 = vmatmul.mubr.f32.gmra.mrb[0].mxu0 %v6064
      %v6283 = vpop.f32.mrb[0].mxu0
      %v6284 = vadd.f32 0.0, %v6283
      %v6285 = vpop.f32.mrb[0].mxu0
      %6286 = vmatprep.mubr.f32.mxu0 0.0
      %6287 = vmatmul.mubr.f32.gmra.mrb[0].mxu0 %v6067
      %v6288 = vpop.f32.mrb[0].mxu0
      %v6289 = vadd.f32 0.0, %v6288
      %v6290 = vpop.f32.mrb[0].mxu0
      %6291 = vmatprep.mubr.f32.mxu0 0.0
      %6292 = vmatmul.mubr.f32.gmra.mrb[0].mxu0 %v6070
      %v6293 = vpop.f32.mrb[0].mxu0
      %v6294 = vadd.f32 0.0, %v6293
      %v6295 = vpop.f32.mrb[0].mxu0
      %6296 = vdwg.mxu0
      %v6297 = vadd.f32 %v5910, %v6139
      %v6298 = vadd.f32 %v5911, %v6144
      %v6299 = vadd.f32 %v5912, %v6149
      %v6300 = vadd.f32 %v5913, %v6154
      %v6301 = vadd.f32 %v5914, %v6159
      %v6302 = vadd.f32 %v5915, %v6164
      %v6303 = vadd.f32 %v5916, %v6169
      %v6304 = vadd.f32 %v5917, %v6174
      %v6305 = vadd.f32 %v5918, %v6179
      %v6306 = vadd.f32 %v5919, %v6184
      %v6307 = vadd.f32 %v5920, %v6189
      %v6308 = vadd.f32 %v5921, %v6194
      %v6309 = vadd.f32 %v5922, %v6199
      %v6310 = vadd.f32 %v5923, %v6204
      %v6311 = vadd.f32 %v5924, %v6209
      %v6312 = vadd.f32 %v5925, %v6214
      %v6313 = vadd.f32 %v5926, %v6219
      %v6314 = vadd.f32 %v5927, %v6224
      %v6315 = vadd.f32 %v5928, %v6229
      %v6316 = vadd.f32 %v5929, %v6234
      %v6317 = vadd.f32 %v5930, %v6239
      %v6318 = vadd.f32 %v5931, %v6244
      %v6319 = vadd.f32 %v5932, %v6249
      %v6320 = vadd.f32 %v5933, %v6254
      %v6321 = vadd.f32 %v5934, %v6259
      %v6322 = vadd.f32 %v5935, %v6264
      %v6323 = vadd.f32 %v5936, %v6269
      %v6324 = vadd.f32 %v5937, %v6274
      %v6325 = vadd.f32 %v5938, %v6279
      %v6326 = vadd.f32 %v5939, %v6284
      %v6327 = vadd.f32 %v5940, %v6289
      %v6328 = vadd.f32 %v5941, %v6294
      %6329 = vxpose.xlu0.b32.start [1/16] %v6297, 128
      %6330 = vxpose.xlu0.b32.cont [2/16] %v6298, 128
      %6331 = vxpose.xlu0.b32.cont [3/16] %v6299, 128
      %6332 = vxpose.xlu0.b32.cont [4/16] %v6300, 128
      %6333 = vxpose.xlu0.b32.cont [5/16] %v6301, 128
      %6334 = vxpose.xlu0.b32.cont [6/16] %v6302, 128
      %6335 = vxpose.xlu0.b32.cont [7/16] %v6303, 128
      %6336 = vxpose.xlu0.b32.cont [8/16] %v6304, 128
      %6337 = vxpose.xlu0.b32.cont [9/16] %v6305, 128
      %6338 = vxpose.xlu0.b32.cont [10/16] %v6306, 128
      %6339 = vxpose.xlu0.b32.cont [11/16] %v6307, 128
      %6340 = vxpose.xlu0.b32.cont [12/16] %v6308, 128
      %6341 = vxpose.xlu0.b32.cont [13/16] %v6309, 128
      %6342 = vxpose.xlu0.b32.cont [14/16] %v6310, 128
      %6343 = vxpose.xlu0.b32.cont [15/16] %v6311, 128
      %6344 = vxpose.xlu0.b32.end [16/16] %v6312, 128
      %v6345 = vpop.trf.xlu0
      %v6346 = vpop.trf.xlu0
      %v6347 = vpop.trf.xlu0
      %v6348 = vpop.trf.xlu0
      %v6349 = vpop.trf.xlu0
      %v6350 = vpop.trf.xlu0
      %v6351 = vpop.trf.xlu0
      %v6352 = vpop.trf.xlu0
      %v6353 = vpop.trf.xlu0
      %v6354 = vpop.trf.xlu0
      %v6355 = vpop.trf.xlu0
      %v6356 = vpop.trf.xlu0
      %v6357 = vpop.trf.xlu0
      %v6358 = vpop.trf.xlu0
      %v6359 = vpop.trf.xlu0
      %v6360 = vpop.trf.xlu0
      %6361 = vxpose.xlu0.b32.start [1/16] %v6313, 128
      %6362 = vxpose.xlu0.b32.cont [2/16] %v6314, 128
      %6363 = vxpose.xlu0.b32.cont [3/16] %v6315, 128
      %6364 = vxpose.xlu0.b32.cont [4/16] %v6316, 128
      %6365 = vxpose.xlu0.b32.cont [5/16] %v6317, 128
      %6366 = vxpose.xlu0.b32.cont [6/16] %v6318, 128
      %6367 = vxpose.xlu0.b32.cont [7/16] %v6319, 128
      %6368 = vxpose.xlu0.b32.cont [8/16] %v6320, 128
      %6369 = vxpose.xlu0.b32.cont [9/16] %v6321, 128
      %6370 = vxpose.xlu0.b32.cont [10/16] %v6322, 128
      %6371 = vxpose.xlu0.b32.cont [11/16] %v6323, 128
      %6372 = vxpose.xlu0.b32.cont [12/16] %v6324, 128
      %6373 = vxpose.xlu0.b32.cont [13/16] %v6325, 128
      %6374 = vxpose.xlu0.b32.cont [14/16] %v6326, 128
      %6375 = vxpose.xlu0.b32.cont [15/16] %v6327, 128
      %6376 = vxpose.xlu0.b32.end [16/16] %v6328, 128
      %v6377 = vpop.trf.xlu0
      %v6378 = vpop.trf.xlu0
      %v6379 = vpop.trf.xlu0
      %v6380 = vpop.trf.xlu0
      %v6381 = vpop.trf.xlu0
      %v6382 = vpop.trf.xlu0
      %v6383 = vpop.trf.xlu0
      %v6384 = vpop.trf.xlu0
      %v6385 = vpop.trf.xlu0
      %v6386 = vpop.trf.xlu0
      %v6387 = vpop.trf.xlu0
      %v6388 = vpop.trf.xlu0
      %v6389 = vpop.trf.xlu0
      %v6390 = vpop.trf.xlu0
      %v6391 = vpop.trf.xlu0
      %v6392 = vpop.trf.xlu0
      %v6393 = vld [vmem:[%s2] sm:$0xff]
      %v6394 = vld [vmem:[%s2 + $0x8] sm:$0xff]
      %6396 = vset.pattern.permute.xlu0 0
      %6397 = vperm.xlu0 %6396, %v6393
      %v6398 = vpop.permute.xlu0 %6397
      %6401 = vset.pattern.permute.xlu0 0
      %6402 = vperm.xlu0 %6401, %v6394
      %v6403 = vpop.permute.xlu0 %6402
      %v6405 = vmul.f32 %v6345, %v6398
      %v6406 = vmul.f32 %v6377, %v6398
      %v6407 = vmul.f32 %v6346, %v6403
      %v6408 = vmul.f32 %v6378, %v6403
      %v6409 = vld [vmem:[%s3] sm:$0xff]
      %v6410 = vld [vmem:[%s3 + $0x8] sm:$0xff]
      %6412 = vset.pattern.permute.xlu0 0
      %6413 = vperm.xlu0 %6412, %v6409
      %v6414 = vpop.permute.xlu0 %6413
      %6417 = vset.pattern.permute.xlu0 0
      %6418 = vperm.xlu0 %6417, %v6410
      %v6419 = vpop.permute.xlu0 %6418
      %v6421 = vadd.f32 %v6405, %v6414
      %v6422 = vadd.f32 %v6406, %v6414
      %v6423 = vadd.f32 %v6407, %v6419
      %v6424 = vadd.f32 %v6408, %v6419
      %v6425 = vmax.f32 %v6421, 0.0
      %v6426 = vmax.f32 %v6422, 0.0
      %v6427 = vmax.f32 %v6423, 0.0
      %v6428 = vmax.f32 %v6424, 0.0
      %6429 = vst [vmem:[%s197] sm:$0xff] %v6425
      %6430 = vst [vmem:[%s197 + $0x8] sm:$0xff] %v6426
      %6431 = vst [vmem:[%s197 + $0x10] sm:$0xff] %v6427
      %6432 = vst [vmem:[%s197 + $0x18] sm:$0xff] %v6428
      %p6433 = scmp.lt.s32.totalorder %s15, 1
      %s6434 = scalar_select %p6433, %s15, 1
      %s6435 = smul.addr %s6434, 4
      %s6436 = smul.addr %s6435, 8
      %s6437 = scalar_lea.vmem %s4, %s6436
      // Predicated region
      $region37: #{_lambda_.1} parent=35 // pred_check
        %p6438 = pneg %p122
      $region38: #{_lambda_.1} parent=35 // pred_check_branch
        %6440 = sbr.rel (%p6438) target = $region40
      $region39: #{_lambda_.1} parent=35 // pred_region
        _
      $region40: #{_lambda_.1} parent=35 // pred_fallthru
        _
    $region36: #{_lambda_.1} parent=5 // pred_fallthru
      _
    %p6441 = scmp.le.s32.totalorder 2, %s10
    // Predicated region
    $region41: #{_lambda_.1} parent=5 // pred_check
      %p6442 = pneg %p6441
    $region42: #{_lambda_.1} parent=5 // pred_check_branch
      %6444 = sbr.rel (%p6442) target = $region44
    $region43: #{_lambda_.1} parent=5 // pred_region
      %s6445 = ssub.s32 %s10, 2
      // Predicated region
      $region45: #{_lambda_.1} parent=43 // pred_check
        %p6446 = pneg %p128
      $region46: #{_lambda_.1} parent=43 // pred_check_branch
        %6448 = sbr.rel (%p6446) target = $region48
      $region47: #{_lambda_.1} parent=43 // pred_region
        %p6449 = scmp.lt.s32.totalorder %s16, 1
        %s6450 = scalar_select %p6449, %s16, 1
        %s6451 = smul.addr %s6450, 4
        %s6452 = smul.addr %s6451, 8
        %s6453 = scalar_lea.vmem %s4, %s6452
      $region48: #{_lambda_.1} parent=43 // pred_fallthru
        _
    $region44: #{_lambda_.1} parent=5 // pred_fallthru
      _
  $region6: #{_lambda_.1} parent=0 // loop_footer
    %s14 = sadd.s32 1, %s10
  $region7: #{_lambda_.1} parent=0 // loop_footer_branch
    %9 = sbr.rel target = $region3
  $region8: #{_lambda_.1} parent=0 // loop_exit
    _

</llo_original>
